<compile_context>
chip_gen: v7x
topology: tpu7x:2x2x1
jax: 0.10.0
libtpu: 0.0.40
codegen_flags: <defaults>
</compile_context>

<pallas_src>
import functools

import jax
import jax.numpy as jnp
import numpy as np
from jax.experimental import pallas as pl
from jax.experimental.pallas import tpu as pltpu


# ------------------------------ kernel ------------------------------

def _mann_fused_kernel(x_ref, wih1_ref, whh1_ref, b1_ref, w2_ref, b2_ref,
                       out_ref, pre1_ref):
    """Fused 2-layer LSTM over all T timesteps in one kernel invocation.

    x_ref   : (T*Bp, D)        bf16 time-major inputs, rows grouped per step
    wih1_ref: (D, 4*H1)        bf16 layer-1 input->gate weights (W_ih1^T)
    whh1_ref: (H1, 4*H1)       bf16 layer-1 hidden->gate weights (W_hh1^T)
    b1_ref  : (1, 4*H1)        f32  layer-1 fused bias (b_ih + b_hh)
    w2_ref  : (H1 + H2P, H2P)  bf16 layer-2 stacked [W_ih2^T ; W_hh2^T], gate
                               columns compact-packed into lanes [0, 4*H2)
    b2_ref  : (1, H2P)         f32  layer-2 fused bias, compact-packed
    out_ref : (NC, Bp, H2P)    f32  h2 for the last NC timesteps
    pre1_ref: (T*Bp, 4*H1)     f32  scratch for the hoisted input projection
    """
    NC, Bp, H2P = out_ref.shape
    H1 = whh1_ref.shape[0]
    H2 = NC                                   # layer-2 hidden = num_classes
    T = x_ref.shape[0] // Bp

    # Hoisted, time-independent layer-1 input projection: ONE MXU matmul for
    # all timesteps, bias folded in, parked in VMEM scratch (not in vregs).
    pre1_ref[...] = (jnp.dot(x_ref[...], wih1_ref[...],
                             preferred_element_type=jnp.float32)
                     + b1_ref[...])

    # Layer-2 bias broadcast hoisted out of the loop (a single f32 vreg).
    b2 = jnp.broadcast_to(b2_ref[...], (Bp, H2P))

    def pick(act, block, neutral):
        # Move gate block `block` (lanes [block*H2, (block+1)*H2)) onto lanes
        # [0, H2).  Rotation-direction agnostic: of the two complementary
        # rotations, one lands the real gate on lanes [0, H2) and the other
        # lands all-zero pre-activation columns whose activation is exactly
        # `neutral` (sigmoid(0)=0.5 / tanh(0)=0), so summing and subtracting
        # `neutral` is correct for either rotate convention.  Rolls run on the
        # XLU and are nearly free next to the MXU/EUP work.
        s = block * H2
        return (pltpu.roll(act, shift=s, axis=1)
                + pltpu.roll(act, shift=H2P - s, axis=1) - neutral)

    h1 = c1 = None
    h2 = jnp.zeros((Bp, H2P), jnp.float32)
    c2 = jnp.zeros((Bp, H2P), jnp.float32)

    # Fully unrolled recurrence; PyTorch gate order (i, f, g, o).
    for t in range(T):
        # ------------- layer 1 (H1 = 128, tile-aligned gate slices) -------
        g1 = pre1_ref[t * Bp:(t + 1) * Bp, :]
        if t > 0:
            g1 = g1 + jnp.dot(h1.astype(jnp.bfloat16), whh1_ref[...],
                              preferred_element_type=jnp.float32)
        i1 = jax.nn.sigmoid(g1[:, 0 * H1:1 * H1])
        gg1 = jnp.tanh(g1[:, 2 * H1:3 * H1])
        o1 = jax.nn.sigmoid(g1[:, 3 * H1:4 * H1])
        if t > 0:
            f1 = jax.nn.sigmoid(g1[:, 1 * H1:2 * H1])
            c1 = f1 * c1 + i1 * gg1
        else:
            c1 = i1 * gg1                     # h = c = 0 at t == 0
        h1 = o1 * jnp.tanh(c1)

        # ------------- layer 2 (compact 128-lane gate packing) ------------
        if t == 0:
            # h2 == 0: only the input half of the stacked weights is needed.
            g2 = (jnp.dot(h1.astype(jnp.bfloat16), w2_ref[0:H1, :],
                          preferred_element_type=jnp.float32) + b2)
        else:
            lhs = jnp.concatenate([h1, h2], axis=1).astype(jnp.bfloat16)
            g2 = (jnp.dot(lhs, w2_ref[...],
                          preferred_element_type=jnp.float32) + b2)
        sig = jax.nn.sigmoid(g2)              # one EUP pass for i/f/o
        th = jnp.tanh(g2)                     # one EUP pass for g
        i2 = sig                              # i-gate already on lanes [0,H2)
        gg2 = pick(th, 2, 0.0)
        o2 = pick(sig, 3, 0.5)
        if t > 0:
            f2 = pick(sig, 1, 0.5)
            c2 = f2 * c2 + i2 * gg2
        else:
            c2 = i2 * gg2
        h2 = o2 * jnp.tanh(c2)
        # Lanes >= H2 of h2/c2 carry bounded junk; next step they only hit
        # all-zero rows of w2 and the wrapper slices them off, so they never
        # affect real outputs.

        if t >= T - NC:
            out_ref[t - (T - NC)] = h2        # lane-dense (Bp, 128) store


# --------------------------- params / wrapper ---------------------------

def prepare_params(params, num_classes):
    """One-time constant preprocessing (transposes, packing, bias fusion).

    Kept OUT of the per-call hot path so the jitted forward only moves the
    activations and launches the kernel.
    """
    p1, p2 = params["lstm1"], params["lstm2"]
    H1 = p1["w_hh"].shape[1]
    H2 = num_classes
    H2P = 128
    assert p2["w_hh"].shape[1] == H2 and 4 * H2 <= H2P

    f32, bf16 = jnp.float32, jnp.bfloat16
    wih1 = jnp.asarray(p1["w_ih"], f32).T.astype(bf16)          # (D, 4*H1)
    whh1 = jnp.asarray(p1["w_hh"], f32).T.astype(bf16)          # (H1, 4*H1)
    b1 = (jnp.asarray(p1["b_ih"], f32)
          + jnp.asarray(p1["b_hh"], f32)).reshape(1, 4 * H1)

    # Layer-2 stacked weight (H1 + H2P, H2P): rows [0, H1) = W_ih2^T, rows
    # [H1, H1+H2) = W_hh2^T, everything else exactly zero.  Real gate columns
    # compact-packed into lanes [0, 4*H2); zero padding stays exact in bf16.
    w2 = jnp.zeros((H1 + H2P, H2P), f32)
    w2 = w2.at[:H1, :4 * H2].set(jnp.asarray(p2["w_ih"], f32).T)
    w2 = w2.at[H1:H1 + H2, :4 * H2].set(jnp.asarray(p2["w_hh"], f32).T)
    w2 = w2.astype(bf16)
    b2 = jnp.zeros((1, H2P), f32)
    b2 = b2.at[0, :4 * H2].set(jnp.asarray(p2["b_ih"], f32)
                               + jnp.asarray(p2["b_hh"], f32))
    return dict(wih1=wih1, whh1=whh1, b1=b1, w2=w2, b2=b2)


@functools.partial(jax.jit, static_argnames=("num_classes",))
def mann_forward(prep, inputs, num_classes):
    """inputs: (B, T, embed_size + num_classes), batch-first like PyTorch."""
    B, T, D = inputs.shape
    NC = num_classes
    assert T >= NC, "sequence length must be >= num_classes"
    H1, H1x4 = prep["whh1"].shape
    H2P = prep["b2"].shape[1]
    Bp = -(-B // 8) * 8                       # pad batch to f32 sublane multiple

    # Time-major, batch-padded, rows grouped per timestep: (T*Bp, D) bf16.
    x = jnp.transpose(inputs.astype(jnp.float32), (1, 0, 2))
    x = jnp.pad(x, ((0, 0), (0, Bp - B), (0, 0)))
    x = x.reshape(T * Bp, D).astype(jnp.bfloat16)

    # Single kernel invocation; every operand fully VMEM-resident (<0.5 MiB).
    out = pl.pallas_call(
        _mann_fused_kernel,
        out_shape=jax.ShapeDtypeStruct((NC, Bp, H2P), jnp.float32),
        in_specs=[pl.BlockSpec(memory_space=pltpu.MemorySpace.VMEM)] * 6,
        out_specs=pl.BlockSpec(memory_space=pltpu.MemorySpace.VMEM),
        scratch_shapes=[pltpu.VMEM((T * Bp, H1x4), jnp.float32)],
    )(x, prep["wih1"], prep["whh1"], prep["b1"], prep["w2"], prep["b2"])

    # (NC, Bp, H2P) -> (B, NC, num_classes): tiny slice + transpose.
    return jnp.transpose(out[:, :B, :NC], (1, 0, 2))


# ------------------------- parameter construction -------------------------

def init_lstm_params(key, input_size, hidden_size):
    """PyTorch nn.LSTM default init: U(-1/sqrt(H), 1/sqrt(H))."""
    k = 1.0 / np.sqrt(hidden_size)
    k0, k1, k2, k3 = jax.random.split(key, 4)
    w_ih = jax.random.uniform(k0, (4 * hidden_size, input_size),
                              jnp.float32, -k, k)
    w_hh = jax.random.uniform(k1, (4 * hidden_size, hidden_size),
                              jnp.float32, -k, k)
    b_ih = jax.random.uniform(k2, (4 * hidden_size,), jnp.float32, -k, k)
    b_hh = jax.random.uniform(k3, (4 * hidden_size,), jnp.float32, -k, k)
    return dict(w_ih=w_ih, w_hh=w_hh, b_ih=b_ih, b_hh=b_hh)


def init_mann_params(key, num_classes, embed_size, hidden1=128):
    k1, k2 = jax.random.split(key)
    return dict(
        lstm1=init_lstm_params(k1, embed_size + num_classes, hidden1),
        lstm2=init_lstm_params(k2, hidden1, num_classes),
    )


# ------------------------- pure-JAX references -------------------------

def _lstm_ref(x_btd, p, od=jnp.float32):
    """Pure-JAX LSTM, PyTorch gate order.  Matmul operands cast to `od` with
    f32 accumulation (matches the kernel exactly when od == bfloat16)."""
    H = p["w_hh"].shape[1]
    B = x_btd.shape[0]
    wih_t = jnp.asarray(p["w_ih"], jnp.float32).T.astype(od)
    whh_t = jnp.asarray(p["w_hh"], jnp.float32).T.astype(od)
    bias = jnp.asarray(p["b_ih"] + p["b_hh"], jnp.float32)

    def step(carry, x_t):
        h, c = carry
        g = (jnp.dot(x_t.astype(od), wih_t, preferred_element_type=jnp.float32)
             + jnp.dot(h.astype(od), whh_t, preferred_element_type=jnp.float32)
             + bias)
        i = jax.nn.sigmoid(g[:, 0 * H:1 * H])
        f = jax.nn.sigmoid(g[:, 1 * H:2 * H])
        gg = jnp.tanh(g[:, 2 * H:3 * H])
        o = jax.nn.sigmoid(g[:, 3 * H:4 * H])
        c = f * c + i * gg
        h = o * jnp.tanh(c)
        return (h, c), h

    h0 = jnp.zeros((B, H), jnp.float32)
    c0 = jnp.zeros((B, H), jnp.float32)
    _, hs = jax.lax.scan(step, (h0, c0), jnp.transpose(x_btd, (1, 0, 2)))
    return jnp.transpose(hs, (1, 0, 2))


def mann_ref(params, inputs, num_classes, od=jnp.float32):
    x = _lstm_ref(inputs.astype(jnp.float32), params["lstm1"], od)
    x = _lstm_ref(x, params["lstm2"], od)
    return x[:, -num_classes:, :]


# ------------------------------ main ------------------------------

if __name__ == "__main__":
    num_classes = 4
    num_samples = 2
    embed_size = 16
    B = 2
    T = num_classes * num_samples            # typical MANN sequence length = 8
    D = embed_size + num_classes             # 20

    key = jax.random.PRNGKey(0)
    kp, kx = jax.random.split(key)
    params = init_mann_params(kp, num_classes, embed_size)
    x = jax.random.normal(kx, (B, T, D), jnp.float32)

    prep = prepare_params(params, num_classes)        # one-time, off hot path
    out = jax.block_until_ready(mann_forward(prep, x, num_classes=num_classes))
    assert out.shape == (B, num_classes, num_classes)

    # Matched-precision reference (bf16 matmul operands, f32 accumulation and
    # state, like the kernel): tight check of the kernel math.
    ref_matched = mann_ref(params, x, num_classes, od=jnp.bfloat16)
    np.testing.assert_allclose(np.asarray(out), np.asarray(ref_matched),
                               rtol=1e-2, atol=1e-2)
    # Full-f32 reference (exact PyTorch-module semantics): loose check that
    # only has to absorb the bf16 operand quantization.
    ref_f32 = mann_ref(params, x, num_classes, od=jnp.float32)
    np.testing.assert_allclose(np.asarray(out), np.asarray(ref_f32),
                               rtol=2e-1, atol=2e-1)

    print("KERNEL_OK")
</pallas_src>

<mosaic_0001>
module attributes {stable_mosaic.version = 11 : i64} {
  func.func @_mann_fused_kernel(%arg0: memref<64x20xbf16, #tpu.memory_space<vmem>>, %arg1: memref<20x512xbf16, #tpu.memory_space<vmem>>, %arg2: memref<128x512xbf16, #tpu.memory_space<vmem>>, %arg3: memref<1x512xf32, #tpu.memory_space<vmem>>, %arg4: memref<256x128xbf16, #tpu.memory_space<vmem>>, %arg5: memref<1x128xf32, #tpu.memory_space<vmem>>, %arg6: memref<4x8x128xf32, #tpu.memory_space<vmem>>, %arg7: memref<64x512xf32, #tpu.memory_space<vmem>>) attributes {dimension_semantics = [], scalar_prefetch = 0 : i64, scratch_operands = 1 : i64, tpu.core_type = #tpu.core_type<tc>} {
    %c0 = arith.constant 0 : index
    %c0_0 = arith.constant 0 : index
    %0 = vector.load %arg0[%c0, %c0_0] : memref<64x20xbf16, #tpu.memory_space<vmem>>, vector<64x20xbf16>
    %c0_1 = arith.constant 0 : index
    %c0_2 = arith.constant 0 : index
    %1 = vector.load %arg1[%c0_1, %c0_2] : memref<20x512xbf16, #tpu.memory_space<vmem>>, vector<20x512xbf16>
    %cst = arith.constant dense<0.000000e+00> : vector<64x512xf32>
    %2 = tpu.matmul %0, %1, %cst {dimension_numbers = #tpu.dot_dimension_numbers<[1], [0], [0], [1], [0, 0, 1, 1], [], []>} : vector<64x20xbf16>, vector<20x512xbf16>, vector<64x512xf32> -> vector<64x512xf32>
    %c0_3 = arith.constant 0 : index
    %c0_4 = arith.constant 0 : index
    %3 = vector.load %arg3[%c0_3, %c0_4] : memref<1x512xf32, #tpu.memory_space<vmem>>, vector<1x512xf32>
    %4 = vector.broadcast %3 : vector<1x512xf32> to vector<64x512xf32>
    %5 = arith.addf %2, %4 : vector<64x512xf32>
    %c0_5 = arith.constant 0 : index
    %c0_6 = arith.constant 0 : index
    %6 = vector.load %arg7[%c0_5, %c0_6] : memref<64x512xf32, #tpu.memory_space<vmem>>, vector<64x512xf32>
    tpu.vector_store %arg7[%c0_5, %c0_6], %5 {strides = array<i32>} : memref<64x512xf32, #tpu.memory_space<vmem>>, vector<64x512xf32>,
    %c0_7 = arith.constant 0 : index
    %c0_8 = arith.constant 0 : index
    %7 = vector.load %arg5[%c0_7, %c0_8] : memref<1x128xf32, #tpu.memory_space<vmem>>, vector<1x128xf32>
    %8 = vector.shape_cast %7 : vector<1x128xf32> to vector<1x128xf32>
    %9 = vector.broadcast %8 : vector<1x128xf32> to vector<8x128xf32>
    %c0_9 = arith.constant 0 : index
    %c0_10 = arith.constant 0 : index
    %10 = vector.load %arg7[%c0_9, %c0_10] : memref<64x512xf32, #tpu.memory_space<vmem>>, vector<8x512xf32>
    %11 = vector.extract_strided_slice %10 {offsets = [0, 0], sizes = [8, 128], strides = [1, 1]} : vector<8x512xf32> to vector<8x128xf32>
    %12 = arith.negf %11 : vector<8x128xf32>
    %13 = math.exp %12 : vector<8x128xf32>
    %cst_11 = arith.constant 1.000000e+00 : f32
    %14 = vector.broadcast %cst_11 : f32 to vector<8x128xf32>
    %15 = arith.addf %14, %13 : vector<8x128xf32>
    %16 = arith.divf %14, %15 : vector<8x128xf32>
    %17 = vector.extract_strided_slice %10 {offsets = [0, 256], sizes = [8, 128], strides = [1, 1]} : vector<8x512xf32> to vector<8x128xf32>
    %18 = math.tanh %17 : vector<8x128xf32>
    %19 = vector.extract_strided_slice %10 {offsets = [0, 384], sizes = [8, 128], strides = [1, 1]} : vector<8x512xf32> to vector<8x128xf32>
    %20 = arith.negf %19 : vector<8x128xf32>
    %21 = math.exp %20 : vector<8x128xf32>
    %cst_12 = arith.constant 1.000000e+00 : f32
    %22 = vector.broadcast %cst_12 : f32 to vector<8x128xf32>
    %23 = arith.addf %22, %21 : vector<8x128xf32>
    %24 = arith.divf %22, %23 : vector<8x128xf32>
    %25 = arith.mulf %16, %18 : vector<8x128xf32>
    %26 = math.tanh %25 : vector<8x128xf32>
    %27 = arith.mulf %24, %26 : vector<8x128xf32>
    %28 = arith.truncf %27 : vector<8x128xf32> to vector<8x128xbf16>
    %c0_13 = arith.constant 0 : index
    %c0_14 = arith.constant 0 : index
    %29 = vector.load %arg4[%c0_13, %c0_14] : memref<256x128xbf16, #tpu.memory_space<vmem>>, vector<128x128xbf16>
    %cst_15 = arith.constant dense<0.000000e+00> : vector<8x128xf32>
    %30 = tpu.matmul %28, %29, %cst_15 {dimension_numbers = #tpu.dot_dimension_numbers<[1], [0], [0], [1], [0, 0, 1, 1], [], []>} : vector<8x128xbf16>, vector<128x128xbf16>, vector<8x128xf32> -> vector<8x128xf32>
    %31 = arith.addf %30, %9 : vector<8x128xf32>
    %32 = arith.negf %31 : vector<8x128xf32>
    %33 = math.exp %32 : vector<8x128xf32>
    %cst_16 = arith.constant 1.000000e+00 : f32
    %34 = vector.broadcast %cst_16 : f32 to vector<8x128xf32>
    %35 = arith.addf %34, %33 : vector<8x128xf32>
    %36 = arith.divf %34, %35 : vector<8x128xf32>
    %37 = math.tanh %31 : vector<8x128xf32>
    %c8_i32 = arith.constant 8 : i32
    %38 = tpu.dynamic_rotate %37 by %c8_i32 dim 1 : vector<8x128xf32>, i32 -> vector<8x128xf32>
    %c120_i32 = arith.constant 120 : i32
    %39 = tpu.dynamic_rotate %37 by %c120_i32 dim 1 : vector<8x128xf32>, i32 -> vector<8x128xf32>
    %40 = arith.addf %38, %39 : vector<8x128xf32>
    %cst_17 = arith.constant 0.000000e+00 : f32
    %41 = vector.broadcast %cst_17 : f32 to vector<8x128xf32>
    %42 = arith.subf %40, %41 : vector<8x128xf32>
    %c12_i32 = arith.constant 12 : i32
    %43 = tpu.dynamic_rotate %36 by %c12_i32 dim 1 : vector<8x128xf32>, i32 -> vector<8x128xf32>
    %c116_i32 = arith.constant 116 : i32
    %44 = tpu.dynamic_rotate %36 by %c116_i32 dim 1 : vector<8x128xf32>, i32 -> vector<8x128xf32>
    %45 = arith.addf %43, %44 : vector<8x128xf32>
    %cst_18 = arith.constant 5.000000e-01 : f32
    %46 = vector.broadcast %cst_18 : f32 to vector<8x128xf32>
    %47 = arith.subf %45, %46 : vector<8x128xf32>
    %48 = arith.mulf %36, %42 : vector<8x128xf32>
    %49 = math.tanh %48 : vector<8x128xf32>
    %50 = arith.mulf %47, %49 : vector<8x128xf32>
    %c8 = arith.constant 8 : index
    %c0_19 = arith.constant 0 : index
    %51 = vector.load %arg7[%c8, %c0_19] : memref<64x512xf32, #tpu.memory_space<vmem>>, vector<8x512xf32>
    %52 = arith.truncf %27 : vector<8x128xf32> to vector<8x128xbf16>
    %c0_20 = arith.constant 0 : index
    %c0_21 = arith.constant 0 : index
    %53 = vector.load %arg2[%c0_20, %c0_21] : memref<128x512xbf16, #tpu.memory_space<vmem>>, vector<128x512xbf16>
    %cst_22 = arith.constant dense<0.000000e+00> : vector<8x512xf32>
    %54 = tpu.matmul %52, %53, %cst_22 {dimension_numbers = #tpu.dot_dimension_numbers<[1], [0], [0], [1], [0, 0, 1, 1], [], []>} : vector<8x128xbf16>, vector<128x512xbf16>, vector<8x512xf32> -> vector<8x512xf32>
    %55 = arith.addf %51, %54 : vector<8x512xf32>
    %56 = vector.extract_strided_slice %55 {offsets = [0, 0], sizes = [8, 128], strides = [1, 1]} : vector<8x512xf32> to vector<8x128xf32>
    %57 = arith.negf %56 : vector<8x128xf32>
    %58 = math.exp %57 : vector<8x128xf32>
    %cst_23 = arith.constant 1.000000e+00 : f32
    %59 = vector.broadcast %cst_23 : f32 to vector<8x128xf32>
    %60 = arith.addf %59, %58 : vector<8x128xf32>
    %61 = arith.divf %59, %60 : vector<8x128xf32>
    %62 = vector.extract_strided_slice %55 {offsets = [0, 256], sizes = [8, 128], strides = [1, 1]} : vector<8x512xf32> to vector<8x128xf32>
    %63 = math.tanh %62 : vector<8x128xf32>
    %64 = vector.extract_strided_slice %55 {offsets = [0, 384], sizes = [8, 128], strides = [1, 1]} : vector<8x512xf32> to vector<8x128xf32>
    %65 = arith.negf %64 : vector<8x128xf32>
    %66 = math.exp %65 : vector<8x128xf32>
    %cst_24 = arith.constant 1.000000e+00 : f32
    %67 = vector.broadcast %cst_24 : f32 to vector<8x128xf32>
    %68 = arith.addf %67, %66 : vector<8x128xf32>
    %69 = arith.divf %67, %68 : vector<8x128xf32>
    %70 = vector.extract_strided_slice %55 {offsets = [0, 128], sizes = [8, 128], strides = [1, 1]} : vector<8x512xf32> to vector<8x128xf32>
    %71 = arith.negf %70 : vector<8x128xf32>
    %72 = math.exp %71 : vector<8x128xf32>
    %cst_25 = arith.constant 1.000000e+00 : f32
    %73 = vector.broadcast %cst_25 : f32 to vector<8x128xf32>
    %74 = arith.addf %73, %72 : vector<8x128xf32>
    %75 = arith.divf %73, %74 : vector<8x128xf32>
    %76 = arith.mulf %75, %25 : vector<8x128xf32>
    %77 = arith.mulf %61, %63 : vector<8x128xf32>
    %78 = arith.addf %76, %77 : vector<8x128xf32>
    %79 = math.tanh %78 : vector<8x128xf32>
    %80 = arith.mulf %69, %79 : vector<8x128xf32>
    %81 = tpu.concatenate %80, %50 in 1 : vector<8x128xf32>, vector<8x128xf32> -> vector<8x256xf32>
    %82 = arith.truncf %81 : vector<8x256xf32> to vector<8x256xbf16>
    %c0_26 = arith.constant 0 : index
    %c0_27 = arith.constant 0 : index
    %83 = vector.load %arg4[%c0_26, %c0_27] : memref<256x128xbf16, #tpu.memory_space<vmem>>, vector<256x128xbf16>
    %cst_28 = arith.constant dense<0.000000e+00> : vector<8x128xf32>
    %84 = tpu.matmul %82, %83, %cst_28 {dimension_numbers = #tpu.dot_dimension_numbers<[1], [0], [0], [1], [0, 0, 1, 1], [], []>} : vector<8x256xbf16>, vector<256x128xbf16>, vector<8x128xf32> -> vector<8x128xf32>
    %85 = arith.addf %84, %9 : vector<8x128xf32>
    %86 = arith.negf %85 : vector<8x128xf32>
    %87 = math.exp %86 : vector<8x128xf32>
    %cst_29 = arith.constant 1.000000e+00 : f32
    %88 = vector.broadcast %cst_29 : f32 to vector<8x128xf32>
    %89 = arith.addf %88, %87 : vector<8x128xf32>
    %90 = arith.divf %88, %89 : vector<8x128xf32>
    %91 = math.tanh %85 : vector<8x128xf32>
    %c8_i32_30 = arith.constant 8 : i32
    %92 = tpu.dynamic_rotate %91 by %c8_i32_30 dim 1 : vector<8x128xf32>, i32 -> vector<8x128xf32>
    %c120_i32_31 = arith.constant 120 : i32
    %93 = tpu.dynamic_rotate %91 by %c120_i32_31 dim 1 : vector<8x128xf32>, i32 -> vector<8x128xf32>
    %94 = arith.addf %92, %93 : vector<8x128xf32>
    %cst_32 = arith.constant 0.000000e+00 : f32
    %95 = vector.broadcast %cst_32 : f32 to vector<8x128xf32>
    %96 = arith.subf %94, %95 : vector<8x128xf32>
    %c12_i32_33 = arith.constant 12 : i32
    %97 = tpu.dynamic_rotate %90 by %c12_i32_33 dim 1 : vector<8x128xf32>, i32 -> vector<8x128xf32>
    %c116_i32_34 = arith.constant 116 : i32
    %98 = tpu.dynamic_rotate %90 by %c116_i32_34 dim 1 : vector<8x128xf32>, i32 -> vector<8x128xf32>
    %99 = arith.addf %97, %98 : vector<8x128xf32>
    %cst_35 = arith.constant 5.000000e-01 : f32
    %100 = vector.broadcast %cst_35 : f32 to vector<8x128xf32>
    %101 = arith.subf %99, %100 : vector<8x128xf32>
    %c4_i32 = arith.constant 4 : i32
    %102 = tpu.dynamic_rotate %90 by %c4_i32 dim 1 : vector<8x128xf32>, i32 -> vector<8x128xf32>
    %c124_i32 = arith.constant 124 : i32
    %103 = tpu.dynamic_rotate %90 by %c124_i32 dim 1 : vector<8x128xf32>, i32 -> vector<8x128xf32>
    %104 = arith.addf %102, %103 : vector<8x128xf32>
    %cst_36 = arith.constant 5.000000e-01 : f32
    %105 = vector.broadcast %cst_36 : f32 to vector<8x128xf32>
    %106 = arith.subf %104, %105 : vector<8x128xf32>
    %107 = arith.mulf %106, %48 : vector<8x128xf32>
    %108 = arith.mulf %90, %96 : vector<8x128xf32>
    %109 = arith.addf %107, %108 : vector<8x128xf32>
    %110 = math.tanh %109 : vector<8x128xf32>
    %111 = arith.mulf %101, %110 : vector<8x128xf32>
    %c16 = arith.constant 16 : index
    %c0_37 = arith.constant 0 : index
    %112 = vector.load %arg7[%c16, %c0_37] : memref<64x512xf32, #tpu.memory_space<vmem>>, vector<8x512xf32>
    %113 = arith.truncf %80 : vector<8x128xf32> to vector<8x128xbf16>
    %c0_38 = arith.constant 0 : index
    %c0_39 = arith.constant 0 : index
    %114 = vector.load %arg2[%c0_38, %c0_39] : memref<128x512xbf16, #tpu.memory_space<vmem>>, vector<128x512xbf16>
    %cst_40 = arith.constant dense<0.000000e+00> : vector<8x512xf32>
    %115 = tpu.matmul %113, %114, %cst_40 {dimension_numbers = #tpu.dot_dimension_numbers<[1], [0], [0], [1], [0, 0, 1, 1], [], []>} : vector<8x128xbf16>, vector<128x512xbf16>, vector<8x512xf32> -> vector<8x512xf32>
    %116 = arith.addf %112, %115 : vector<8x512xf32>
    %117 = vector.extract_strided_slice %116 {offsets = [0, 0], sizes = [8, 128], strides = [1, 1]} : vector<8x512xf32> to vector<8x128xf32>
    %118 = arith.negf %117 : vector<8x128xf32>
    %119 = math.exp %118 : vector<8x128xf32>
    %cst_41 = arith.constant 1.000000e+00 : f32
    %120 = vector.broadcast %cst_41 : f32 to vector<8x128xf32>
    %121 = arith.addf %120, %119 : vector<8x128xf32>
    %122 = arith.divf %120, %121 : vector<8x128xf32>
    %123 = vector.extract_strided_slice %116 {offsets = [0, 256], sizes = [8, 128], strides = [1, 1]} : vector<8x512xf32> to vector<8x128xf32>
    %124 = math.tanh %123 : vector<8x128xf32>
    %125 = vector.extract_strided_slice %116 {offsets = [0, 384], sizes = [8, 128], strides = [1, 1]} : vector<8x512xf32> to vector<8x128xf32>
    %126 = arith.negf %125 : vector<8x128xf32>
    %127 = math.exp %126 : vector<8x128xf32>
    %cst_42 = arith.constant 1.000000e+00 : f32
    %128 = vector.broadcast %cst_42 : f32 to vector<8x128xf32>
    %129 = arith.addf %128, %127 : vector<8x128xf32>
    %130 = arith.divf %128, %129 : vector<8x128xf32>
    %131 = vector.extract_strided_slice %116 {offsets = [0, 128], sizes = [8, 128], strides = [1, 1]} : vector<8x512xf32> to vector<8x128xf32>
    %132 = arith.negf %131 : vector<8x128xf32>
    %133 = math.exp %132 : vector<8x128xf32>
    %cst_43 = arith.constant 1.000000e+00 : f32
    %134 = vector.broadcast %cst_43 : f32 to vector<8x128xf32>
    %135 = arith.addf %134, %133 : vector<8x128xf32>
    %136 = arith.divf %134, %135 : vector<8x128xf32>
    %137 = arith.mulf %136, %78 : vector<8x128xf32>
    %138 = arith.mulf %122, %124 : vector<8x128xf32>
    %139 = arith.addf %137, %138 : vector<8x128xf32>
    %140 = math.tanh %139 : vector<8x128xf32>
    %141 = arith.mulf %130, %140 : vector<8x128xf32>
    %142 = tpu.concatenate %141, %111 in 1 : vector<8x128xf32>, vector<8x128xf32> -> vector<8x256xf32>
    %143 = arith.truncf %142 : vector<8x256xf32> to vector<8x256xbf16>
    %c0_44 = arith.constant 0 : index
    %c0_45 = arith.constant 0 : index
    %144 = vector.load %arg4[%c0_44, %c0_45] : memref<256x128xbf16, #tpu.memory_space<vmem>>, vector<256x128xbf16>
    %cst_46 = arith.constant dense<0.000000e+00> : vector<8x128xf32>
    %145 = tpu.matmul %143, %144, %cst_46 {dimension_numbers = #tpu.dot_dimension_numbers<[1], [0], [0], [1], [0, 0, 1, 1], [], []>} : vector<8x256xbf16>, vector<256x128xbf16>, vector<8x128xf32> -> vector<8x128xf32>
    %146 = arith.addf %145, %9 : vector<8x128xf32>
    %147 = arith.negf %146 : vector<8x128xf32>
    %148 = math.exp %147 : vector<8x128xf32>
    %cst_47 = arith.constant 1.000000e+00 : f32
    %149 = vector.broadcast %cst_47 : f32 to vector<8x128xf32>
    %150 = arith.addf %149, %148 : vector<8x128xf32>
    %151 = arith.divf %149, %150 : vector<8x128xf32>
    %152 = math.tanh %146 : vector<8x128xf32>
    %c8_i32_48 = arith.constant 8 : i32
    %153 = tpu.dynamic_rotate %152 by %c8_i32_48 dim 1 : vector<8x128xf32>, i32 -> vector<8x128xf32>
    %c120_i32_49 = arith.constant 120 : i32
    %154 = tpu.dynamic_rotate %152 by %c120_i32_49 dim 1 : vector<8x128xf32>, i32 -> vector<8x128xf32>
    %155 = arith.addf %153, %154 : vector<8x128xf32>
    %cst_50 = arith.constant 0.000000e+00 : f32
    %156 = vector.broadcast %cst_50 : f32 to vector<8x128xf32>
    %157 = arith.subf %155, %156 : vector<8x128xf32>
    %c12_i32_51 = arith.constant 12 : i32
    %158 = tpu.dynamic_rotate %151 by %c12_i32_51 dim 1 : vector<8x128xf32>, i32 -> vector<8x128xf32>
    %c116_i32_52 = arith.constant 116 : i32
    %159 = tpu.dynamic_rotate %151 by %c116_i32_52 dim 1 : vector<8x128xf32>, i32 -> vector<8x128xf32>
    %160 = arith.addf %158, %159 : vector<8x128xf32>
    %cst_53 = arith.constant 5.000000e-01 : f32
    %161 = vector.broadcast %cst_53 : f32 to vector<8x128xf32>
    %162 = arith.subf %160, %161 : vector<8x128xf32>
    %c4_i32_54 = arith.constant 4 : i32
    %163 = tpu.dynamic_rotate %151 by %c4_i32_54 dim 1 : vector<8x128xf32>, i32 -> vector<8x128xf32>
    %c124_i32_55 = arith.constant 124 : i32
    %164 = tpu.dynamic_rotate %151 by %c124_i32_55 dim 1 : vector<8x128xf32>, i32 -> vector<8x128xf32>
    %165 = arith.addf %163, %164 : vector<8x128xf32>
    %cst_56 = arith.constant 5.000000e-01 : f32
    %166 = vector.broadcast %cst_56 : f32 to vector<8x128xf32>
    %167 = arith.subf %165, %166 : vector<8x128xf32>
    %168 = arith.mulf %167, %109 : vector<8x128xf32>
    %169 = arith.mulf %151, %157 : vector<8x128xf32>
    %170 = arith.addf %168, %169 : vector<8x128xf32>
    %171 = math.tanh %170 : vector<8x128xf32>
    %172 = arith.mulf %162, %171 : vector<8x128xf32>
    %c24 = arith.constant 24 : index
    %c0_57 = arith.constant 0 : index
    %173 = vector.load %arg7[%c24, %c0_57] : memref<64x512xf32, #tpu.memory_space<vmem>>, vector<8x512xf32>
    %174 = arith.truncf %141 : vector<8x128xf32> to vector<8x128xbf16>
    %c0_58 = arith.constant 0 : index
    %c0_59 = arith.constant 0 : index
    %175 = vector.load %arg2[%c0_58, %c0_59] : memref<128x512xbf16, #tpu.memory_space<vmem>>, vector<128x512xbf16>
    %cst_60 = arith.constant dense<0.000000e+00> : vector<8x512xf32>
    %176 = tpu.matmul %174, %175, %cst_60 {dimension_numbers = #tpu.dot_dimension_numbers<[1], [0], [0], [1], [0, 0, 1, 1], [], []>} : vector<8x128xbf16>, vector<128x512xbf16>, vector<8x512xf32> -> vector<8x512xf32>
    %177 = arith.addf %173, %176 : vector<8x512xf32>
    %178 = vector.extract_strided_slice %177 {offsets = [0, 0], sizes = [8, 128], strides = [1, 1]} : vector<8x512xf32> to vector<8x128xf32>
    %179 = arith.negf %178 : vector<8x128xf32>
    %180 = math.exp %179 : vector<8x128xf32>
    %cst_61 = arith.constant 1.000000e+00 : f32
    %181 = vector.broadcast %cst_61 : f32 to vector<8x128xf32>
    %182 = arith.addf %181, %180 : vector<8x128xf32>
    %183 = arith.divf %181, %182 : vector<8x128xf32>
    %184 = vector.extract_strided_slice %177 {offsets = [0, 256], sizes = [8, 128], strides = [1, 1]} : vector<8x512xf32> to vector<8x128xf32>
    %185 = math.tanh %184 : vector<8x128xf32>
    %186 = vector.extract_strided_slice %177 {offsets = [0, 384], sizes = [8, 128], strides = [1, 1]} : vector<8x512xf32> to vector<8x128xf32>
    %187 = arith.negf %186 : vector<8x128xf32>
    %188 = math.exp %187 : vector<8x128xf32>
    %cst_62 = arith.constant 1.000000e+00 : f32
    %189 = vector.broadcast %cst_62 : f32 to vector<8x128xf32>
    %190 = arith.addf %189, %188 : vector<8x128xf32>
    %191 = arith.divf %189, %190 : vector<8x128xf32>
    %192 = vector.extract_strided_slice %177 {offsets = [0, 128], sizes = [8, 128], strides = [1, 1]} : vector<8x512xf32> to vector<8x128xf32>
    %193 = arith.negf %192 : vector<8x128xf32>
    %194 = math.exp %193 : vector<8x128xf32>
    %cst_63 = arith.constant 1.000000e+00 : f32
    %195 = vector.broadcast %cst_63 : f32 to vector<8x128xf32>
    %196 = arith.addf %195, %194 : vector<8x128xf32>
    %197 = arith.divf %195, %196 : vector<8x128xf32>
    %198 = arith.mulf %197, %139 : vector<8x128xf32>
    %199 = arith.mulf %183, %185 : vector<8x128xf32>
    %200 = arith.addf %198, %199 : vector<8x128xf32>
    %201 = math.tanh %200 : vector<8x128xf32>
    %202 = arith.mulf %191, %201 : vector<8x128xf32>
    %203 = tpu.concatenate %202, %172 in 1 : vector<8x128xf32>, vector<8x128xf32> -> vector<8x256xf32>
    %204 = arith.truncf %203 : vector<8x256xf32> to vector<8x256xbf16>
    %c0_64 = arith.constant 0 : index
    %c0_65 = arith.constant 0 : index
    %205 = vector.load %arg4[%c0_64, %c0_65] : memref<256x128xbf16, #tpu.memory_space<vmem>>, vector<256x128xbf16>
    %cst_66 = arith.constant dense<0.000000e+00> : vector<8x128xf32>
    %206 = tpu.matmul %204, %205, %cst_66 {dimension_numbers = #tpu.dot_dimension_numbers<[1], [0], [0], [1], [0, 0, 1, 1], [], []>} : vector<8x256xbf16>, vector<256x128xbf16>, vector<8x128xf32> -> vector<8x128xf32>
    %207 = arith.addf %206, %9 : vector<8x128xf32>
    %208 = arith.negf %207 : vector<8x128xf32>
    %209 = math.exp %208 : vector<8x128xf32>
    %cst_67 = arith.constant 1.000000e+00 : f32
    %210 = vector.broadcast %cst_67 : f32 to vector<8x128xf32>
    %211 = arith.addf %210, %209 : vector<8x128xf32>
    %212 = arith.divf %210, %211 : vector<8x128xf32>
    %213 = math.tanh %207 : vector<8x128xf32>
    %c8_i32_68 = arith.constant 8 : i32
    %214 = tpu.dynamic_rotate %213 by %c8_i32_68 dim 1 : vector<8x128xf32>, i32 -> vector<8x128xf32>
    %c120_i32_69 = arith.constant 120 : i32
    %215 = tpu.dynamic_rotate %213 by %c120_i32_69 dim 1 : vector<8x128xf32>, i32 -> vector<8x128xf32>
    %216 = arith.addf %214, %215 : vector<8x128xf32>
    %cst_70 = arith.constant 0.000000e+00 : f32
    %217 = vector.broadcast %cst_70 : f32 to vector<8x128xf32>
    %218 = arith.subf %216, %217 : vector<8x128xf32>
    %c12_i32_71 = arith.constant 12 : i32
    %219 = tpu.dynamic_rotate %212 by %c12_i32_71 dim 1 : vector<8x128xf32>, i32 -> vector<8x128xf32>
    %c116_i32_72 = arith.constant 116 : i32
    %220 = tpu.dynamic_rotate %212 by %c116_i32_72 dim 1 : vector<8x128xf32>, i32 -> vector<8x128xf32>
    %221 = arith.addf %219, %220 : vector<8x128xf32>
    %cst_73 = arith.constant 5.000000e-01 : f32
    %222 = vector.broadcast %cst_73 : f32 to vector<8x128xf32>
    %223 = arith.subf %221, %222 : vector<8x128xf32>
    %c4_i32_74 = arith.constant 4 : i32
    %224 = tpu.dynamic_rotate %212 by %c4_i32_74 dim 1 : vector<8x128xf32>, i32 -> vector<8x128xf32>
    %c124_i32_75 = arith.constant 124 : i32
    %225 = tpu.dynamic_rotate %212 by %c124_i32_75 dim 1 : vector<8x128xf32>, i32 -> vector<8x128xf32>
    %226 = arith.addf %224, %225 : vector<8x128xf32>
    %cst_76 = arith.constant 5.000000e-01 : f32
    %227 = vector.broadcast %cst_76 : f32 to vector<8x128xf32>
    %228 = arith.subf %226, %227 : vector<8x128xf32>
    %229 = arith.mulf %228, %170 : vector<8x128xf32>
    %230 = arith.mulf %212, %218 : vector<8x128xf32>
    %231 = arith.addf %229, %230 : vector<8x128xf32>
    %232 = math.tanh %231 : vector<8x128xf32>
    %233 = arith.mulf %223, %232 : vector<8x128xf32>
    %c32 = arith.constant 32 : index
    %c0_77 = arith.constant 0 : index
    %234 = vector.load %arg7[%c32, %c0_77] : memref<64x512xf32, #tpu.memory_space<vmem>>, vector<8x512xf32>
    %235 = arith.truncf %202 : vector<8x128xf32> to vector<8x128xbf16>
    %c0_78 = arith.constant 0 : index
    %c0_79 = arith.constant 0 : index
    %236 = vector.load %arg2[%c0_78, %c0_79] : memref<128x512xbf16, #tpu.memory_space<vmem>>, vector<128x512xbf16>
    %cst_80 = arith.constant dense<0.000000e+00> : vector<8x512xf32>
    %237 = tpu.matmul %235, %236, %cst_80 {dimension_numbers = #tpu.dot_dimension_numbers<[1], [0], [0], [1], [0, 0, 1, 1], [], []>} : vector<8x128xbf16>, vector<128x512xbf16>, vector<8x512xf32> -> vector<8x512xf32>
    %238 = arith.addf %234, %237 : vector<8x512xf32>
    %239 = vector.extract_strided_slice %238 {offsets = [0, 0], sizes = [8, 128], strides = [1, 1]} : vector<8x512xf32> to vector<8x128xf32>
    %240 = arith.negf %239 : vector<8x128xf32>
    %241 = math.exp %240 : vector<8x128xf32>
    %cst_81 = arith.constant 1.000000e+00 : f32
    %242 = vector.broadcast %cst_81 : f32 to vector<8x128xf32>
    %243 = arith.addf %242, %241 : vector<8x128xf32>
    %244 = arith.divf %242, %243 : vector<8x128xf32>
    %245 = vector.extract_strided_slice %238 {offsets = [0, 256], sizes = [8, 128], strides = [1, 1]} : vector<8x512xf32> to vector<8x128xf32>
    %246 = math.tanh %245 : vector<8x128xf32>
    %247 = vector.extract_strided_slice %238 {offsets = [0, 384], sizes = [8, 128], strides = [1, 1]} : vector<8x512xf32> to vector<8x128xf32>
    %248 = arith.negf %247 : vector<8x128xf32>
    %249 = math.exp %248 : vector<8x128xf32>
    %cst_82 = arith.constant 1.000000e+00 : f32
    %250 = vector.broadcast %cst_82 : f32 to vector<8x128xf32>
    %251 = arith.addf %250, %249 : vector<8x128xf32>
    %252 = arith.divf %250, %251 : vector<8x128xf32>
    %253 = vector.extract_strided_slice %238 {offsets = [0, 128], sizes = [8, 128], strides = [1, 1]} : vector<8x512xf32> to vector<8x128xf32>
    %254 = arith.negf %253 : vector<8x128xf32>
    %255 = math.exp %254 : vector<8x128xf32>
    %cst_83 = arith.constant 1.000000e+00 : f32
    %256 = vector.broadcast %cst_83 : f32 to vector<8x128xf32>
    %257 = arith.addf %256, %255 : vector<8x128xf32>
    %258 = arith.divf %256, %257 : vector<8x128xf32>
    %259 = arith.mulf %258, %200 : vector<8x128xf32>
    %260 = arith.mulf %244, %246 : vector<8x128xf32>
    %261 = arith.addf %259, %260 : vector<8x128xf32>
    %262 = math.tanh %261 : vector<8x128xf32>
    %263 = arith.mulf %252, %262 : vector<8x128xf32>
    %264 = tpu.concatenate %263, %233 in 1 : vector<8x128xf32>, vector<8x128xf32> -> vector<8x256xf32>
    %265 = arith.truncf %264 : vector<8x256xf32> to vector<8x256xbf16>
    %c0_84 = arith.constant 0 : index
    %c0_85 = arith.constant 0 : index
    %266 = vector.load %arg4[%c0_84, %c0_85] : memref<256x128xbf16, #tpu.memory_space<vmem>>, vector<256x128xbf16>
    %cst_86 = arith.constant dense<0.000000e+00> : vector<8x128xf32>
    %267 = tpu.matmul %265, %266, %cst_86 {dimension_numbers = #tpu.dot_dimension_numbers<[1], [0], [0], [1], [0, 0, 1, 1], [], []>} : vector<8x256xbf16>, vector<256x128xbf16>, vector<8x128xf32> -> vector<8x128xf32>
    %268 = arith.addf %267, %9 : vector<8x128xf32>
    %269 = arith.negf %268 : vector<8x128xf32>
    %270 = math.exp %269 : vector<8x128xf32>
    %cst_87 = arith.constant 1.000000e+00 : f32
    %271 = vector.broadcast %cst_87 : f32 to vector<8x128xf32>
    %272 = arith.addf %271, %270 : vector<8x128xf32>
    %273 = arith.divf %271, %272 : vector<8x128xf32>
    %274 = math.tanh %268 : vector<8x128xf32>
    %c8_i32_88 = arith.constant 8 : i32
    %275 = tpu.dynamic_rotate %274 by %c8_i32_88 dim 1 : vector<8x128xf32>, i32 -> vector<8x128xf32>
    %c120_i32_89 = arith.constant 120 : i32
    %276 = tpu.dynamic_rotate %274 by %c120_i32_89 dim 1 : vector<8x128xf32>, i32 -> vector<8x128xf32>
    %277 = arith.addf %275, %276 : vector<8x128xf32>
    %cst_90 = arith.constant 0.000000e+00 : f32
    %278 = vector.broadcast %cst_90 : f32 to vector<8x128xf32>
    %279 = arith.subf %277, %278 : vector<8x128xf32>
    %c12_i32_91 = arith.constant 12 : i32
    %280 = tpu.dynamic_rotate %273 by %c12_i32_91 dim 1 : vector<8x128xf32>, i32 -> vector<8x128xf32>
    %c116_i32_92 = arith.constant 116 : i32
    %281 = tpu.dynamic_rotate %273 by %c116_i32_92 dim 1 : vector<8x128xf32>, i32 -> vector<8x128xf32>
    %282 = arith.addf %280, %281 : vector<8x128xf32>
    %cst_93 = arith.constant 5.000000e-01 : f32
    %283 = vector.broadcast %cst_93 : f32 to vector<8x128xf32>
    %284 = arith.subf %282, %283 : vector<8x128xf32>
    %c4_i32_94 = arith.constant 4 : i32
    %285 = tpu.dynamic_rotate %273 by %c4_i32_94 dim 1 : vector<8x128xf32>, i32 -> vector<8x128xf32>
    %c124_i32_95 = arith.constant 124 : i32
    %286 = tpu.dynamic_rotate %273 by %c124_i32_95 dim 1 : vector<8x128xf32>, i32 -> vector<8x128xf32>
    %287 = arith.addf %285, %286 : vector<8x128xf32>
    %cst_96 = arith.constant 5.000000e-01 : f32
    %288 = vector.broadcast %cst_96 : f32 to vector<8x128xf32>
    %289 = arith.subf %287, %288 : vector<8x128xf32>
    %290 = arith.mulf %289, %231 : vector<8x128xf32>
    %291 = arith.mulf %273, %279 : vector<8x128xf32>
    %292 = arith.addf %290, %291 : vector<8x128xf32>
    %293 = math.tanh %292 : vector<8x128xf32>
    %294 = arith.mulf %284, %293 : vector<8x128xf32>
    %c0_97 = arith.constant 0 : index
    %c0_98 = arith.constant 0 : index
    %c0_99 = arith.constant 0 : index
    %295 = vector.load %arg6[%c0_97, %c0_98, %c0_99] : memref<4x8x128xf32, #tpu.memory_space<vmem>>, vector<1x8x128xf32>
    %296 = vector.shape_cast %295 : vector<1x8x128xf32> to vector<8x128xf32>
    %297 = vector.shape_cast %294 : vector<8x128xf32> to vector<1x8x128xf32>
    tpu.vector_store %arg6[%c0_97, %c0_98, %c0_99], %297 {strides = array<i32>} : memref<4x8x128xf32, #tpu.memory_space<vmem>>, vector<1x8x128xf32>,
    %c40 = arith.constant 40 : index
    %c0_100 = arith.constant 0 : index
    %298 = vector.load %arg7[%c40, %c0_100] : memref<64x512xf32, #tpu.memory_space<vmem>>, vector<8x512xf32>
    %299 = arith.truncf %263 : vector<8x128xf32> to vector<8x128xbf16>
    %c0_101 = arith.constant 0 : index
    %c0_102 = arith.constant 0 : index
    %300 = vector.load %arg2[%c0_101, %c0_102] : memref<128x512xbf16, #tpu.memory_space<vmem>>, vector<128x512xbf16>
    %cst_103 = arith.constant dense<0.000000e+00> : vector<8x512xf32>
    %301 = tpu.matmul %299, %300, %cst_103 {dimension_numbers = #tpu.dot_dimension_numbers<[1], [0], [0], [1], [0, 0, 1, 1], [], []>} : vector<8x128xbf16>, vector<128x512xbf16>, vector<8x512xf32> -> vector<8x512xf32>
    %302 = arith.addf %298, %301 : vector<8x512xf32>
    %303 = vector.extract_strided_slice %302 {offsets = [0, 0], sizes = [8, 128], strides = [1, 1]} : vector<8x512xf32> to vector<8x128xf32>
    %304 = arith.negf %303 : vector<8x128xf32>
    %305 = math.exp %304 : vector<8x128xf32>
    %cst_104 = arith.constant 1.000000e+00 : f32
    %306 = vector.broadcast %cst_104 : f32 to vector<8x128xf32>
    %307 = arith.addf %306, %305 : vector<8x128xf32>
    %308 = arith.divf %306, %307 : vector<8x128xf32>
    %309 = vector.extract_strided_slice %302 {offsets = [0, 256], sizes = [8, 128], strides = [1, 1]} : vector<8x512xf32> to vector<8x128xf32>
    %310 = math.tanh %309 : vector<8x128xf32>
    %311 = vector.extract_strided_slice %302 {offsets = [0, 384], sizes = [8, 128], strides = [1, 1]} : vector<8x512xf32> to vector<8x128xf32>
    %312 = arith.negf %311 : vector<8x128xf32>
    %313 = math.exp %312 : vector<8x128xf32>
    %cst_105 = arith.constant 1.000000e+00 : f32
    %314 = vector.broadcast %cst_105 : f32 to vector<8x128xf32>
    %315 = arith.addf %314, %313 : vector<8x128xf32>
    %316 = arith.divf %314, %315 : vector<8x128xf32>
    %317 = vector.extract_strided_slice %302 {offsets = [0, 128], sizes = [8, 128], strides = [1, 1]} : vector<8x512xf32> to vector<8x128xf32>
    %318 = arith.negf %317 : vector<8x128xf32>
    %319 = math.exp %318 : vector<8x128xf32>
    %cst_106 = arith.constant 1.000000e+00 : f32
    %320 = vector.broadcast %cst_106 : f32 to vector<8x128xf32>
    %321 = arith.addf %320, %319 : vector<8x128xf32>
    %322 = arith.divf %320, %321 : vector<8x128xf32>
    %323 = arith.mulf %322, %261 : vector<8x128xf32>
    %324 = arith.mulf %308, %310 : vector<8x128xf32>
    %325 = arith.addf %323, %324 : vector<8x128xf32>
    %326 = math.tanh %325 : vector<8x128xf32>
    %327 = arith.mulf %316, %326 : vector<8x128xf32>
    %328 = tpu.concatenate %327, %294 in 1 : vector<8x128xf32>, vector<8x128xf32> -> vector<8x256xf32>
    %329 = arith.truncf %328 : vector<8x256xf32> to vector<8x256xbf16>
    %c0_107 = arith.constant 0 : index
    %c0_108 = arith.constant 0 : index
    %330 = vector.load %arg4[%c0_107, %c0_108] : memref<256x128xbf16, #tpu.memory_space<vmem>>, vector<256x128xbf16>
    %cst_109 = arith.constant dense<0.000000e+00> : vector<8x128xf32>
    %331 = tpu.matmul %329, %330, %cst_109 {dimension_numbers = #tpu.dot_dimension_numbers<[1], [0], [0], [1], [0, 0, 1, 1], [], []>} : vector<8x256xbf16>, vector<256x128xbf16>, vector<8x128xf32> -> vector<8x128xf32>
    %332 = arith.addf %331, %9 : vector<8x128xf32>
    %333 = arith.negf %332 : vector<8x128xf32>
    %334 = math.exp %333 : vector<8x128xf32>
    %cst_110 = arith.constant 1.000000e+00 : f32
    %335 = vector.broadcast %cst_110 : f32 to vector<8x128xf32>
    %336 = arith.addf %335, %334 : vector<8x128xf32>
    %337 = arith.divf %335, %336 : vector<8x128xf32>
    %338 = math.tanh %332 : vector<8x128xf32>
    %c8_i32_111 = arith.constant 8 : i32
    %339 = tpu.dynamic_rotate %338 by %c8_i32_111 dim 1 : vector<8x128xf32>, i32 -> vector<8x128xf32>
    %c120_i32_112 = arith.constant 120 : i32
    %340 = tpu.dynamic_rotate %338 by %c120_i32_112 dim 1 : vector<8x128xf32>, i32 -> vector<8x128xf32>
    %341 = arith.addf %339, %340 : vector<8x128xf32>
    %cst_113 = arith.constant 0.000000e+00 : f32
    %342 = vector.broadcast %cst_113 : f32 to vector<8x128xf32>
    %343 = arith.subf %341, %342 : vector<8x128xf32>
    %c12_i32_114 = arith.constant 12 : i32
    %344 = tpu.dynamic_rotate %337 by %c12_i32_114 dim 1 : vector<8x128xf32>, i32 -> vector<8x128xf32>
    %c116_i32_115 = arith.constant 116 : i32
    %345 = tpu.dynamic_rotate %337 by %c116_i32_115 dim 1 : vector<8x128xf32>, i32 -> vector<8x128xf32>
    %346 = arith.addf %344, %345 : vector<8x128xf32>
    %cst_116 = arith.constant 5.000000e-01 : f32
    %347 = vector.broadcast %cst_116 : f32 to vector<8x128xf32>
    %348 = arith.subf %346, %347 : vector<8x128xf32>
    %c4_i32_117 = arith.constant 4 : i32
    %349 = tpu.dynamic_rotate %337 by %c4_i32_117 dim 1 : vector<8x128xf32>, i32 -> vector<8x128xf32>
    %c124_i32_118 = arith.constant 124 : i32
    %350 = tpu.dynamic_rotate %337 by %c124_i32_118 dim 1 : vector<8x128xf32>, i32 -> vector<8x128xf32>
    %351 = arith.addf %349, %350 : vector<8x128xf32>
    %cst_119 = arith.constant 5.000000e-01 : f32
    %352 = vector.broadcast %cst_119 : f32 to vector<8x128xf32>
    %353 = arith.subf %351, %352 : vector<8x128xf32>
    %354 = arith.mulf %353, %292 : vector<8x128xf32>
    %355 = arith.mulf %337, %343 : vector<8x128xf32>
    %356 = arith.addf %354, %355 : vector<8x128xf32>
    %357 = math.tanh %356 : vector<8x128xf32>
    %358 = arith.mulf %348, %357 : vector<8x128xf32>
    %c1 = arith.constant 1 : index
    %c0_120 = arith.constant 0 : index
    %c0_121 = arith.constant 0 : index
    %359 = vector.load %arg6[%c1, %c0_120, %c0_121] : memref<4x8x128xf32, #tpu.memory_space<vmem>>, vector<1x8x128xf32>
    %360 = vector.shape_cast %359 : vector<1x8x128xf32> to vector<8x128xf32>
    %361 = vector.shape_cast %358 : vector<8x128xf32> to vector<1x8x128xf32>
    tpu.vector_store %arg6[%c1, %c0_120, %c0_121], %361 {strides = array<i32>} : memref<4x8x128xf32, #tpu.memory_space<vmem>>, vector<1x8x128xf32>,
    %c48 = arith.constant 48 : index
    %c0_122 = arith.constant 0 : index
    %362 = vector.load %arg7[%c48, %c0_122] : memref<64x512xf32, #tpu.memory_space<vmem>>, vector<8x512xf32>
    %363 = arith.truncf %327 : vector<8x128xf32> to vector<8x128xbf16>
    %c0_123 = arith.constant 0 : index
    %c0_124 = arith.constant 0 : index
    %364 = vector.load %arg2[%c0_123, %c0_124] : memref<128x512xbf16, #tpu.memory_space<vmem>>, vector<128x512xbf16>
    %cst_125 = arith.constant dense<0.000000e+00> : vector<8x512xf32>
    %365 = tpu.matmul %363, %364, %cst_125 {dimension_numbers = #tpu.dot_dimension_numbers<[1], [0], [0], [1], [0, 0, 1, 1], [], []>} : vector<8x128xbf16>, vector<128x512xbf16>, vector<8x512xf32> -> vector<8x512xf32>
    %366 = arith.addf %362, %365 : vector<8x512xf32>
    %367 = vector.extract_strided_slice %366 {offsets = [0, 0], sizes = [8, 128], strides = [1, 1]} : vector<8x512xf32> to vector<8x128xf32>
    %368 = arith.negf %367 : vector<8x128xf32>
    %369 = math.exp %368 : vector<8x128xf32>
    %cst_126 = arith.constant 1.000000e+00 : f32
    %370 = vector.broadcast %cst_126 : f32 to vector<8x128xf32>
    %371 = arith.addf %370, %369 : vector<8x128xf32>
    %372 = arith.divf %370, %371 : vector<8x128xf32>
    %373 = vector.extract_strided_slice %366 {offsets = [0, 256], sizes = [8, 128], strides = [1, 1]} : vector<8x512xf32> to vector<8x128xf32>
    %374 = math.tanh %373 : vector<8x128xf32>
    %375 = vector.extract_strided_slice %366 {offsets = [0, 384], sizes = [8, 128], strides = [1, 1]} : vector<8x512xf32> to vector<8x128xf32>
    %376 = arith.negf %375 : vector<8x128xf32>
    %377 = math.exp %376 : vector<8x128xf32>
    %cst_127 = arith.constant 1.000000e+00 : f32
    %378 = vector.broadcast %cst_127 : f32 to vector<8x128xf32>
    %379 = arith.addf %378, %377 : vector<8x128xf32>
    %380 = arith.divf %378, %379 : vector<8x128xf32>
    %381 = vector.extract_strided_slice %366 {offsets = [0, 128], sizes = [8, 128], strides = [1, 1]} : vector<8x512xf32> to vector<8x128xf32>
    %382 = arith.negf %381 : vector<8x128xf32>
    %383 = math.exp %382 : vector<8x128xf32>
    %cst_128 = arith.constant 1.000000e+00 : f32
    %384 = vector.broadcast %cst_128 : f32 to vector<8x128xf32>
    %385 = arith.addf %384, %383 : vector<8x128xf32>
    %386 = arith.divf %384, %385 : vector<8x128xf32>
    %387 = arith.mulf %386, %325 : vector<8x128xf32>
    %388 = arith.mulf %372, %374 : vector<8x128xf32>
    %389 = arith.addf %387, %388 : vector<8x128xf32>
    %390 = math.tanh %389 : vector<8x128xf32>
    %391 = arith.mulf %380, %390 : vector<8x128xf32>
    %392 = tpu.concatenate %391, %358 in 1 : vector<8x128xf32>, vector<8x128xf32> -> vector<8x256xf32>
    %393 = arith.truncf %392 : vector<8x256xf32> to vector<8x256xbf16>
    %c0_129 = arith.constant 0 : index
    %c0_130 = arith.constant 0 : index
    %394 = vector.load %arg4[%c0_129, %c0_130] : memref<256x128xbf16, #tpu.memory_space<vmem>>, vector<256x128xbf16>
    %cst_131 = arith.constant dense<0.000000e+00> : vector<8x128xf32>
    %395 = tpu.matmul %393, %394, %cst_131 {dimension_numbers = #tpu.dot_dimension_numbers<[1], [0], [0], [1], [0, 0, 1, 1], [], []>} : vector<8x256xbf16>, vector<256x128xbf16>, vector<8x128xf32> -> vector<8x128xf32>
    %396 = arith.addf %395, %9 : vector<8x128xf32>
    %397 = arith.negf %396 : vector<8x128xf32>
    %398 = math.exp %397 : vector<8x128xf32>
    %cst_132 = arith.constant 1.000000e+00 : f32
    %399 = vector.broadcast %cst_132 : f32 to vector<8x128xf32>
    %400 = arith.addf %399, %398 : vector<8x128xf32>
    %401 = arith.divf %399, %400 : vector<8x128xf32>
    %402 = math.tanh %396 : vector<8x128xf32>
    %c8_i32_133 = arith.constant 8 : i32
    %403 = tpu.dynamic_rotate %402 by %c8_i32_133 dim 1 : vector<8x128xf32>, i32 -> vector<8x128xf32>
    %c120_i32_134 = arith.constant 120 : i32
    %404 = tpu.dynamic_rotate %402 by %c120_i32_134 dim 1 : vector<8x128xf32>, i32 -> vector<8x128xf32>
    %405 = arith.addf %403, %404 : vector<8x128xf32>
    %cst_135 = arith.constant 0.000000e+00 : f32
    %406 = vector.broadcast %cst_135 : f32 to vector<8x128xf32>
    %407 = arith.subf %405, %406 : vector<8x128xf32>
    %c12_i32_136 = arith.constant 12 : i32
    %408 = tpu.dynamic_rotate %401 by %c12_i32_136 dim 1 : vector<8x128xf32>, i32 -> vector<8x128xf32>
    %c116_i32_137 = arith.constant 116 : i32
    %409 = tpu.dynamic_rotate %401 by %c116_i32_137 dim 1 : vector<8x128xf32>, i32 -> vector<8x128xf32>
    %410 = arith.addf %408, %409 : vector<8x128xf32>
    %cst_138 = arith.constant 5.000000e-01 : f32
    %411 = vector.broadcast %cst_138 : f32 to vector<8x128xf32>
    %412 = arith.subf %410, %411 : vector<8x128xf32>
    %c4_i32_139 = arith.constant 4 : i32
    %413 = tpu.dynamic_rotate %401 by %c4_i32_139 dim 1 : vector<8x128xf32>, i32 -> vector<8x128xf32>
    %c124_i32_140 = arith.constant 124 : i32
    %414 = tpu.dynamic_rotate %401 by %c124_i32_140 dim 1 : vector<8x128xf32>, i32 -> vector<8x128xf32>
    %415 = arith.addf %413, %414 : vector<8x128xf32>
    %cst_141 = arith.constant 5.000000e-01 : f32
    %416 = vector.broadcast %cst_141 : f32 to vector<8x128xf32>
    %417 = arith.subf %415, %416 : vector<8x128xf32>
    %418 = arith.mulf %417, %356 : vector<8x128xf32>
    %419 = arith.mulf %401, %407 : vector<8x128xf32>
    %420 = arith.addf %418, %419 : vector<8x128xf32>
    %421 = math.tanh %420 : vector<8x128xf32>
    %422 = arith.mulf %412, %421 : vector<8x128xf32>
    %c2 = arith.constant 2 : index
    %c0_142 = arith.constant 0 : index
    %c0_143 = arith.constant 0 : index
    %423 = vector.load %arg6[%c2, %c0_142, %c0_143] : memref<4x8x128xf32, #tpu.memory_space<vmem>>, vector<1x8x128xf32>
    %424 = vector.shape_cast %423 : vector<1x8x128xf32> to vector<8x128xf32>
    %425 = vector.shape_cast %422 : vector<8x128xf32> to vector<1x8x128xf32>
    tpu.vector_store %arg6[%c2, %c0_142, %c0_143], %425 {strides = array<i32>} : memref<4x8x128xf32, #tpu.memory_space<vmem>>, vector<1x8x128xf32>,
    %c56 = arith.constant 56 : index
    %c0_144 = arith.constant 0 : index
    %426 = vector.load %arg7[%c56, %c0_144] : memref<64x512xf32, #tpu.memory_space<vmem>>, vector<8x512xf32>
    %427 = arith.truncf %391 : vector<8x128xf32> to vector<8x128xbf16>
    %c0_145 = arith.constant 0 : index
    %c0_146 = arith.constant 0 : index
    %428 = vector.load %arg2[%c0_145, %c0_146] : memref<128x512xbf16, #tpu.memory_space<vmem>>, vector<128x512xbf16>
    %cst_147 = arith.constant dense<0.000000e+00> : vector<8x512xf32>
    %429 = tpu.matmul %427, %428, %cst_147 {dimension_numbers = #tpu.dot_dimension_numbers<[1], [0], [0], [1], [0, 0, 1, 1], [], []>} : vector<8x128xbf16>, vector<128x512xbf16>, vector<8x512xf32> -> vector<8x512xf32>
    %430 = arith.addf %426, %429 : vector<8x512xf32>
    %431 = vector.extract_strided_slice %430 {offsets = [0, 0], sizes = [8, 128], strides = [1, 1]} : vector<8x512xf32> to vector<8x128xf32>
    %432 = arith.negf %431 : vector<8x128xf32>
    %433 = math.exp %432 : vector<8x128xf32>
    %cst_148 = arith.constant 1.000000e+00 : f32
    %434 = vector.broadcast %cst_148 : f32 to vector<8x128xf32>
    %435 = arith.addf %434, %433 : vector<8x128xf32>
    %436 = arith.divf %434, %435 : vector<8x128xf32>
    %437 = vector.extract_strided_slice %430 {offsets = [0, 256], sizes = [8, 128], strides = [1, 1]} : vector<8x512xf32> to vector<8x128xf32>
    %438 = math.tanh %437 : vector<8x128xf32>
    %439 = vector.extract_strided_slice %430 {offsets = [0, 384], sizes = [8, 128], strides = [1, 1]} : vector<8x512xf32> to vector<8x128xf32>
    %440 = arith.negf %439 : vector<8x128xf32>
    %441 = math.exp %440 : vector<8x128xf32>
    %cst_149 = arith.constant 1.000000e+00 : f32
    %442 = vector.broadcast %cst_149 : f32 to vector<8x128xf32>
    %443 = arith.addf %442, %441 : vector<8x128xf32>
    %444 = arith.divf %442, %443 : vector<8x128xf32>
    %445 = vector.extract_strided_slice %430 {offsets = [0, 128], sizes = [8, 128], strides = [1, 1]} : vector<8x512xf32> to vector<8x128xf32>
    %446 = arith.negf %445 : vector<8x128xf32>
    %447 = math.exp %446 : vector<8x128xf32>
    %cst_150 = arith.constant 1.000000e+00 : f32
    %448 = vector.broadcast %cst_150 : f32 to vector<8x128xf32>
    %449 = arith.addf %448, %447 : vector<8x128xf32>
    %450 = arith.divf %448, %449 : vector<8x128xf32>
    %451 = arith.mulf %450, %389 : vector<8x128xf32>
    %452 = arith.mulf %436, %438 : vector<8x128xf32>
    %453 = arith.addf %451, %452 : vector<8x128xf32>
    %454 = math.tanh %453 : vector<8x128xf32>
    %455 = arith.mulf %444, %454 : vector<8x128xf32>
    %456 = tpu.concatenate %455, %422 in 1 : vector<8x128xf32>, vector<8x128xf32> -> vector<8x256xf32>
    %457 = arith.truncf %456 : vector<8x256xf32> to vector<8x256xbf16>
    %c0_151 = arith.constant 0 : index
    %c0_152 = arith.constant 0 : index
    %458 = vector.load %arg4[%c0_151, %c0_152] : memref<256x128xbf16, #tpu.memory_space<vmem>>, vector<256x128xbf16>
    %cst_153 = arith.constant dense<0.000000e+00> : vector<8x128xf32>
    %459 = tpu.matmul %457, %458, %cst_153 {dimension_numbers = #tpu.dot_dimension_numbers<[1], [0], [0], [1], [0, 0, 1, 1], [], []>} : vector<8x256xbf16>, vector<256x128xbf16>, vector<8x128xf32> -> vector<8x128xf32>
    %460 = arith.addf %459, %9 : vector<8x128xf32>
    %461 = arith.negf %460 : vector<8x128xf32>
    %462 = math.exp %461 : vector<8x128xf32>
    %cst_154 = arith.constant 1.000000e+00 : f32
    %463 = vector.broadcast %cst_154 : f32 to vector<8x128xf32>
    %464 = arith.addf %463, %462 : vector<8x128xf32>
    %465 = arith.divf %463, %464 : vector<8x128xf32>
    %466 = math.tanh %460 : vector<8x128xf32>
    %c8_i32_155 = arith.constant 8 : i32
    %467 = tpu.dynamic_rotate %466 by %c8_i32_155 dim 1 : vector<8x128xf32>, i32 -> vector<8x128xf32>
    %c120_i32_156 = arith.constant 120 : i32
    %468 = tpu.dynamic_rotate %466 by %c120_i32_156 dim 1 : vector<8x128xf32>, i32 -> vector<8x128xf32>
    %469 = arith.addf %467, %468 : vector<8x128xf32>
    %cst_157 = arith.constant 0.000000e+00 : f32
    %470 = vector.broadcast %cst_157 : f32 to vector<8x128xf32>
    %471 = arith.subf %469, %470 : vector<8x128xf32>
    %c12_i32_158 = arith.constant 12 : i32
    %472 = tpu.dynamic_rotate %465 by %c12_i32_158 dim 1 : vector<8x128xf32>, i32 -> vector<8x128xf32>
    %c116_i32_159 = arith.constant 116 : i32
    %473 = tpu.dynamic_rotate %465 by %c116_i32_159 dim 1 : vector<8x128xf32>, i32 -> vector<8x128xf32>
    %474 = arith.addf %472, %473 : vector<8x128xf32>
    %cst_160 = arith.constant 5.000000e-01 : f32
    %475 = vector.broadcast %cst_160 : f32 to vector<8x128xf32>
    %476 = arith.subf %474, %475 : vector<8x128xf32>
    %c4_i32_161 = arith.constant 4 : i32
    %477 = tpu.dynamic_rotate %465 by %c4_i32_161 dim 1 : vector<8x128xf32>, i32 -> vector<8x128xf32>
    %c124_i32_162 = arith.constant 124 : i32
    %478 = tpu.dynamic_rotate %465 by %c124_i32_162 dim 1 : vector<8x128xf32>, i32 -> vector<8x128xf32>
    %479 = arith.addf %477, %478 : vector<8x128xf32>
    %cst_163 = arith.constant 5.000000e-01 : f32
    %480 = vector.broadcast %cst_163 : f32 to vector<8x128xf32>
    %481 = arith.subf %479, %480 : vector<8x128xf32>
    %482 = arith.mulf %481, %420 : vector<8x128xf32>
    %483 = arith.mulf %465, %471 : vector<8x128xf32>
    %484 = arith.addf %482, %483 : vector<8x128xf32>
    %485 = math.tanh %484 : vector<8x128xf32>
    %486 = arith.mulf %476, %485 : vector<8x128xf32>
    %c3 = arith.constant 3 : index
    %c0_164 = arith.constant 0 : index
    %c0_165 = arith.constant 0 : index
    %487 = vector.load %arg6[%c3, %c0_164, %c0_165] : memref<4x8x128xf32, #tpu.memory_space<vmem>>, vector<1x8x128xf32>
    %488 = vector.shape_cast %487 : vector<1x8x128xf32> to vector<8x128xf32>
    %489 = vector.shape_cast %486 : vector<8x128xf32> to vector<1x8x128xf32>
    tpu.vector_store %arg6[%c3, %c0_164, %c0_165], %489 {strides = array<i32>} : memref<4x8x128xf32, #tpu.memory_space<vmem>>, vector<1x8x128xf32>,
    return
  }
}

</mosaic_0001>

<llo_original>
// kernel: mann_forward.1
$region0: #{mann_forward.1}
  #allocation0 [shape = 'u32[]', space=smem, size = 0x4, offset = 0x4, fixed_abs, tag = 'smem constant byte address 0x4 - core index']
  #allocation1 [shape = 'u32[144,128]{1,0:T(1,128)}', space=vmem, size = 0x12000, scoped, tag = 'internal scratch']
  #allocation2 [shape = 'f32[64,512]{1,0:T(8,128)}', space=vmem, size = 0x20000, scoped, tag = 'scratch operand']
  %s0 = inlined_call_operand.vmem [shape: bf16[64,20], index: 0, kind: input, shape index: {}]
  %s1 = inlined_call_operand.vmem [shape: bf16[20,512], index: 1, kind: input, shape index: {}]
  %s2 = inlined_call_operand.hbm [shape: bf16[128,512], index: 2, kind: input, shape index: {}]
  %s3 = inlined_call_operand.vmem [shape: f32[1,512], index: 3, kind: input, shape index: {}]
  %s4 = inlined_call_operand.hbm [shape: bf16[256,128], index: 4, kind: input, shape index: {}]
  %s5 = inlined_call_operand.vmem [shape: f32[1,128], index: 5, kind: input, shape index: {}]
  %s6 = inlined_call_operand.vmem [shape: f32[4,8,128], index: 6, kind: output, shape index: {}]
  %s7 = sld [smem:[#allocation0]]
  $region42: #{mann_forward.1} parent=0
    _
  %s9 = ssub.s32 1, %s7
  %s10 = scalar_select 0, %s9, %s7
  $region1: #{mann_forward.1} parent=0
    #allocation3 [shape = 'u8[131072]{0}', space=vmem, size = 0x20000, scoped, tag = 'input window, operand 2, single buffered']
    #allocation4 [shape = 's32[1]{0}', space=sflag, size = 0x4, scoped, tag = 'scoped memory for mann_forward.1']
    #allocation5 [shape = 'u8[65536]{0}', space=vmem, size = 0x10000, scoped, tag = 'input window, operand 4, single buffered']
    #allocation6 [shape = 's32[1]{0}', space=sflag, size = 0x4, scoped, tag = 'scoped memory for mann_forward.1']
    %11 = vsyncpa [#allocation4], 0
    %12 = vsyncpa [#allocation6], 0
    // Predicated region
    $region2: #{mann_forward.1} parent=1 // pred_check
      _
    $region3: #{mann_forward.1} parent=1 // pred_check_branch
      %14 = sbr.rel (0) target = $region5
    $region4: #{mann_forward.1} parent=1 // pred_region
      _
    $region5: #{mann_forward.1} parent=1 // pred_fallthru
      _
    // Predicated region
    $region6: #{mann_forward.1} parent=1 // pred_check
      _
    $region7: #{mann_forward.1} parent=1 // pred_check_branch
      %16 = sbr.rel (0) target = $region9
    $region8: #{mann_forward.1} parent=1 // pred_region
      _
    $region9: #{mann_forward.1} parent=1 // pred_fallthru
      _
    // Predicated region
    $region10: #{mann_forward.1} parent=1 // pred_check
      _
    $region11: #{mann_forward.1} parent=1 // pred_check_branch
      %18 = sbr.rel (0) target = $region13
    $region12: #{mann_forward.1} parent=1 // pred_region
      %s20 = ssub.s32 4096, 4096
      %21 = vsyncadd [#allocation4], %s20
      %s22 = sshll.u32 [#allocation3], 4
      %s23 = int_to_ptr.vmem [resolvable:$true] %s22
      %28 = dma.hbm_to_vmem [thread:$0]  %s2, 4096, %s23, [#allocation4], 256, 256, 16
    $region13: #{mann_forward.1} parent=1 // pred_fallthru
      _
    // Predicated region
    $region14: #{mann_forward.1} parent=1 // pred_check
      _
    $region15: #{mann_forward.1} parent=1 // pred_check_branch
      %30 = sbr.rel (0) target = $region17
    $region16: #{mann_forward.1} parent=1 // pred_region
      _
    $region17: #{mann_forward.1} parent=1 // pred_fallthru
      _
    // Predicated region
    $region18: #{mann_forward.1} parent=1 // pred_check
      _
    $region19: #{mann_forward.1} parent=1 // pred_check_branch
      %32 = sbr.rel (0) target = $region21
    $region20: #{mann_forward.1} parent=1 // pred_region
      %s34 = ssub.s32 2048, 2048
      %35 = vsyncadd [#allocation6], %s34
      %s36 = sshll.u32 [#allocation5], 4
      %s37 = int_to_ptr.vmem [resolvable:$true] %s36
      %42 = dma.hbm_to_vmem [thread:$0]  %s4, 2048, %s37, [#allocation6], 64, 64, 4
    $region21: #{mann_forward.1} parent=1 // pred_fallthru
      _
    // Predicated region
    $region22: #{mann_forward.1} parent=1 // pred_check
      _
    $region23: #{mann_forward.1} parent=1 // pred_check_branch
      %44 = sbr.rel (0) target = $region25
    $region24: #{mann_forward.1} parent=1 // pred_region
      _
    $region25: #{mann_forward.1} parent=1 // pred_fallthru
      _
    // Predicated region
    $region26: #{mann_forward.1} parent=1 // pred_check
      _
    $region27: #{mann_forward.1} parent=1 // pred_check_branch
      %46 = sbr.rel (0) target = $region29
    $region28: #{mann_forward.1} parent=1 // pred_region
      %47 = dma.done [#allocation4], 4096
    $region29: #{mann_forward.1} parent=1 // pred_fallthru
      _
    // Predicated region
    $region30: #{mann_forward.1} parent=1 // pred_check
      _
    $region31: #{mann_forward.1} parent=1 // pred_check_branch
      %49 = sbr.rel (0) target = $region33
    $region32: #{mann_forward.1} parent=1 // pred_region
      %50 = dma.done [#allocation6], 2048
    $region33: #{mann_forward.1} parent=1 // pred_fallthru
      _
    %v52 = vld [vmem:[%s0] sm:$0xf]
    %v53 = vld [vmem:[%s0 + $0x4] sm:$0xf]
    %v54 = vld [vmem:[%s0 + $0x8] sm:$0xf]
    %v55 = vld [vmem:[%s0 + $0xc] sm:$0xf]
    %v56 = vld [vmem:[%s0 + $0x10] sm:$0xf]
    %v57 = vld [vmem:[%s0 + $0x14] sm:$0xf]
    %v58 = vld [vmem:[%s0 + $0x18] sm:$0xf]
    %v59 = vld [vmem:[%s0 + $0x1c] sm:$0xf]
    %v60 = vld [vmem:[%s1] sm:$0xff]
    %v61 = vld [vmem:[%s1 + $0x8] sm:$0xff]
    %v62 = vld [vmem:[%s1 + $0x10] sm:$0xff]
    %v63 = vld [vmem:[%s1 + $0x18] sm:$0xff]
    %v64 = vld [vmem:[%s1 + $0x20] sm:$0x33]
    %v65 = vld [vmem:[%s1 + $0x28] sm:$0x33]
    %v66 = vld [vmem:[%s3] sm:$0xf]
    %v68 = vlaneseq
    %v69 = vshrl.u32 %v68, 7
    %v70 = vsub.s32 0, %v69
    %v71 = vrot.slane %v66, %v70
    %v72 = vlaneseq
    %v73 = vshrl.u32 %v72, 7
    %v74 = vsub.s32 1, %v73
    %v75 = vrot.slane %v66, %v74
    %v76 = vlaneseq
    %v77 = vshrl.u32 %v76, 7
    %v78 = vsub.s32 2, %v77
    %v79 = vrot.slane %v66, %v78
    %v80 = vlaneseq
    %v81 = vshrl.u32 %v80, 7
    %v82 = vsub.s32 3, %v81
    %v83 = vrot.slane %v66, %v82
    %v96 = vunpack.c.l.b16 %v52
    %v97 = vunpack.c.l.b16 %v53
    %v98 = vunpack.c.l.b16 %v54
    %v99 = vunpack.c.l.b16 %v55
    %v100 = vunpack.c.l.b16 %v56
    %v101 = vunpack.c.l.b16 %v57
    %v102 = vunpack.c.l.b16 %v58
    %v103 = vunpack.c.l.b16 %v59
    %v104 = vpack.c.b16 %v97, %v96
    %v105 = vpack.c.b16 %v99, %v98
    %v106 = vpack.c.b16 %v101, %v100
    %v107 = vpack.c.b16 %v103, %v102
    %v114 = vunpack.c.l.b16 %v60
    %v115 = vunpack.c.h.b16 %v60
    %v116 = vunpack.c.l.b16 %v61
    %v117 = vunpack.c.h.b16 %v61
    %v118 = vunpack.c.l.b16 %v62
    %v119 = vunpack.c.h.b16 %v62
    %v120 = vunpack.c.l.b16 %v63
    %v121 = vunpack.c.h.b16 %v63
    %v122 = vunpack.c.l.b16 %v64
    %v123 = vunpack.c.h.b16 %v64
    %v124 = vunpack.c.l.b16 %v65
    %v125 = vunpack.c.h.b16 %v65
    %v126 = vpack.c.b16 %v118, %v114
    %v127 = vpack.c.b16 %v119, %v115
    %v128 = vpack.c.b16 %v120, %v116
    %v129 = vpack.c.b16 %v121, %v117
    %v130 = vpack.c.b16 %v122, %v122
    %v131 = vpack.c.b16 %v123, %v123
    %v132 = vpack.c.b16 %v124, %v124
    %v133 = vpack.c.b16 %v125, %v125
    %vm138 = vcmask 162816
    %v140 = vsel %vm138, %v104, 0
    %v143 = vsel %vm138, %v105, 0
    %v146 = vsel %vm138, %v106, 0
    %v149 = vsel %vm138, %v107, 0
    %vm151 = vcmask 1041408
    %v153 = vsel %vm151, %v130, 0
    %v156 = vsel %vm151, %v131, 0
    %v159 = vsel %vm151, %v132, 0
    %v162 = vsel %vm151, %v133, 0
    %164 = vmatprep.subr.bf16.mxu0 %v127
    %165 = vmatpush1.bf16.msra.mxu0 %v126
    %166 = vmatprep.subr.bf16.mxu0 %v156
    %167 = vmatpush1.bf16.msra.mxu0 %v153
    %168 = vmatprep.subr.bf16.mxu0 0
    %169 = vmatpush1.bf16.msra.mxu0 0
    %170 = vmatprep.subr.bf16.mxu0 0
    %171 = vmatpush1.bf16.msra.mxu0 0
    %172 = vmatprep.subr.bf16.mxu0 0
    %173 = vmatpush1.bf16.msra.mxu0 0
    %174 = vmatprep.subr.bf16.mxu0 0
    %175 = vmatpush1.bf16.msra.mxu0 0
    %176 = vmatprep.subr.bf16.mxu0 0
    %177 = vmatpush1.bf16.msra.mxu0 0
    %178 = vmatprep.subr.bf16.mxu0 0
    %179 = vmatpush1.bf16.msra.mxu0 0
    %180 = vmatprep.subr.bf16.mxu0 0
    %181 = vmatpush1.bf16.msra.mxu0 0
    %182 = vmatprep.subr.bf16.mxu0 0
    %183 = vmatpush1.bf16.msra.mxu0 0
    %184 = vmatprep.subr.bf16.mxu0 0
    %185 = vmatpush1.bf16.msra.mxu0 0
    %186 = vmatprep.subr.bf16.mxu0 0
    %187 = vmatpush1.bf16.msra.mxu0 0
    %188 = vmatprep.subr.bf16.mxu0 0
    %189 = vmatpush1.bf16.msra.mxu0 0
    %190 = vmatprep.subr.bf16.mxu0 0
    %191 = vmatpush1.bf16.msra.mxu0 0
    %192 = vmatprep.subr.bf16.mxu0 0
    %193 = vmatpush1.bf16.msra.mxu0 0
    %194 = vmatprep.subr.bf16.mxu0 0
    %195 = vmatpush1.bf16.msra.mxu0 0
    %196 = vmatprep.mubr.bf16.mxu0 0
    %197 = vmatmul.mubr.bf16.gmra.mrb[0].mxu0 %v140
    %v198 = vpop.f32.mrb[0].mxu0
    %v199 = vadd.f32 %v71, %v198
    %v200 = vpop.f32.mrb[0].mxu0
    %v201 = vadd.f32 %v75, %v200
    %v202 = vpop.f32.mrb[0].mxu0
    %v203 = vadd.f32 %v71, %v202
    %v204 = vpop.f32.mrb[0].mxu0
    %v205 = vadd.f32 %v75, %v204
    %206 = vmatprep.mubr.bf16.mxu0 0
    %207 = vmatmul.mubr.bf16.gmra.mrb[0].mxu0 %v143
    %v208 = vpop.f32.mrb[0].mxu0
    %v209 = vadd.f32 %v71, %v208
    %v210 = vpop.f32.mrb[0].mxu0
    %v211 = vadd.f32 %v75, %v210
    %v212 = vpop.f32.mrb[0].mxu0
    %v213 = vadd.f32 %v71, %v212
    %v214 = vpop.f32.mrb[0].mxu0
    %v215 = vadd.f32 %v75, %v214
    %216 = vmatprep.mubr.bf16.mxu0 0
    %217 = vmatmul.mubr.bf16.gmra.mrb[0].mxu0 %v146
    %v218 = vpop.f32.mrb[0].mxu0
    %v219 = vadd.f32 %v71, %v218
    %v220 = vpop.f32.mrb[0].mxu0
    %v221 = vadd.f32 %v75, %v220
    %v222 = vpop.f32.mrb[0].mxu0
    %v223 = vadd.f32 %v71, %v222
    %v224 = vpop.f32.mrb[0].mxu0
    %v225 = vadd.f32 %v75, %v224
    %226 = vmatprep.mubr.bf16.mxu0 0
    %227 = vmatmul.mubr.bf16.gmra.mrb[0].mxu0 %v149
    %v228 = vpop.f32.mrb[0].mxu0
    %v229 = vadd.f32 %v71, %v228
    %v230 = vpop.f32.mrb[0].mxu0
    %v231 = vadd.f32 %v75, %v230
    %v232 = vpop.f32.mrb[0].mxu0
    %v233 = vadd.f32 %v71, %v232
    %v234 = vpop.f32.mrb[0].mxu0
    %v235 = vadd.f32 %v75, %v234
    %236 = vdwg.mxu0
    %237 = vmatprep.subr.bf16.mxu0 %v129
    %238 = vmatpush1.bf16.msra.mxu0 %v128
    %239 = vmatprep.subr.bf16.mxu0 %v162
    %240 = vmatpush1.bf16.msra.mxu0 %v159
    %241 = vmatprep.subr.bf16.mxu0 0
    %242 = vmatpush1.bf16.msra.mxu0 0
    %243 = vmatprep.subr.bf16.mxu0 0
    %244 = vmatpush1.bf16.msra.mxu0 0
    %245 = vmatprep.subr.bf16.mxu0 0
    %246 = vmatpush1.bf16.msra.mxu0 0
    %247 = vmatprep.subr.bf16.mxu0 0
    %248 = vmatpush1.bf16.msra.mxu0 0
    %249 = vmatprep.subr.bf16.mxu0 0
    %250 = vmatpush1.bf16.msra.mxu0 0
    %251 = vmatprep.subr.bf16.mxu0 0
    %252 = vmatpush1.bf16.msra.mxu0 0
    %253 = vmatprep.subr.bf16.mxu0 0
    %254 = vmatpush1.bf16.msra.mxu0 0
    %255 = vmatprep.subr.bf16.mxu0 0
    %256 = vmatpush1.bf16.msra.mxu0 0
    %257 = vmatprep.subr.bf16.mxu0 0
    %258 = vmatpush1.bf16.msra.mxu0 0
    %259 = vmatprep.subr.bf16.mxu0 0
    %260 = vmatpush1.bf16.msra.mxu0 0
    %261 = vmatprep.subr.bf16.mxu0 0
    %262 = vmatpush1.bf16.msra.mxu0 0
    %263 = vmatprep.subr.bf16.mxu0 0
    %264 = vmatpush1.bf16.msra.mxu0 0
    %265 = vmatprep.subr.bf16.mxu0 0
    %266 = vmatpush1.bf16.msra.mxu0 0
    %267 = vmatprep.subr.bf16.mxu0 0
    %268 = vmatpush1.bf16.msra.mxu0 0
    %269 = vmatprep.mubr.bf16.mxu0 0
    %270 = vmatmul.mubr.bf16.gmra.mrb[0].mxu0 %v140
    %v271 = vpop.f32.mrb[0].mxu0
    %v272 = vadd.f32 %v79, %v271
    %v273 = vpop.f32.mrb[0].mxu0
    %v274 = vadd.f32 %v83, %v273
    %v275 = vpop.f32.mrb[0].mxu0
    %v276 = vadd.f32 %v79, %v275
    %v277 = vpop.f32.mrb[0].mxu0
    %v278 = vadd.f32 %v83, %v277
    %279 = vmatprep.mubr.bf16.mxu0 0
    %280 = vmatmul.mubr.bf16.gmra.mrb[0].mxu0 %v143
    %v281 = vpop.f32.mrb[0].mxu0
    %v282 = vadd.f32 %v79, %v281
    %v283 = vpop.f32.mrb[0].mxu0
    %v284 = vadd.f32 %v83, %v283
    %v285 = vpop.f32.mrb[0].mxu0
    %v286 = vadd.f32 %v79, %v285
    %v287 = vpop.f32.mrb[0].mxu0
    %v288 = vadd.f32 %v83, %v287
    %289 = vmatprep.mubr.bf16.mxu0 0
    %290 = vmatmul.mubr.bf16.gmra.mrb[0].mxu0 %v146
    %v291 = vpop.f32.mrb[0].mxu0
    %v292 = vadd.f32 %v79, %v291
    %v293 = vpop.f32.mrb[0].mxu0
    %v294 = vadd.f32 %v83, %v293
    %v295 = vpop.f32.mrb[0].mxu0
    %v296 = vadd.f32 %v79, %v295
    %v297 = vpop.f32.mrb[0].mxu0
    %v298 = vadd.f32 %v83, %v297
    %299 = vmatprep.mubr.bf16.mxu0 0
    %300 = vmatmul.mubr.bf16.gmra.mrb[0].mxu0 %v149
    %v301 = vpop.f32.mrb[0].mxu0
    %v302 = vadd.f32 %v79, %v301
    %v303 = vpop.f32.mrb[0].mxu0
    %v304 = vadd.f32 %v83, %v303
    %v305 = vpop.f32.mrb[0].mxu0
    %v306 = vadd.f32 %v79, %v305
    %v307 = vpop.f32.mrb[0].mxu0
    %v308 = vadd.f32 %v83, %v307
    %309 = vdwg.mxu0
    %310 = vst [vmem:[#allocation2] sm:$0xff] %v199
    %311 = vst [vmem:[#allocation2 + $0x8] sm:$0xff] %v201
    %312 = vst [vmem:[#allocation2 + $0x10] sm:$0xff] %v272
    %313 = vst [vmem:[#allocation2 + $0x18] sm:$0xff] %v274
    %314 = vst [vmem:[#allocation2 + $0x20] sm:$0xff] %v203
    %315 = vst [vmem:[#allocation2 + $0x28] sm:$0xff] %v205
    %316 = vst [vmem:[#allocation2 + $0x30] sm:$0xff] %v276
    %317 = vst [vmem:[#allocation2 + $0x38] sm:$0xff] %v278
    %318 = vst [vmem:[#allocation2 + $0x40] sm:$0xff] %v209
    %319 = vst [vmem:[#allocation2 + $0x48] sm:$0xff] %v211
    %320 = vst [vmem:[#allocation2 + $0x50] sm:$0xff] %v282
    %321 = vst [vmem:[#allocation2 + $0x58] sm:$0xff] %v284
    %322 = vst [vmem:[#allocation2 + $0x60] sm:$0xff] %v213
    %323 = vst [vmem:[#allocation2 + $0x68] sm:$0xff] %v215
    %324 = vst [vmem:[#allocation2 + $0x70] sm:$0xff] %v286
    %325 = vst [vmem:[#allocation2 + $0x78] sm:$0xff] %v288
    %326 = vst [vmem:[#allocation2 + $0x80] sm:$0xff] %v219
    %327 = vst [vmem:[#allocation2 + $0x88] sm:$0xff] %v221
    %328 = vst [vmem:[#allocation2 + $0x90] sm:$0xff] %v292
    %329 = vst [vmem:[#allocation2 + $0x98] sm:$0xff] %v294
    %330 = vst [vmem:[#allocation2 + $0xa0] sm:$0xff] %v223
    %331 = vst [vmem:[#allocation2 + $0xa8] sm:$0xff] %v225
    %332 = vst [vmem:[#allocation2 + $0xb0] sm:$0xff] %v296
    %333 = vst [vmem:[#allocation2 + $0xb8] sm:$0xff] %v298
    %334 = vst [vmem:[#allocation2 + $0xc0] sm:$0xff] %v229
    %335 = vst [vmem:[#allocation2 + $0xc8] sm:$0xff] %v231
    %336 = vst [vmem:[#allocation2 + $0xd0] sm:$0xff] %v302
    %337 = vst [vmem:[#allocation2 + $0xd8] sm:$0xff] %v304
    %338 = vst [vmem:[#allocation2 + $0xe0] sm:$0xff] %v233
    %339 = vst [vmem:[#allocation2 + $0xe8] sm:$0xff] %v235
    %340 = vst [vmem:[#allocation2 + $0xf0] sm:$0xff] %v306
    %341 = vst [vmem:[#allocation2 + $0xf8] sm:$0xff] %v308
    %v342 = vld [vmem:[%s5] sm:$0x1]
    %v344 = vlaneseq
    %v345 = vshrl.u32 %v344, 7
    %v346 = vsub.s32 0, %v345
    %v347 = vrot.slane %v342, %v346
    %v349 = vld [vmem:[#allocation2] sm:$0xff]
    %v350 = vld [vmem:[#allocation2 + $0x10] sm:$0xff]
    %v351 = vld [vmem:[#allocation2 + $0x18] sm:$0xff]
    %v352 = vxor.u32 %v349, 2147483648
    %v353 = vmul.f32 %v352, 1.442695
    %v354 = vpow.pop %v353
    %v355 = vadd.f32 %v354, 1.0
    %v356 = vrcp.pop %v355
    %v357 = vmul.f32 1.0, %v356
    %v358 = vtanh.pop %v350
    %v359 = vxor.u32 %v351, 2147483648
    %v360 = vmul.f32 %v359, 1.442695
    %v361 = vpow.pop %v360
    %v362 = vadd.f32 %v361, 1.0
    %v363 = vrcp.pop %v362
    %v364 = vmul.f32 1.0, %v363
    %v365 = vmul.f32 %v357, %v358
    %v366 = vtanh.pop %v365
    %v367 = vmul.f32 %v364, %v366
    %v368 = vpack.c.bf16 %v367, %v367
    %v369 = vld [vmem:[#allocation5] sm:$0xf]
    %v370 = vld [vmem:[#allocation5 + $0x4] sm:$0xf]
    %v371 = vld [vmem:[#allocation5 + $0x8] sm:$0xf]
    %v372 = vld [vmem:[#allocation5 + $0xc] sm:$0xf]
    %v373 = vld [vmem:[#allocation5 + $0x10] sm:$0xf]
    %v374 = vld [vmem:[#allocation5 + $0x14] sm:$0xf]
    %v375 = vld [vmem:[#allocation5 + $0x18] sm:$0xf]
    %v376 = vld [vmem:[#allocation5 + $0x1c] sm:$0xf]
    %v377 = vld [vmem:[#allocation5 + $0x20] sm:$0xf]
    %v378 = vld [vmem:[#allocation5 + $0x24] sm:$0xf]
    %v379 = vld [vmem:[#allocation5 + $0x28] sm:$0xf]
    %v380 = vld [vmem:[#allocation5 + $0x2c] sm:$0xf]
    %v381 = vld [vmem:[#allocation5 + $0x30] sm:$0xf]
    %v382 = vld [vmem:[#allocation5 + $0x34] sm:$0xf]
    %v383 = vld [vmem:[#allocation5 + $0x38] sm:$0xf]
    %v384 = vld [vmem:[#allocation5 + $0x3c] sm:$0xf]
    %v401 = vunpack.c.l.b16 %v369
    %v402 = vunpack.c.l.b16 %v370
    %v403 = vunpack.c.l.b16 %v371
    %v404 = vunpack.c.l.b16 %v372
    %v405 = vunpack.c.l.b16 %v373
    %v406 = vunpack.c.l.b16 %v374
    %v407 = vunpack.c.l.b16 %v375
    %v408 = vunpack.c.l.b16 %v376
    %v409 = vunpack.c.l.b16 %v377
    %v410 = vunpack.c.l.b16 %v378
    %v411 = vunpack.c.l.b16 %v379
    %v412 = vunpack.c.l.b16 %v380
    %v413 = vunpack.c.l.b16 %v381
    %v414 = vunpack.c.l.b16 %v382
    %v415 = vunpack.c.l.b16 %v383
    %v416 = vunpack.c.l.b16 %v384
    %v417 = vpack.c.b16 %v402, %v401
    %v418 = vpack.c.b16 %v404, %v403
    %v419 = vpack.c.b16 %v406, %v405
    %v420 = vpack.c.b16 %v408, %v407
    %v421 = vpack.c.b16 %v410, %v409
    %v422 = vpack.c.b16 %v412, %v411
    %v423 = vpack.c.b16 %v414, %v413
    %v424 = vpack.c.b16 %v416, %v415
    %433 = vmatprep.subr.bf16.mxu0 0
    %434 = vmatpush1.bf16.msra.mxu0 %v417
    %435 = vmatprep.subr.bf16.mxu0 0
    %436 = vmatpush1.bf16.msra.mxu0 %v418
    %437 = vmatprep.subr.bf16.mxu0 0
    %438 = vmatpush1.bf16.msra.mxu0 %v419
    %439 = vmatprep.subr.bf16.mxu0 0
    %440 = vmatpush1.bf16.msra.mxu0 %v420
    %441 = vmatprep.subr.bf16.mxu0 0
    %442 = vmatpush1.bf16.msra.mxu0 %v421
    %443 = vmatprep.subr.bf16.mxu0 0
    %444 = vmatpush1.bf16.msra.mxu0 %v422
    %445 = vmatprep.subr.bf16.mxu0 0
    %446 = vmatpush1.bf16.msra.mxu0 %v423
    %447 = vmatprep.subr.bf16.mxu0 0
    %448 = vmatpush1.bf16.msra.mxu0 %v424
    %449 = vmatprep.subr.bf16.mxu0 0
    %450 = vmatpush1.bf16.msra.mxu0 0
    %451 = vmatprep.subr.bf16.mxu0 0
    %452 = vmatpush1.bf16.msra.mxu0 0
    %453 = vmatprep.subr.bf16.mxu0 0
    %454 = vmatpush1.bf16.msra.mxu0 0
    %455 = vmatprep.subr.bf16.mxu0 0
    %456 = vmatpush1.bf16.msra.mxu0 0
    %457 = vmatprep.subr.bf16.mxu0 0
    %458 = vmatpush1.bf16.msra.mxu0 0
    %459 = vmatprep.subr.bf16.mxu0 0
    %460 = vmatpush1.bf16.msra.mxu0 0
    %461 = vmatprep.subr.bf16.mxu0 0
    %462 = vmatpush1.bf16.msra.mxu0 0
    %463 = vmatprep.subr.bf16.mxu0 0
    %464 = vmatpush1.bf16.msra.mxu0 0
    %465 = vmatprep.mubr.bf16.mxu0 0
    %466 = vmatmul.mubr.bf16.gmra.mrb[0].mxu0 %v368
    %v467 = vpop.f32.mrb[0].mxu0
    %v468 = vadd.f32 %v347, %v467
    %v469 = vpop.f32.mrb[0].mxu0
    %v470 = vpop.f32.mrb[0].mxu0
    %v471 = vpop.f32.mrb[0].mxu0
    %472 = vdwg.mxu0
    %v473 = vxor.u32 %v468, 2147483648
    %v474 = vmul.f32 %v473, 1.442695
    %v475 = vpow.pop %v474
    %v476 = vadd.f32 %v475, 1.0
    %v477 = vrcp.pop %v476
    %v478 = vmul.f32 1.0, %v477
    %v479 = vtanh.pop %v468
    %480 = vrot.lane.b32.xlu0 %v479, 8
    %v481 = vpop.permute.xlu0 %480
    %482 = vrot.lane.b32.xlu0 %v479, 120
    %v483 = vpop.permute.xlu0 %482
    %v484 = vadd.f32 %v481, %v483
    %485 = vrot.lane.b32.xlu0 %v478, 12
    %v486 = vpop.permute.xlu0 %485
    %487 = vrot.lane.b32.xlu0 %v478, 116
    %v488 = vpop.permute.xlu0 %487
    %v489 = vadd.f32 %v486, %v488
    %v490 = vsub.f32 %v489, 0.5
    %v491 = vmul.f32 %v478, %v484
    %v492 = vtanh.pop %v491
    %v493 = vmul.f32 %v490, %v492
    %v494 = vld [vmem:[#allocation2 + $0x20] sm:$0xff]
    %v495 = vld [vmem:[#allocation2 + $0x28] sm:$0xff]
    %v496 = vld [vmem:[#allocation2 + $0x30] sm:$0xff]
    %v497 = vld [vmem:[#allocation2 + $0x38] sm:$0xff]
    %v498 = vld [vmem:[#allocation3] sm:$0xff]
    %v499 = vld [vmem:[#allocation3 + $0x8] sm:$0xff]
    %v500 = vld [vmem:[#allocation3 + $0x10] sm:$0xff]
    %v501 = vld [vmem:[#allocation3 + $0x18] sm:$0xff]
    %v502 = vld [vmem:[#allocation3 + $0x20] sm:$0xff]
    %v503 = vld [vmem:[#allocation3 + $0x28] sm:$0xff]
    %v504 = vld [vmem:[#allocation3 + $0x30] sm:$0xff]
    %v505 = vld [vmem:[#allocation3 + $0x38] sm:$0xff]
    %v506 = vld [vmem:[#allocation3 + $0x40] sm:$0xff]
    %v507 = vld [vmem:[#allocation3 + $0x48] sm:$0xff]
    %v508 = vld [vmem:[#allocation3 + $0x50] sm:$0xff]
    %v509 = vld [vmem:[#allocation3 + $0x58] sm:$0xff]
    %v510 = vld [vmem:[#allocation3 + $0x60] sm:$0xff]
    %v511 = vld [vmem:[#allocation3 + $0x68] sm:$0xff]
    %v512 = vld [vmem:[#allocation3 + $0x70] sm:$0xff]
    %v513 = vld [vmem:[#allocation3 + $0x78] sm:$0xff]
    %v514 = vld [vmem:[#allocation3 + $0x80] sm:$0xff]
    %v515 = vld [vmem:[#allocation3 + $0x88] sm:$0xff]
    %v516 = vld [vmem:[#allocation3 + $0x90] sm:$0xff]
    %v517 = vld [vmem:[#allocation3 + $0x98] sm:$0xff]
    %v518 = vld [vmem:[#allocation3 + $0xa0] sm:$0xff]
    %v519 = vld [vmem:[#allocation3 + $0xa8] sm:$0xff]
    %v520 = vld [vmem:[#allocation3 + $0xb0] sm:$0xff]
    %v521 = vld [vmem:[#allocation3 + $0xb8] sm:$0xff]
    %v522 = vld [vmem:[#allocation3 + $0xc0] sm:$0xff]
    %v523 = vld [vmem:[#allocation3 + $0xc8] sm:$0xff]
    %v524 = vld [vmem:[#allocation3 + $0xd0] sm:$0xff]
    %v525 = vld [vmem:[#allocation3 + $0xd8] sm:$0xff]
    %v526 = vld [vmem:[#allocation3 + $0xe0] sm:$0xff]
    %v527 = vld [vmem:[#allocation3 + $0xe8] sm:$0xff]
    %v528 = vld [vmem:[#allocation3 + $0xf0] sm:$0xff]
    %v529 = vld [vmem:[#allocation3 + $0xf8] sm:$0xff]
    %v562 = vunpack.c.l.b16 %v498
    %v563 = vunpack.c.h.b16 %v498
    %v564 = vunpack.c.l.b16 %v499
    %v565 = vunpack.c.h.b16 %v499
    %v566 = vunpack.c.l.b16 %v500
    %v567 = vunpack.c.h.b16 %v500
    %v568 = vunpack.c.l.b16 %v501
    %v569 = vunpack.c.h.b16 %v501
    %v570 = vunpack.c.l.b16 %v502
    %v571 = vunpack.c.h.b16 %v502
    %v572 = vunpack.c.l.b16 %v503
    %v573 = vunpack.c.h.b16 %v503
    %v574 = vunpack.c.l.b16 %v504
    %v575 = vunpack.c.h.b16 %v504
    %v576 = vunpack.c.l.b16 %v505
    %v577 = vunpack.c.h.b16 %v505
    %v578 = vunpack.c.l.b16 %v506
    %v579 = vunpack.c.h.b16 %v506
    %v580 = vunpack.c.l.b16 %v507
    %v581 = vunpack.c.h.b16 %v507
    %v582 = vunpack.c.l.b16 %v508
    %v583 = vunpack.c.h.b16 %v508
    %v584 = vunpack.c.l.b16 %v509
    %v585 = vunpack.c.h.b16 %v509
    %v586 = vunpack.c.l.b16 %v510
    %v587 = vunpack.c.h.b16 %v510
    %v588 = vunpack.c.l.b16 %v511
    %v589 = vunpack.c.h.b16 %v511
    %v590 = vunpack.c.l.b16 %v512
    %v591 = vunpack.c.h.b16 %v512
    %v592 = vunpack.c.l.b16 %v513
    %v593 = vunpack.c.h.b16 %v513
    %v594 = vunpack.c.l.b16 %v514
    %v595 = vunpack.c.h.b16 %v514
    %v596 = vunpack.c.l.b16 %v515
    %v597 = vunpack.c.h.b16 %v515
    %v598 = vunpack.c.l.b16 %v516
    %v599 = vunpack.c.h.b16 %v516
    %v600 = vunpack.c.l.b16 %v517
    %v601 = vunpack.c.h.b16 %v517
    %v602 = vunpack.c.l.b16 %v518
    %v603 = vunpack.c.h.b16 %v518
    %v604 = vunpack.c.l.b16 %v519
    %v605 = vunpack.c.h.b16 %v519
    %v606 = vunpack.c.l.b16 %v520
    %v607 = vunpack.c.h.b16 %v520
    %v608 = vunpack.c.l.b16 %v521
    %v609 = vunpack.c.h.b16 %v521
    %v610 = vunpack.c.l.b16 %v522
    %v611 = vunpack.c.h.b16 %v522
    %v612 = vunpack.c.l.b16 %v523
    %v613 = vunpack.c.h.b16 %v523
    %v614 = vunpack.c.l.b16 %v524
    %v615 = vunpack.c.h.b16 %v524
    %v616 = vunpack.c.l.b16 %v525
    %v617 = vunpack.c.h.b16 %v525
    %v618 = vunpack.c.l.b16 %v526
    %v619 = vunpack.c.h.b16 %v526
    %v620 = vunpack.c.l.b16 %v527
    %v621 = vunpack.c.h.b16 %v527
    %v622 = vunpack.c.l.b16 %v528
    %v623 = vunpack.c.h.b16 %v528
    %v624 = vunpack.c.l.b16 %v529
    %v625 = vunpack.c.h.b16 %v529
    %v626 = vpack.c.b16 %v566, %v562
    %v627 = vpack.c.b16 %v567, %v563
    %v628 = vpack.c.b16 %v568, %v564
    %v629 = vpack.c.b16 %v569, %v565
    %v630 = vpack.c.b16 %v574, %v570
    %v631 = vpack.c.b16 %v575, %v571
    %v632 = vpack.c.b16 %v576, %v572
    %v633 = vpack.c.b16 %v577, %v573
    %v634 = vpack.c.b16 %v582, %v578
    %v635 = vpack.c.b16 %v583, %v579
    %v636 = vpack.c.b16 %v584, %v580
    %v637 = vpack.c.b16 %v585, %v581
    %v638 = vpack.c.b16 %v590, %v586
    %v639 = vpack.c.b16 %v591, %v587
    %v640 = vpack.c.b16 %v592, %v588
    %v641 = vpack.c.b16 %v593, %v589
    %v642 = vpack.c.b16 %v598, %v594
    %v643 = vpack.c.b16 %v599, %v595
    %v644 = vpack.c.b16 %v600, %v596
    %v645 = vpack.c.b16 %v601, %v597
    %v646 = vpack.c.b16 %v606, %v602
    %v647 = vpack.c.b16 %v607, %v603
    %v648 = vpack.c.b16 %v608, %v604
    %v649 = vpack.c.b16 %v609, %v605
    %v650 = vpack.c.b16 %v614, %v610
    %v651 = vpack.c.b16 %v615, %v611
    %v652 = vpack.c.b16 %v616, %v612
    %v653 = vpack.c.b16 %v617, %v613
    %v654 = vpack.c.b16 %v622, %v618
    %v655 = vpack.c.b16 %v623, %v619
    %v656 = vpack.c.b16 %v624, %v620
    %v657 = vpack.c.b16 %v625, %v621
    %690 = vmatprep.subr.bf16.mxu0 %v627
    %691 = vmatpush1.bf16.msra.mxu0 %v626
    %692 = vmatprep.subr.bf16.mxu0 %v631
    %693 = vmatpush1.bf16.msra.mxu0 %v630
    %694 = vmatprep.subr.bf16.mxu0 %v635
    %695 = vmatpush1.bf16.msra.mxu0 %v634
    %696 = vmatprep.subr.bf16.mxu0 %v639
    %697 = vmatpush1.bf16.msra.mxu0 %v638
    %698 = vmatprep.subr.bf16.mxu0 %v643
    %699 = vmatpush1.bf16.msra.mxu0 %v642
    %700 = vmatprep.subr.bf16.mxu0 %v647
    %701 = vmatpush1.bf16.msra.mxu0 %v646
    %702 = vmatprep.subr.bf16.mxu0 %v651
    %703 = vmatpush1.bf16.msra.mxu0 %v650
    %704 = vmatprep.subr.bf16.mxu0 %v655
    %705 = vmatpush1.bf16.msra.mxu0 %v654
    %706 = vmatprep.subr.bf16.mxu0 0
    %707 = vmatpush1.bf16.msra.mxu0 0
    %708 = vmatprep.subr.bf16.mxu0 0
    %709 = vmatpush1.bf16.msra.mxu0 0
    %710 = vmatprep.subr.bf16.mxu0 0
    %711 = vmatpush1.bf16.msra.mxu0 0
    %712 = vmatprep.subr.bf16.mxu0 0
    %713 = vmatpush1.bf16.msra.mxu0 0
    %714 = vmatprep.subr.bf16.mxu0 0
    %715 = vmatpush1.bf16.msra.mxu0 0
    %716 = vmatprep.subr.bf16.mxu0 0
    %717 = vmatpush1.bf16.msra.mxu0 0
    %718 = vmatprep.subr.bf16.mxu0 0
    %719 = vmatpush1.bf16.msra.mxu0 0
    %720 = vmatprep.subr.bf16.mxu0 0
    %721 = vmatpush1.bf16.msra.mxu0 0
    %722 = vmatprep.mubr.bf16.mxu0 0
    %723 = vmatmul.mubr.bf16.gmra.mrb[0].mxu0 %v368
    %v724 = vpop.f32.mrb[0].mxu0
    %v725 = vadd.f32 0.0, %v724
    %v726 = vpop.f32.mrb[0].mxu0
    %v727 = vadd.f32 0.0, %v726
    %v728 = vpop.f32.mrb[0].mxu0
    %v729 = vpop.f32.mrb[0].mxu0
    %730 = vdwg.mxu0
    %731 = vmatprep.subr.bf16.mxu0 %v629
    %732 = vmatpush1.bf16.msra.mxu0 %v628
    %733 = vmatprep.subr.bf16.mxu0 %v633
    %734 = vmatpush1.bf16.msra.mxu0 %v632
    %735 = vmatprep.subr.bf16.mxu0 %v637
    %736 = vmatpush1.bf16.msra.mxu0 %v636
    %737 = vmatprep.subr.bf16.mxu0 %v641
    %738 = vmatpush1.bf16.msra.mxu0 %v640
    %739 = vmatprep.subr.bf16.mxu0 %v645
    %740 = vmatpush1.bf16.msra.mxu0 %v644
    %741 = vmatprep.subr.bf16.mxu0 %v649
    %742 = vmatpush1.bf16.msra.mxu0 %v648
    %743 = vmatprep.subr.bf16.mxu0 %v653
    %744 = vmatpush1.bf16.msra.mxu0 %v652
    %745 = vmatprep.subr.bf16.mxu0 %v657
    %746 = vmatpush1.bf16.msra.mxu0 %v656
    %747 = vmatprep.subr.bf16.mxu0 0
    %748 = vmatpush1.bf16.msra.mxu0 0
    %749 = vmatprep.subr.bf16.mxu0 0
    %750 = vmatpush1.bf16.msra.mxu0 0
    %751 = vmatprep.subr.bf16.mxu0 0
    %752 = vmatpush1.bf16.msra.mxu0 0
    %753 = vmatprep.subr.bf16.mxu0 0
    %754 = vmatpush1.bf16.msra.mxu0 0
    %755 = vmatprep.subr.bf16.mxu0 0
    %756 = vmatpush1.bf16.msra.mxu0 0
    %757 = vmatprep.subr.bf16.mxu0 0
    %758 = vmatpush1.bf16.msra.mxu0 0
    %759 = vmatprep.subr.bf16.mxu0 0
    %760 = vmatpush1.bf16.msra.mxu0 0
    %761 = vmatprep.subr.bf16.mxu0 0
    %762 = vmatpush1.bf16.msra.mxu0 0
    %763 = vmatprep.mubr.bf16.mxu0 0
    %764 = vmatmul.mubr.bf16.gmra.mrb[0].mxu0 %v368
    %v765 = vpop.f32.mrb[0].mxu0
    %v766 = vadd.f32 0.0, %v765
    %v767 = vpop.f32.mrb[0].mxu0
    %v768 = vadd.f32 0.0, %v767
    %v769 = vpop.f32.mrb[0].mxu0
    %v770 = vpop.f32.mrb[0].mxu0
    %771 = vdwg.mxu0
    %v772 = vadd.f32 %v494, %v725
    %v773 = vadd.f32 %v495, %v727
    %v774 = vadd.f32 %v496, %v766
    %v775 = vadd.f32 %v497, %v768
    %v776 = vxor.u32 %v772, 2147483648
    %v777 = vmul.f32 %v776, 1.442695
    %v778 = vpow.pop %v777
    %v779 = vadd.f32 %v778, 1.0
    %v780 = vrcp.pop %v779
    %v781 = vmul.f32 1.0, %v780
    %v782 = vtanh.pop %v774
    %v783 = vxor.u32 %v775, 2147483648
    %v784 = vmul.f32 %v783, 1.442695
    %v785 = vpow.pop %v784
    %v786 = vadd.f32 %v785, 1.0
    %v787 = vrcp.pop %v786
    %v788 = vmul.f32 1.0, %v787
    %v789 = vxor.u32 %v773, 2147483648
    %v790 = vmul.f32 %v789, 1.442695
    %v791 = vpow.pop %v790
    %v792 = vadd.f32 %v791, 1.0
    %v793 = vrcp.pop %v792
    %v794 = vmul.f32 1.0, %v793
    %v795 = vmul.f32 %v794, %v365
    %v796 = vmul.f32 %v781, %v782
    %v797 = vadd.f32 %v795, %v796
    %v798 = vtanh.pop %v797
    %v799 = vmul.f32 %v788, %v798
    %v800 = vpack.c.bf16 %v799, %v799
    %v801 = vpack.c.bf16 %v493, %v493
    %v802 = vld [vmem:[#allocation5] sm:$0xf]
    %v803 = vld [vmem:[#allocation5 + $0x4] sm:$0xf]
    %v804 = vld [vmem:[#allocation5 + $0x8] sm:$0xf]
    %v805 = vld [vmem:[#allocation5 + $0xc] sm:$0xf]
    %v806 = vld [vmem:[#allocation5 + $0x10] sm:$0xf]
    %v807 = vld [vmem:[#allocation5 + $0x14] sm:$0xf]
    %v808 = vld [vmem:[#allocation5 + $0x18] sm:$0xf]
    %v809 = vld [vmem:[#allocation5 + $0x1c] sm:$0xf]
    %v810 = vld [vmem:[#allocation5 + $0x20] sm:$0xf]
    %v811 = vld [vmem:[#allocation5 + $0x24] sm:$0xf]
    %v812 = vld [vmem:[#allocation5 + $0x28] sm:$0xf]
    %v813 = vld [vmem:[#allocation5 + $0x2c] sm:$0xf]
    %v814 = vld [vmem:[#allocation5 + $0x30] sm:$0xf]
    %v815 = vld [vmem:[#allocation5 + $0x34] sm:$0xf]
    %v816 = vld [vmem:[#allocation5 + $0x38] sm:$0xf]
    %v817 = vld [vmem:[#allocation5 + $0x3c] sm:$0xf]
    %v818 = vld [vmem:[#allocation5 + $0x40] sm:$0xf]
    %v819 = vld [vmem:[#allocation5 + $0x44] sm:$0xf]
    %v820 = vld [vmem:[#allocation5 + $0x48] sm:$0xf]
    %v821 = vld [vmem:[#allocation5 + $0x4c] sm:$0xf]
    %v822 = vld [vmem:[#allocation5 + $0x50] sm:$0xf]
    %v823 = vld [vmem:[#allocation5 + $0x54] sm:$0xf]
    %v824 = vld [vmem:[#allocation5 + $0x58] sm:$0xf]
    %v825 = vld [vmem:[#allocation5 + $0x5c] sm:$0xf]
    %v826 = vld [vmem:[#allocation5 + $0x60] sm:$0xf]
    %v827 = vld [vmem:[#allocation5 + $0x64] sm:$0xf]
    %v828 = vld [vmem:[#allocation5 + $0x68] sm:$0xf]
    %v829 = vld [vmem:[#allocation5 + $0x6c] sm:$0xf]
    %v830 = vld [vmem:[#allocation5 + $0x70] sm:$0xf]
    %v831 = vld [vmem:[#allocation5 + $0x74] sm:$0xf]
    %v832 = vld [vmem:[#allocation5 + $0x78] sm:$0xf]
    %v833 = vld [vmem:[#allocation5 + $0x7c] sm:$0xf]
    %v866 = vunpack.c.l.b16 %v802
    %v867 = vunpack.c.l.b16 %v803
    %v868 = vunpack.c.l.b16 %v804
    %v869 = vunpack.c.l.b16 %v805
    %v870 = vunpack.c.l.b16 %v806
    %v871 = vunpack.c.l.b16 %v807
    %v872 = vunpack.c.l.b16 %v808
    %v873 = vunpack.c.l.b16 %v809
    %v874 = vunpack.c.l.b16 %v810
    %v875 = vunpack.c.l.b16 %v811
    %v876 = vunpack.c.l.b16 %v812
    %v877 = vunpack.c.l.b16 %v813
    %v878 = vunpack.c.l.b16 %v814
    %v879 = vunpack.c.l.b16 %v815
    %v880 = vunpack.c.l.b16 %v816
    %v881 = vunpack.c.l.b16 %v817
    %v882 = vunpack.c.l.b16 %v818
    %v883 = vunpack.c.l.b16 %v819
    %v884 = vunpack.c.l.b16 %v820
    %v885 = vunpack.c.l.b16 %v821
    %v886 = vunpack.c.l.b16 %v822
    %v887 = vunpack.c.l.b16 %v823
    %v888 = vunpack.c.l.b16 %v824
    %v889 = vunpack.c.l.b16 %v825
    %v890 = vunpack.c.l.b16 %v826
    %v891 = vunpack.c.l.b16 %v827
    %v892 = vunpack.c.l.b16 %v828
    %v893 = vunpack.c.l.b16 %v829
    %v894 = vunpack.c.l.b16 %v830
    %v895 = vunpack.c.l.b16 %v831
    %v896 = vunpack.c.l.b16 %v832
    %v897 = vunpack.c.l.b16 %v833
    %v898 = vpack.c.b16 %v867, %v866
    %v899 = vpack.c.b16 %v869, %v868
    %v900 = vpack.c.b16 %v871, %v870
    %v901 = vpack.c.b16 %v873, %v872
    %v902 = vpack.c.b16 %v875, %v874
    %v903 = vpack.c.b16 %v877, %v876
    %v904 = vpack.c.b16 %v879, %v878
    %v905 = vpack.c.b16 %v881, %v880
    %v906 = vpack.c.b16 %v883, %v882
    %v907 = vpack.c.b16 %v885, %v884
    %v908 = vpack.c.b16 %v887, %v886
    %v909 = vpack.c.b16 %v889, %v888
    %v910 = vpack.c.b16 %v891, %v890
    %v911 = vpack.c.b16 %v893, %v892
    %v912 = vpack.c.b16 %v895, %v894
    %v913 = vpack.c.b16 %v897, %v896
    %930 = vmatprep.subr.bf16.mxu0 0
    %931 = vmatpush1.bf16.msra.mxu0 %v898
    %932 = vmatprep.subr.bf16.mxu0 0
    %933 = vmatpush1.bf16.msra.mxu0 %v899
    %934 = vmatprep.subr.bf16.mxu0 0
    %935 = vmatpush1.bf16.msra.mxu0 %v900
    %936 = vmatprep.subr.bf16.mxu0 0
    %937 = vmatpush1.bf16.msra.mxu0 %v901
    %938 = vmatprep.subr.bf16.mxu0 0
    %939 = vmatpush1.bf16.msra.mxu0 %v902
    %940 = vmatprep.subr.bf16.mxu0 0
    %941 = vmatpush1.bf16.msra.mxu0 %v903
    %942 = vmatprep.subr.bf16.mxu0 0
    %943 = vmatpush1.bf16.msra.mxu0 %v904
    %944 = vmatprep.subr.bf16.mxu0 0
    %945 = vmatpush1.bf16.msra.mxu0 %v905
    %946 = vmatprep.subr.bf16.mxu0 0
    %947 = vmatpush1.bf16.msra.mxu0 %v906
    %948 = vmatprep.subr.bf16.mxu0 0
    %949 = vmatpush1.bf16.msra.mxu0 %v907
    %950 = vmatprep.subr.bf16.mxu0 0
    %951 = vmatpush1.bf16.msra.mxu0 %v908
    %952 = vmatprep.subr.bf16.mxu0 0
    %953 = vmatpush1.bf16.msra.mxu0 %v909
    %954 = vmatprep.subr.bf16.mxu0 0
    %955 = vmatpush1.bf16.msra.mxu0 %v910
    %956 = vmatprep.subr.bf16.mxu0 0
    %957 = vmatpush1.bf16.msra.mxu0 %v911
    %958 = vmatprep.subr.bf16.mxu0 0
    %959 = vmatpush1.bf16.msra.mxu0 %v912
    %960 = vmatprep.subr.bf16.mxu0 0
    %961 = vmatpush1.bf16.msra.mxu0 %v913
    %962 = vmatprep.mubr.bf16.mxu0 %v801
    %963 = vmatmul.mubr.bf16.gmra.mrb[0].mxu0 %v800
    %v964 = vpop.f32.mrb[0].mxu0
    %v965 = vadd.f32 %v347, %v964
    %v966 = vpop.f32.mrb[0].mxu0
    %v967 = vpop.f32.mrb[0].mxu0
    %v968 = vpop.f32.mrb[0].mxu0
    %969 = vdwg.mxu0
    %v970 = vxor.u32 %v965, 2147483648
    %v971 = vmul.f32 %v970, 1.442695
    %v972 = vpow.pop %v971
    %v973 = vadd.f32 %v972, 1.0
    %v974 = vrcp.pop %v973
    %v975 = vmul.f32 1.0, %v974
    %v976 = vtanh.pop %v965
    %977 = vrot.lane.b32.xlu0 %v976, 8
    %v978 = vpop.permute.xlu0 %977
    %979 = vrot.lane.b32.xlu0 %v976, 120
    %v980 = vpop.permute.xlu0 %979
    %v981 = vadd.f32 %v978, %v980
    %982 = vrot.lane.b32.xlu0 %v975, 12
    %v983 = vpop.permute.xlu0 %982
    %984 = vrot.lane.b32.xlu0 %v975, 116
    %v985 = vpop.permute.xlu0 %984
    %v986 = vadd.f32 %v983, %v985
    %v987 = vsub.f32 %v986, 0.5
    %988 = vrot.lane.b32.xlu0 %v975, 4
    %v989 = vpop.permute.xlu0 %988
    %990 = vrot.lane.b32.xlu0 %v975, 124
    %v991 = vpop.permute.xlu0 %990
    %v992 = vadd.f32 %v989, %v991
    %v993 = vsub.f32 %v992, 0.5
    %v994 = vmul.f32 %v993, %v491
    %v995 = vmul.f32 %v975, %v981
    %v996 = vadd.f32 %v994, %v995
    %v997 = vtanh.pop %v996
    %v998 = vmul.f32 %v987, %v997
    %v999 = vld [vmem:[#allocation2 + $0x40] sm:$0xff]
    %v1000 = vld [vmem:[#allocation2 + $0x48] sm:$0xff]
    %v1001 = vld [vmem:[#allocation2 + $0x50] sm:$0xff]
    %v1002 = vld [vmem:[#allocation2 + $0x58] sm:$0xff]
    %1003 = vmatprep.subr.bf16.mxu0 %v627
    %1004 = vmatpush1.bf16.msra.mxu0 %v626
    %1005 = vmatprep.subr.bf16.mxu0 %v631
    %1006 = vmatpush1.bf16.msra.mxu0 %v630
    %1007 = vmatprep.subr.bf16.mxu0 %v635
    %1008 = vmatpush1.bf16.msra.mxu0 %v634
    %1009 = vmatprep.subr.bf16.mxu0 %v639
    %1010 = vmatpush1.bf16.msra.mxu0 %v638
    %1011 = vmatprep.subr.bf16.mxu0 %v643
    %1012 = vmatpush1.bf16.msra.mxu0 %v642
    %1013 = vmatprep.subr.bf16.mxu0 %v647
    %1014 = vmatpush1.bf16.msra.mxu0 %v646
    %1015 = vmatprep.subr.bf16.mxu0 %v651
    %1016 = vmatpush1.bf16.msra.mxu0 %v650
    %1017 = vmatprep.subr.bf16.mxu0 %v655
    %1018 = vmatpush1.bf16.msra.mxu0 %v654
    %1019 = vmatprep.subr.bf16.mxu0 0
    %1020 = vmatpush1.bf16.msra.mxu0 0
    %1021 = vmatprep.subr.bf16.mxu0 0
    %1022 = vmatpush1.bf16.msra.mxu0 0
    %1023 = vmatprep.subr.bf16.mxu0 0
    %1024 = vmatpush1.bf16.msra.mxu0 0
    %1025 = vmatprep.subr.bf16.mxu0 0
    %1026 = vmatpush1.bf16.msra.mxu0 0
    %1027 = vmatprep.subr.bf16.mxu0 0
    %1028 = vmatpush1.bf16.msra.mxu0 0
    %1029 = vmatprep.subr.bf16.mxu0 0
    %1030 = vmatpush1.bf16.msra.mxu0 0
    %1031 = vmatprep.subr.bf16.mxu0 0
    %1032 = vmatpush1.bf16.msra.mxu0 0
    %1033 = vmatprep.subr.bf16.mxu0 0
    %1034 = vmatpush1.bf16.msra.mxu0 0
    %1035 = vmatprep.mubr.bf16.mxu0 0
    %1036 = vmatmul.mubr.bf16.gmra.mrb[0].mxu0 %v800
    %v1037 = vpop.f32.mrb[0].mxu0
    %v1038 = vadd.f32 0.0, %v1037
    %v1039 = vpop.f32.mrb[0].mxu0
    %v1040 = vadd.f32 0.0, %v1039
    %v1041 = vpop.f32.mrb[0].mxu0
    %v1042 = vpop.f32.mrb[0].mxu0
    %1043 = vdwg.mxu0
    %1044 = vmatprep.subr.bf16.mxu0 %v629
    %1045 = vmatpush1.bf16.msra.mxu0 %v628
    %1046 = vmatprep.subr.bf16.mxu0 %v633
    %1047 = vmatpush1.bf16.msra.mxu0 %v632
    %1048 = vmatprep.subr.bf16.mxu0 %v637
    %1049 = vmatpush1.bf16.msra.mxu0 %v636
    %1050 = vmatprep.subr.bf16.mxu0 %v641
    %1051 = vmatpush1.bf16.msra.mxu0 %v640
    %1052 = vmatprep.subr.bf16.mxu0 %v645
    %1053 = vmatpush1.bf16.msra.mxu0 %v644
    %1054 = vmatprep.subr.bf16.mxu0 %v649
    %1055 = vmatpush1.bf16.msra.mxu0 %v648
    %1056 = vmatprep.subr.bf16.mxu0 %v653
    %1057 = vmatpush1.bf16.msra.mxu0 %v652
    %1058 = vmatprep.subr.bf16.mxu0 %v657
    %1059 = vmatpush1.bf16.msra.mxu0 %v656
    %1060 = vmatprep.subr.bf16.mxu0 0
    %1061 = vmatpush1.bf16.msra.mxu0 0
    %1062 = vmatprep.subr.bf16.mxu0 0
    %1063 = vmatpush1.bf16.msra.mxu0 0
    %1064 = vmatprep.subr.bf16.mxu0 0
    %1065 = vmatpush1.bf16.msra.mxu0 0
    %1066 = vmatprep.subr.bf16.mxu0 0
    %1067 = vmatpush1.bf16.msra.mxu0 0
    %1068 = vmatprep.subr.bf16.mxu0 0
    %1069 = vmatpush1.bf16.msra.mxu0 0
    %1070 = vmatprep.subr.bf16.mxu0 0
    %1071 = vmatpush1.bf16.msra.mxu0 0
    %1072 = vmatprep.subr.bf16.mxu0 0
    %1073 = vmatpush1.bf16.msra.mxu0 0
    %1074 = vmatprep.subr.bf16.mxu0 0
    %1075 = vmatpush1.bf16.msra.mxu0 0
    %1076 = vmatprep.mubr.bf16.mxu0 0
    %1077 = vmatmul.mubr.bf16.gmra.mrb[0].mxu0 %v800
    %v1078 = vpop.f32.mrb[0].mxu0
    %v1079 = vadd.f32 0.0, %v1078
    %v1080 = vpop.f32.mrb[0].mxu0
    %v1081 = vadd.f32 0.0, %v1080
    %v1082 = vpop.f32.mrb[0].mxu0
    %v1083 = vpop.f32.mrb[0].mxu0
    %1084 = vdwg.mxu0
    %v1085 = vadd.f32 %v999, %v1038
    %v1086 = vadd.f32 %v1000, %v1040
    %v1087 = vadd.f32 %v1001, %v1079
    %v1088 = vadd.f32 %v1002, %v1081
    %v1089 = vxor.u32 %v1085, 2147483648
    %v1090 = vmul.f32 %v1089, 1.442695
    %v1091 = vpow.pop %v1090
    %v1092 = vadd.f32 %v1091, 1.0
    %v1093 = vrcp.pop %v1092
    %v1094 = vmul.f32 1.0, %v1093
    %v1095 = vtanh.pop %v1087
    %v1096 = vxor.u32 %v1088, 2147483648
    %v1097 = vmul.f32 %v1096, 1.442695
    %v1098 = vpow.pop %v1097
    %v1099 = vadd.f32 %v1098, 1.0
    %v1100 = vrcp.pop %v1099
    %v1101 = vmul.f32 1.0, %v1100
    %v1102 = vxor.u32 %v1086, 2147483648
    %v1103 = vmul.f32 %v1102, 1.442695
    %v1104 = vpow.pop %v1103
    %v1105 = vadd.f32 %v1104, 1.0
    %v1106 = vrcp.pop %v1105
    %v1107 = vmul.f32 1.0, %v1106
    %v1108 = vmul.f32 %v1107, %v797
    %v1109 = vmul.f32 %v1094, %v1095
    %v1110 = vadd.f32 %v1108, %v1109
    %v1111 = vtanh.pop %v1110
    %v1112 = vmul.f32 %v1101, %v1111
    %v1113 = vpack.c.bf16 %v1112, %v1112
    %v1114 = vpack.c.bf16 %v998, %v998
    %1115 = vmatprep.subr.bf16.mxu0 0
    %1116 = vmatpush1.bf16.msra.mxu0 %v898
    %1117 = vmatprep.subr.bf16.mxu0 0
    %1118 = vmatpush1.bf16.msra.mxu0 %v899
    %1119 = vmatprep.subr.bf16.mxu0 0
    %1120 = vmatpush1.bf16.msra.mxu0 %v900
    %1121 = vmatprep.subr.bf16.mxu0 0
    %1122 = vmatpush1.bf16.msra.mxu0 %v901
    %1123 = vmatprep.subr.bf16.mxu0 0
    %1124 = vmatpush1.bf16.msra.mxu0 %v902
    %1125 = vmatprep.subr.bf16.mxu0 0
    %1126 = vmatpush1.bf16.msra.mxu0 %v903
    %1127 = vmatprep.subr.bf16.mxu0 0
    %1128 = vmatpush1.bf16.msra.mxu0 %v904
    %1129 = vmatprep.subr.bf16.mxu0 0
    %1130 = vmatpush1.bf16.msra.mxu0 %v905
    %1131 = vmatprep.subr.bf16.mxu0 0
    %1132 = vmatpush1.bf16.msra.mxu0 %v906
    %1133 = vmatprep.subr.bf16.mxu0 0
    %1134 = vmatpush1.bf16.msra.mxu0 %v907
    %1135 = vmatprep.subr.bf16.mxu0 0
    %1136 = vmatpush1.bf16.msra.mxu0 %v908
    %1137 = vmatprep.subr.bf16.mxu0 0
    %1138 = vmatpush1.bf16.msra.mxu0 %v909
    %1139 = vmatprep.subr.bf16.mxu0 0
    %1140 = vmatpush1.bf16.msra.mxu0 %v910
    %1141 = vmatprep.subr.bf16.mxu0 0
    %1142 = vmatpush1.bf16.msra.mxu0 %v911
    %1143 = vmatprep.subr.bf16.mxu0 0
    %1144 = vmatpush1.bf16.msra.mxu0 %v912
    %1145 = vmatprep.subr.bf16.mxu0 0
    %1146 = vmatpush1.bf16.msra.mxu0 %v913
    %1147 = vmatprep.mubr.bf16.mxu0 %v1114
    %1148 = vmatmul.mubr.bf16.gmra.mrb[0].mxu0 %v1113
    %v1149 = vpop.f32.mrb[0].mxu0
    %v1150 = vadd.f32 %v347, %v1149
    %v1151 = vpop.f32.mrb[0].mxu0
    %v1152 = vpop.f32.mrb[0].mxu0
    %v1153 = vpop.f32.mrb[0].mxu0
    %1154 = vdwg.mxu0
    %v1155 = vxor.u32 %v1150, 2147483648
    %v1156 = vmul.f32 %v1155, 1.442695
    %v1157 = vpow.pop %v1156
    %v1158 = vadd.f32 %v1157, 1.0
    %v1159 = vrcp.pop %v1158
    %v1160 = vmul.f32 1.0, %v1159
    %v1161 = vtanh.pop %v1150
    %1162 = vrot.lane.b32.xlu0 %v1161, 8
    %v1163 = vpop.permute.xlu0 %1162
    %1164 = vrot.lane.b32.xlu0 %v1161, 120
    %v1165 = vpop.permute.xlu0 %1164
    %v1166 = vadd.f32 %v1163, %v1165
    %1167 = vrot.lane.b32.xlu0 %v1160, 12
    %v1168 = vpop.permute.xlu0 %1167
    %1169 = vrot.lane.b32.xlu0 %v1160, 116
    %v1170 = vpop.permute.xlu0 %1169
    %v1171 = vadd.f32 %v1168, %v1170
    %v1172 = vsub.f32 %v1171, 0.5
    %1173 = vrot.lane.b32.xlu0 %v1160, 4
    %v1174 = vpop.permute.xlu0 %1173
    %1175 = vrot.lane.b32.xlu0 %v1160, 124
    %v1176 = vpop.permute.xlu0 %1175
    %v1177 = vadd.f32 %v1174, %v1176
    %v1178 = vsub.f32 %v1177, 0.5
    %v1179 = vmul.f32 %v1178, %v996
    %v1180 = vmul.f32 %v1160, %v1166
    %v1181 = vadd.f32 %v1179, %v1180
    %v1182 = vtanh.pop %v1181
    %v1183 = vmul.f32 %v1172, %v1182
    %v1184 = vld [vmem:[#allocation2 + $0x60] sm:$0xff]
    %v1185 = vld [vmem:[#allocation2 + $0x68] sm:$0xff]
    %v1186 = vld [vmem:[#allocation2 + $0x70] sm:$0xff]
    %v1187 = vld [vmem:[#allocation2 + $0x78] sm:$0xff]
    %1188 = vmatprep.subr.bf16.mxu0 %v627
    %1189 = vmatpush1.bf16.msra.mxu0 %v626
    %1190 = vmatprep.subr.bf16.mxu0 %v631
    %1191 = vmatpush1.bf16.msra.mxu0 %v630
    %1192 = vmatprep.subr.bf16.mxu0 %v635
    %1193 = vmatpush1.bf16.msra.mxu0 %v634
    %1194 = vmatprep.subr.bf16.mxu0 %v639
    %1195 = vmatpush1.bf16.msra.mxu0 %v638
    %1196 = vmatprep.subr.bf16.mxu0 %v643
    %1197 = vmatpush1.bf16.msra.mxu0 %v642
    %1198 = vmatprep.subr.bf16.mxu0 %v647
    %1199 = vmatpush1.bf16.msra.mxu0 %v646
    %1200 = vmatprep.subr.bf16.mxu0 %v651
    %1201 = vmatpush1.bf16.msra.mxu0 %v650
    %1202 = vmatprep.subr.bf16.mxu0 %v655
    %1203 = vmatpush1.bf16.msra.mxu0 %v654
    %1204 = vmatprep.subr.bf16.mxu0 0
    %1205 = vmatpush1.bf16.msra.mxu0 0
    %1206 = vmatprep.subr.bf16.mxu0 0
    %1207 = vmatpush1.bf16.msra.mxu0 0
    %1208 = vmatprep.subr.bf16.mxu0 0
    %1209 = vmatpush1.bf16.msra.mxu0 0
    %1210 = vmatprep.subr.bf16.mxu0 0
    %1211 = vmatpush1.bf16.msra.mxu0 0
    %1212 = vmatprep.subr.bf16.mxu0 0
    %1213 = vmatpush1.bf16.msra.mxu0 0
    %1214 = vmatprep.subr.bf16.mxu0 0
    %1215 = vmatpush1.bf16.msra.mxu0 0
    %1216 = vmatprep.subr.bf16.mxu0 0
    %1217 = vmatpush1.bf16.msra.mxu0 0
    %1218 = vmatprep.subr.bf16.mxu0 0
    %1219 = vmatpush1.bf16.msra.mxu0 0
    %1220 = vmatprep.mubr.bf16.mxu0 0
    %1221 = vmatmul.mubr.bf16.gmra.mrb[0].mxu0 %v1113
    %v1222 = vpop.f32.mrb[0].mxu0
    %v1223 = vadd.f32 0.0, %v1222
    %v1224 = vpop.f32.mrb[0].mxu0
    %v1225 = vadd.f32 0.0, %v1224
    %v1226 = vpop.f32.mrb[0].mxu0
    %v1227 = vpop.f32.mrb[0].mxu0
    %1228 = vdwg.mxu0
    %1229 = vmatprep.subr.bf16.mxu0 %v629
    %1230 = vmatpush1.bf16.msra.mxu0 %v628
    %1231 = vmatprep.subr.bf16.mxu0 %v633
    %1232 = vmatpush1.bf16.msra.mxu0 %v632
    %1233 = vmatprep.subr.bf16.mxu0 %v637
    %1234 = vmatpush1.bf16.msra.mxu0 %v636
    %1235 = vmatprep.subr.bf16.mxu0 %v641
    %1236 = vmatpush1.bf16.msra.mxu0 %v640
    %1237 = vmatprep.subr.bf16.mxu0 %v645
    %1238 = vmatpush1.bf16.msra.mxu0 %v644
    %1239 = vmatprep.subr.bf16.mxu0 %v649
    %1240 = vmatpush1.bf16.msra.mxu0 %v648
    %1241 = vmatprep.subr.bf16.mxu0 %v653
    %1242 = vmatpush1.bf16.msra.mxu0 %v652
    %1243 = vmatprep.subr.bf16.mxu0 %v657
    %1244 = vmatpush1.bf16.msra.mxu0 %v656
    %1245 = vmatprep.subr.bf16.mxu0 0
    %1246 = vmatpush1.bf16.msra.mxu0 0
    %1247 = vmatprep.subr.bf16.mxu0 0
    %1248 = vmatpush1.bf16.msra.mxu0 0
    %1249 = vmatprep.subr.bf16.mxu0 0
    %1250 = vmatpush1.bf16.msra.mxu0 0
    %1251 = vmatprep.subr.bf16.mxu0 0
    %1252 = vmatpush1.bf16.msra.mxu0 0
    %1253 = vmatprep.subr.bf16.mxu0 0
    %1254 = vmatpush1.bf16.msra.mxu0 0
    %1255 = vmatprep.subr.bf16.mxu0 0
    %1256 = vmatpush1.bf16.msra.mxu0 0
    %1257 = vmatprep.subr.bf16.mxu0 0
    %1258 = vmatpush1.bf16.msra.mxu0 0
    %1259 = vmatprep.subr.bf16.mxu0 0
    %1260 = vmatpush1.bf16.msra.mxu0 0
    %1261 = vmatprep.mubr.bf16.mxu0 0
    %1262 = vmatmul.mubr.bf16.gmra.mrb[0].mxu0 %v1113
    %v1263 = vpop.f32.mrb[0].mxu0
    %v1264 = vadd.f32 0.0, %v1263
    %v1265 = vpop.f32.mrb[0].mxu0
    %v1266 = vadd.f32 0.0, %v1265
    %v1267 = vpop.f32.mrb[0].mxu0
    %v1268 = vpop.f32.mrb[0].mxu0
    %1269 = vdwg.mxu0
    %v1270 = vadd.f32 %v1184, %v1223
    %v1271 = vadd.f32 %v1185, %v1225
    %v1272 = vadd.f32 %v1186, %v1264
    %v1273 = vadd.f32 %v1187, %v1266
    %v1274 = vxor.u32 %v1270, 2147483648
    %v1275 = vmul.f32 %v1274, 1.442695
    %v1276 = vpow.pop %v1275
    %v1277 = vadd.f32 %v1276, 1.0
    %v1278 = vrcp.pop %v1277
    %v1279 = vmul.f32 1.0, %v1278
    %v1280 = vtanh.pop %v1272
    %v1281 = vxor.u32 %v1273, 2147483648
    %v1282 = vmul.f32 %v1281, 1.442695
    %v1283 = vpow.pop %v1282
    %v1284 = vadd.f32 %v1283, 1.0
    %v1285 = vrcp.pop %v1284
    %v1286 = vmul.f32 1.0, %v1285
    %v1287 = vxor.u32 %v1271, 2147483648
    %v1288 = vmul.f32 %v1287, 1.442695
    %v1289 = vpow.pop %v1288
    %v1290 = vadd.f32 %v1289, 1.0
    %v1291 = vrcp.pop %v1290
    %v1292 = vmul.f32 1.0, %v1291
    %v1293 = vmul.f32 %v1292, %v1110
    %v1294 = vmul.f32 %v1279, %v1280
    %v1295 = vadd.f32 %v1293, %v1294
    %v1296 = vtanh.pop %v1295
    %v1297 = vmul.f32 %v1286, %v1296
    %v1298 = vpack.c.bf16 %v1297, %v1297
    %v1299 = vpack.c.bf16 %v1183, %v1183
    %1300 = vmatprep.subr.bf16.mxu0 0
    %1301 = vmatpush1.bf16.msra.mxu0 %v898
    %1302 = vmatprep.subr.bf16.mxu0 0
    %1303 = vmatpush1.bf16.msra.mxu0 %v899
    %1304 = vmatprep.subr.bf16.mxu0 0
    %1305 = vmatpush1.bf16.msra.mxu0 %v900
    %1306 = vmatprep.subr.bf16.mxu0 0
    %1307 = vmatpush1.bf16.msra.mxu0 %v901
    %1308 = vmatprep.subr.bf16.mxu0 0
    %1309 = vmatpush1.bf16.msra.mxu0 %v902
    %1310 = vmatprep.subr.bf16.mxu0 0
    %1311 = vmatpush1.bf16.msra.mxu0 %v903
    %1312 = vmatprep.subr.bf16.mxu0 0
    %1313 = vmatpush1.bf16.msra.mxu0 %v904
    %1314 = vmatprep.subr.bf16.mxu0 0
    %1315 = vmatpush1.bf16.msra.mxu0 %v905
    %1316 = vmatprep.subr.bf16.mxu0 0
    %1317 = vmatpush1.bf16.msra.mxu0 %v906
    %1318 = vmatprep.subr.bf16.mxu0 0
    %1319 = vmatpush1.bf16.msra.mxu0 %v907
    %1320 = vmatprep.subr.bf16.mxu0 0
    %1321 = vmatpush1.bf16.msra.mxu0 %v908
    %1322 = vmatprep.subr.bf16.mxu0 0
    %1323 = vmatpush1.bf16.msra.mxu0 %v909
    %1324 = vmatprep.subr.bf16.mxu0 0
    %1325 = vmatpush1.bf16.msra.mxu0 %v910
    %1326 = vmatprep.subr.bf16.mxu0 0
    %1327 = vmatpush1.bf16.msra.mxu0 %v911
    %1328 = vmatprep.subr.bf16.mxu0 0
    %1329 = vmatpush1.bf16.msra.mxu0 %v912
    %1330 = vmatprep.subr.bf16.mxu0 0
    %1331 = vmatpush1.bf16.msra.mxu0 %v913
    %1332 = vmatprep.mubr.bf16.mxu0 %v1299
    %1333 = vmatmul.mubr.bf16.gmra.mrb[0].mxu0 %v1298
    %v1334 = vpop.f32.mrb[0].mxu0
    %v1335 = vadd.f32 %v347, %v1334
    %v1336 = vpop.f32.mrb[0].mxu0
    %v1337 = vpop.f32.mrb[0].mxu0
    %v1338 = vpop.f32.mrb[0].mxu0
    %1339 = vdwg.mxu0
    %v1340 = vxor.u32 %v1335, 2147483648
    %v1341 = vmul.f32 %v1340, 1.442695
    %v1342 = vpow.pop %v1341
    %v1343 = vadd.f32 %v1342, 1.0
    %v1344 = vrcp.pop %v1343
    %v1345 = vmul.f32 1.0, %v1344
    %v1346 = vtanh.pop %v1335
    %1347 = vrot.lane.b32.xlu0 %v1346, 8
    %v1348 = vpop.permute.xlu0 %1347
    %1349 = vrot.lane.b32.xlu0 %v1346, 120
    %v1350 = vpop.permute.xlu0 %1349
    %v1351 = vadd.f32 %v1348, %v1350
    %1352 = vrot.lane.b32.xlu0 %v1345, 12
    %v1353 = vpop.permute.xlu0 %1352
    %1354 = vrot.lane.b32.xlu0 %v1345, 116
    %v1355 = vpop.permute.xlu0 %1354
    %v1356 = vadd.f32 %v1353, %v1355
    %v1357 = vsub.f32 %v1356, 0.5
    %1358 = vrot.lane.b32.xlu0 %v1345, 4
    %v1359 = vpop.permute.xlu0 %1358
    %1360 = vrot.lane.b32.xlu0 %v1345, 124
    %v1361 = vpop.permute.xlu0 %1360
    %v1362 = vadd.f32 %v1359, %v1361
    %v1363 = vsub.f32 %v1362, 0.5
    %v1364 = vmul.f32 %v1363, %v1181
    %v1365 = vmul.f32 %v1345, %v1351
    %v1366 = vadd.f32 %v1364, %v1365
    %v1367 = vtanh.pop %v1366
    %v1368 = vmul.f32 %v1357, %v1367
    %v1369 = vld [vmem:[#allocation2 + $0x80] sm:$0xff]
    %v1370 = vld [vmem:[#allocation2 + $0x88] sm:$0xff]
    %v1371 = vld [vmem:[#allocation2 + $0x90] sm:$0xff]
    %v1372 = vld [vmem:[#allocation2 + $0x98] sm:$0xff]
    %1373 = vmatprep.subr.bf16.mxu0 %v627
    %1374 = vmatpush1.bf16.msra.mxu0 %v626
    %1375 = vmatprep.subr.bf16.mxu0 %v631
    %1376 = vmatpush1.bf16.msra.mxu0 %v630
    %1377 = vmatprep.subr.bf16.mxu0 %v635
    %1378 = vmatpush1.bf16.msra.mxu0 %v634
    %1379 = vmatprep.subr.bf16.mxu0 %v639
    %1380 = vmatpush1.bf16.msra.mxu0 %v638
    %1381 = vmatprep.subr.bf16.mxu0 %v643
    %1382 = vmatpush1.bf16.msra.mxu0 %v642
    %1383 = vmatprep.subr.bf16.mxu0 %v647
    %1384 = vmatpush1.bf16.msra.mxu0 %v646
    %1385 = vmatprep.subr.bf16.mxu0 %v651
    %1386 = vmatpush1.bf16.msra.mxu0 %v650
    %1387 = vmatprep.subr.bf16.mxu0 %v655
    %1388 = vmatpush1.bf16.msra.mxu0 %v654
    %1389 = vmatprep.subr.bf16.mxu0 0
    %1390 = vmatpush1.bf16.msra.mxu0 0
    %1391 = vmatprep.subr.bf16.mxu0 0
    %1392 = vmatpush1.bf16.msra.mxu0 0
    %1393 = vmatprep.subr.bf16.mxu0 0
    %1394 = vmatpush1.bf16.msra.mxu0 0
    %1395 = vmatprep.subr.bf16.mxu0 0
    %1396 = vmatpush1.bf16.msra.mxu0 0
    %1397 = vmatprep.subr.bf16.mxu0 0
    %1398 = vmatpush1.bf16.msra.mxu0 0
    %1399 = vmatprep.subr.bf16.mxu0 0
    %1400 = vmatpush1.bf16.msra.mxu0 0
    %1401 = vmatprep.subr.bf16.mxu0 0
    %1402 = vmatpush1.bf16.msra.mxu0 0
    %1403 = vmatprep.subr.bf16.mxu0 0
    %1404 = vmatpush1.bf16.msra.mxu0 0
    %1405 = vmatprep.mubr.bf16.mxu0 0
    %1406 = vmatmul.mubr.bf16.gmra.mrb[0].mxu0 %v1298
    %v1407 = vpop.f32.mrb[0].mxu0
    %v1408 = vadd.f32 0.0, %v1407
    %v1409 = vpop.f32.mrb[0].mxu0
    %v1410 = vadd.f32 0.0, %v1409
    %v1411 = vpop.f32.mrb[0].mxu0
    %v1412 = vpop.f32.mrb[0].mxu0
    %1413 = vdwg.mxu0
    %1414 = vmatprep.subr.bf16.mxu0 %v629
    %1415 = vmatpush1.bf16.msra.mxu0 %v628
    %1416 = vmatprep.subr.bf16.mxu0 %v633
    %1417 = vmatpush1.bf16.msra.mxu0 %v632
    %1418 = vmatprep.subr.bf16.mxu0 %v637
    %1419 = vmatpush1.bf16.msra.mxu0 %v636
    %1420 = vmatprep.subr.bf16.mxu0 %v641
    %1421 = vmatpush1.bf16.msra.mxu0 %v640
    %1422 = vmatprep.subr.bf16.mxu0 %v645
    %1423 = vmatpush1.bf16.msra.mxu0 %v644
    %1424 = vmatprep.subr.bf16.mxu0 %v649
    %1425 = vmatpush1.bf16.msra.mxu0 %v648
    %1426 = vmatprep.subr.bf16.mxu0 %v653
    %1427 = vmatpush1.bf16.msra.mxu0 %v652
    %1428 = vmatprep.subr.bf16.mxu0 %v657
    %1429 = vmatpush1.bf16.msra.mxu0 %v656
    %1430 = vmatprep.subr.bf16.mxu0 0
    %1431 = vmatpush1.bf16.msra.mxu0 0
    %1432 = vmatprep.subr.bf16.mxu0 0
    %1433 = vmatpush1.bf16.msra.mxu0 0
    %1434 = vmatprep.subr.bf16.mxu0 0
    %1435 = vmatpush1.bf16.msra.mxu0 0
    %1436 = vmatprep.subr.bf16.mxu0 0
    %1437 = vmatpush1.bf16.msra.mxu0 0
    %1438 = vmatprep.subr.bf16.mxu0 0
    %1439 = vmatpush1.bf16.msra.mxu0 0
    %1440 = vmatprep.subr.bf16.mxu0 0
    %1441 = vmatpush1.bf16.msra.mxu0 0
    %1442 = vmatprep.subr.bf16.mxu0 0
    %1443 = vmatpush1.bf16.msra.mxu0 0
    %1444 = vmatprep.subr.bf16.mxu0 0
    %1445 = vmatpush1.bf16.msra.mxu0 0
    %1446 = vmatprep.mubr.bf16.mxu0 0
    %1447 = vmatmul.mubr.bf16.gmra.mrb[0].mxu0 %v1298
    %v1448 = vpop.f32.mrb[0].mxu0
    %v1449 = vadd.f32 0.0, %v1448
    %v1450 = vpop.f32.mrb[0].mxu0
    %v1451 = vadd.f32 0.0, %v1450
    %v1452 = vpop.f32.mrb[0].mxu0
    %v1453 = vpop.f32.mrb[0].mxu0
    %1454 = vdwg.mxu0
    %v1455 = vadd.f32 %v1369, %v1408
    %v1456 = vadd.f32 %v1370, %v1410
    %v1457 = vadd.f32 %v1371, %v1449
    %v1458 = vadd.f32 %v1372, %v1451
    %v1459 = vxor.u32 %v1455, 2147483648
    %v1460 = vmul.f32 %v1459, 1.442695
    %v1461 = vpow.pop %v1460
    %v1462 = vadd.f32 %v1461, 1.0
    %v1463 = vrcp.pop %v1462
    %v1464 = vmul.f32 1.0, %v1463
    %v1465 = vtanh.pop %v1457
    %v1466 = vxor.u32 %v1458, 2147483648
    %v1467 = vmul.f32 %v1466, 1.442695
    %v1468 = vpow.pop %v1467
    %v1469 = vadd.f32 %v1468, 1.0
    %v1470 = vrcp.pop %v1469
    %v1471 = vmul.f32 1.0, %v1470
    %v1472 = vxor.u32 %v1456, 2147483648
    %v1473 = vmul.f32 %v1472, 1.442695
    %v1474 = vpow.pop %v1473
    %v1475 = vadd.f32 %v1474, 1.0
    %v1476 = vrcp.pop %v1475
    %v1477 = vmul.f32 1.0, %v1476
    %v1478 = vmul.f32 %v1477, %v1295
    %v1479 = vmul.f32 %v1464, %v1465
    %v1480 = vadd.f32 %v1478, %v1479
    %v1481 = vtanh.pop %v1480
    %v1482 = vmul.f32 %v1471, %v1481
    %v1483 = vpack.c.bf16 %v1482, %v1482
    %v1484 = vpack.c.bf16 %v1368, %v1368
    %1485 = vmatprep.subr.bf16.mxu0 0
    %1486 = vmatpush1.bf16.msra.mxu0 %v898
    %1487 = vmatprep.subr.bf16.mxu0 0
    %1488 = vmatpush1.bf16.msra.mxu0 %v899
    %1489 = vmatprep.subr.bf16.mxu0 0
    %1490 = vmatpush1.bf16.msra.mxu0 %v900
    %1491 = vmatprep.subr.bf16.mxu0 0
    %1492 = vmatpush1.bf16.msra.mxu0 %v901
    %1493 = vmatprep.subr.bf16.mxu0 0
    %1494 = vmatpush1.bf16.msra.mxu0 %v902
    %1495 = vmatprep.subr.bf16.mxu0 0
    %1496 = vmatpush1.bf16.msra.mxu0 %v903
    %1497 = vmatprep.subr.bf16.mxu0 0
    %1498 = vmatpush1.bf16.msra.mxu0 %v904
    %1499 = vmatprep.subr.bf16.mxu0 0
    %1500 = vmatpush1.bf16.msra.mxu0 %v905
    %1501 = vmatprep.subr.bf16.mxu0 0
    %1502 = vmatpush1.bf16.msra.mxu0 %v906
    %1503 = vmatprep.subr.bf16.mxu0 0
    %1504 = vmatpush1.bf16.msra.mxu0 %v907
    %1505 = vmatprep.subr.bf16.mxu0 0
    %1506 = vmatpush1.bf16.msra.mxu0 %v908
    %1507 = vmatprep.subr.bf16.mxu0 0
    %1508 = vmatpush1.bf16.msra.mxu0 %v909
    %1509 = vmatprep.subr.bf16.mxu0 0
    %1510 = vmatpush1.bf16.msra.mxu0 %v910
    %1511 = vmatprep.subr.bf16.mxu0 0
    %1512 = vmatpush1.bf16.msra.mxu0 %v911
    %1513 = vmatprep.subr.bf16.mxu0 0
    %1514 = vmatpush1.bf16.msra.mxu0 %v912
    %1515 = vmatprep.subr.bf16.mxu0 0
    %1516 = vmatpush1.bf16.msra.mxu0 %v913
    %1517 = vmatprep.mubr.bf16.mxu0 %v1484
    %1518 = vmatmul.mubr.bf16.gmra.mrb[0].mxu0 %v1483
    %v1519 = vpop.f32.mrb[0].mxu0
    %v1520 = vadd.f32 %v347, %v1519
    %v1521 = vpop.f32.mrb[0].mxu0
    %v1522 = vpop.f32.mrb[0].mxu0
    %v1523 = vpop.f32.mrb[0].mxu0
    %1524 = vdwg.mxu0
    %v1525 = vxor.u32 %v1520, 2147483648
    %v1526 = vmul.f32 %v1525, 1.442695
    %v1527 = vpow.pop %v1526
    %v1528 = vadd.f32 %v1527, 1.0
    %v1529 = vrcp.pop %v1528
    %v1530 = vmul.f32 1.0, %v1529
    %v1531 = vtanh.pop %v1520
    %1532 = vrot.lane.b32.xlu0 %v1531, 8
    %v1533 = vpop.permute.xlu0 %1532
    %1534 = vrot.lane.b32.xlu0 %v1531, 120
    %v1535 = vpop.permute.xlu0 %1534
    %v1536 = vadd.f32 %v1533, %v1535
    %1537 = vrot.lane.b32.xlu0 %v1530, 12
    %v1538 = vpop.permute.xlu0 %1537
    %1539 = vrot.lane.b32.xlu0 %v1530, 116
    %v1540 = vpop.permute.xlu0 %1539
    %v1541 = vadd.f32 %v1538, %v1540
    %v1542 = vsub.f32 %v1541, 0.5
    %1543 = vrot.lane.b32.xlu0 %v1530, 4
    %v1544 = vpop.permute.xlu0 %1543
    %1545 = vrot.lane.b32.xlu0 %v1530, 124
    %v1546 = vpop.permute.xlu0 %1545
    %v1547 = vadd.f32 %v1544, %v1546
    %v1548 = vsub.f32 %v1547, 0.5
    %v1549 = vmul.f32 %v1548, %v1366
    %v1550 = vmul.f32 %v1530, %v1536
    %v1551 = vadd.f32 %v1549, %v1550
    %v1552 = vtanh.pop %v1551
    %v1553 = vmul.f32 %v1542, %v1552
    %1554 = vst [vmem:[%s6] sm:$0xff] %v1553
    %v1555 = vld [vmem:[#allocation2 + $0xa0] sm:$0xff]
    %v1556 = vld [vmem:[#allocation2 + $0xa8] sm:$0xff]
    %v1557 = vld [vmem:[#allocation2 + $0xb0] sm:$0xff]
    %v1558 = vld [vmem:[#allocation2 + $0xb8] sm:$0xff]
    %v1559 = vld [vmem:[#allocation3] sm:$0xff]
    %v1560 = vld [vmem:[#allocation3 + $0x8] sm:$0xff]
    %v1561 = vld [vmem:[#allocation3 + $0x10] sm:$0xff]
    %v1562 = vld [vmem:[#allocation3 + $0x18] sm:$0xff]
    %v1563 = vld [vmem:[#allocation3 + $0x20] sm:$0xff]
    %v1564 = vld [vmem:[#allocation3 + $0x28] sm:$0xff]
    %v1565 = vld [vmem:[#allocation3 + $0x30] sm:$0xff]
    %v1566 = vld [vmem:[#allocation3 + $0x38] sm:$0xff]
    %v1567 = vld [vmem:[#allocation3 + $0x40] sm:$0xff]
    %v1568 = vld [vmem:[#allocation3 + $0x48] sm:$0xff]
    %v1569 = vld [vmem:[#allocation3 + $0x50] sm:$0xff]
    %v1570 = vld [vmem:[#allocation3 + $0x58] sm:$0xff]
    %v1571 = vld [vmem:[#allocation3 + $0x60] sm:$0xff]
    %v1572 = vld [vmem:[#allocation3 + $0x68] sm:$0xff]
    %v1573 = vld [vmem:[#allocation3 + $0x70] sm:$0xff]
    %v1574 = vld [vmem:[#allocation3 + $0x78] sm:$0xff]
    %v1575 = vld [vmem:[#allocation3 + $0x80] sm:$0xff]
    %v1576 = vld [vmem:[#allocation3 + $0x88] sm:$0xff]
    %v1577 = vld [vmem:[#allocation3 + $0x90] sm:$0xff]
    %v1578 = vld [vmem:[#allocation3 + $0x98] sm:$0xff]
    %v1579 = vld [vmem:[#allocation3 + $0xa0] sm:$0xff]
    %v1580 = vld [vmem:[#allocation3 + $0xa8] sm:$0xff]
    %v1581 = vld [vmem:[#allocation3 + $0xb0] sm:$0xff]
    %v1582 = vld [vmem:[#allocation3 + $0xb8] sm:$0xff]
    %v1583 = vld [vmem:[#allocation3 + $0xc0] sm:$0xff]
    %v1584 = vld [vmem:[#allocation3 + $0xc8] sm:$0xff]
    %v1585 = vld [vmem:[#allocation3 + $0xd0] sm:$0xff]
    %v1586 = vld [vmem:[#allocation3 + $0xd8] sm:$0xff]
    %v1587 = vld [vmem:[#allocation3 + $0xe0] sm:$0xff]
    %v1588 = vld [vmem:[#allocation3 + $0xe8] sm:$0xff]
    %v1589 = vld [vmem:[#allocation3 + $0xf0] sm:$0xff]
    %v1590 = vld [vmem:[#allocation3 + $0xf8] sm:$0xff]
    %v1623 = vunpack.c.l.b16 %v1559
    %v1624 = vunpack.c.h.b16 %v1559
    %v1625 = vunpack.c.l.b16 %v1560
    %v1626 = vunpack.c.h.b16 %v1560
    %v1627 = vunpack.c.l.b16 %v1561
    %v1628 = vunpack.c.h.b16 %v1561
    %v1629 = vunpack.c.l.b16 %v1562
    %v1630 = vunpack.c.h.b16 %v1562
    %v1631 = vunpack.c.l.b16 %v1563
    %v1632 = vunpack.c.h.b16 %v1563
    %v1633 = vunpack.c.l.b16 %v1564
    %v1634 = vunpack.c.h.b16 %v1564
    %v1635 = vunpack.c.l.b16 %v1565
    %v1636 = vunpack.c.h.b16 %v1565
    %v1637 = vunpack.c.l.b16 %v1566
    %v1638 = vunpack.c.h.b16 %v1566
    %v1639 = vunpack.c.l.b16 %v1567
    %v1640 = vunpack.c.h.b16 %v1567
    %v1641 = vunpack.c.l.b16 %v1568
    %v1642 = vunpack.c.h.b16 %v1568
    %v1643 = vunpack.c.l.b16 %v1569
    %v1644 = vunpack.c.h.b16 %v1569
    %v1645 = vunpack.c.l.b16 %v1570
    %v1646 = vunpack.c.h.b16 %v1570
    %v1647 = vunpack.c.l.b16 %v1571
    %v1648 = vunpack.c.h.b16 %v1571
    %v1649 = vunpack.c.l.b16 %v1572
    %v1650 = vunpack.c.h.b16 %v1572
    %v1651 = vunpack.c.l.b16 %v1573
    %v1652 = vunpack.c.h.b16 %v1573
    %v1653 = vunpack.c.l.b16 %v1574
    %v1654 = vunpack.c.h.b16 %v1574
    %v1655 = vunpack.c.l.b16 %v1575
    %v1656 = vunpack.c.h.b16 %v1575
    %v1657 = vunpack.c.l.b16 %v1576
    %v1658 = vunpack.c.h.b16 %v1576
    %v1659 = vunpack.c.l.b16 %v1577
    %v1660 = vunpack.c.h.b16 %v1577
    %v1661 = vunpack.c.l.b16 %v1578
    %v1662 = vunpack.c.h.b16 %v1578
    %v1663 = vunpack.c.l.b16 %v1579
    %v1664 = vunpack.c.h.b16 %v1579
    %v1665 = vunpack.c.l.b16 %v1580
    %v1666 = vunpack.c.h.b16 %v1580
    %v1667 = vunpack.c.l.b16 %v1581
    %v1668 = vunpack.c.h.b16 %v1581
    %v1669 = vunpack.c.l.b16 %v1582
    %v1670 = vunpack.c.h.b16 %v1582
    %v1671 = vunpack.c.l.b16 %v1583
    %v1672 = vunpack.c.h.b16 %v1583
    %v1673 = vunpack.c.l.b16 %v1584
    %v1674 = vunpack.c.h.b16 %v1584
    %v1675 = vunpack.c.l.b16 %v1585
    %v1676 = vunpack.c.h.b16 %v1585
    %v1677 = vunpack.c.l.b16 %v1586
    %v1678 = vunpack.c.h.b16 %v1586
    %v1679 = vunpack.c.l.b16 %v1587
    %v1680 = vunpack.c.h.b16 %v1587
    %v1681 = vunpack.c.l.b16 %v1588
    %v1682 = vunpack.c.h.b16 %v1588
    %v1683 = vunpack.c.l.b16 %v1589
    %v1684 = vunpack.c.h.b16 %v1589
    %v1685 = vunpack.c.l.b16 %v1590
    %v1686 = vunpack.c.h.b16 %v1590
    %v1687 = vpack.c.b16 %v1627, %v1623
    %v1688 = vpack.c.b16 %v1628, %v1624
    %v1689 = vpack.c.b16 %v1629, %v1625
    %v1690 = vpack.c.b16 %v1630, %v1626
    %v1691 = vpack.c.b16 %v1635, %v1631
    %v1692 = vpack.c.b16 %v1636, %v1632
    %v1693 = vpack.c.b16 %v1637, %v1633
    %v1694 = vpack.c.b16 %v1638, %v1634
    %v1695 = vpack.c.b16 %v1643, %v1639
    %v1696 = vpack.c.b16 %v1644, %v1640
    %v1697 = vpack.c.b16 %v1645, %v1641
    %v1698 = vpack.c.b16 %v1646, %v1642
    %v1699 = vpack.c.b16 %v1651, %v1647
    %v1700 = vpack.c.b16 %v1652, %v1648
    %v1701 = vpack.c.b16 %v1653, %v1649
    %v1702 = vpack.c.b16 %v1654, %v1650
    %v1703 = vpack.c.b16 %v1659, %v1655
    %v1704 = vpack.c.b16 %v1660, %v1656
    %v1705 = vpack.c.b16 %v1661, %v1657
    %v1706 = vpack.c.b16 %v1662, %v1658
    %v1707 = vpack.c.b16 %v1667, %v1663
    %v1708 = vpack.c.b16 %v1668, %v1664
    %v1709 = vpack.c.b16 %v1669, %v1665
    %v1710 = vpack.c.b16 %v1670, %v1666
    %v1711 = vpack.c.b16 %v1675, %v1671
    %v1712 = vpack.c.b16 %v1676, %v1672
    %v1713 = vpack.c.b16 %v1677, %v1673
    %v1714 = vpack.c.b16 %v1678, %v1674
    %v1715 = vpack.c.b16 %v1683, %v1679
    %v1716 = vpack.c.b16 %v1684, %v1680
    %v1717 = vpack.c.b16 %v1685, %v1681
    %v1718 = vpack.c.b16 %v1686, %v1682
    %1751 = vmatprep.subr.bf16.mxu0 %v1688
    %1752 = vmatpush1.bf16.msra.mxu0 %v1687
    %1753 = vmatprep.subr.bf16.mxu0 %v1692
    %1754 = vmatpush1.bf16.msra.mxu0 %v1691
    %1755 = vmatprep.subr.bf16.mxu0 %v1696
    %1756 = vmatpush1.bf16.msra.mxu0 %v1695
    %1757 = vmatprep.subr.bf16.mxu0 %v1700
    %1758 = vmatpush1.bf16.msra.mxu0 %v1699
    %1759 = vmatprep.subr.bf16.mxu0 %v1704
    %1760 = vmatpush1.bf16.msra.mxu0 %v1703
    %1761 = vmatprep.subr.bf16.mxu0 %v1708
    %1762 = vmatpush1.bf16.msra.mxu0 %v1707
    %1763 = vmatprep.subr.bf16.mxu0 %v1712
    %1764 = vmatpush1.bf16.msra.mxu0 %v1711
    %1765 = vmatprep.subr.bf16.mxu0 %v1716
    %1766 = vmatpush1.bf16.msra.mxu0 %v1715
    %1767 = vmatprep.subr.bf16.mxu0 0
    %1768 = vmatpush1.bf16.msra.mxu0 0
    %1769 = vmatprep.subr.bf16.mxu0 0
    %1770 = vmatpush1.bf16.msra.mxu0 0
    %1771 = vmatprep.subr.bf16.mxu0 0
    %1772 = vmatpush1.bf16.msra.mxu0 0
    %1773 = vmatprep.subr.bf16.mxu0 0
    %1774 = vmatpush1.bf16.msra.mxu0 0
    %1775 = vmatprep.subr.bf16.mxu0 0
    %1776 = vmatpush1.bf16.msra.mxu0 0
    %1777 = vmatprep.subr.bf16.mxu0 0
    %1778 = vmatpush1.bf16.msra.mxu0 0
    %1779 = vmatprep.subr.bf16.mxu0 0
    %1780 = vmatpush1.bf16.msra.mxu0 0
    %1781 = vmatprep.subr.bf16.mxu0 0
    %1782 = vmatpush1.bf16.msra.mxu0 0
    %1783 = vmatprep.mubr.bf16.mxu0 0
    %1784 = vmatmul.mubr.bf16.gmra.mrb[0].mxu0 %v1483
    %v1785 = vpop.f32.mrb[0].mxu0
    %v1786 = vadd.f32 0.0, %v1785
    %v1787 = vpop.f32.mrb[0].mxu0
    %v1788 = vadd.f32 0.0, %v1787
    %v1789 = vpop.f32.mrb[0].mxu0
    %v1790 = vpop.f32.mrb[0].mxu0
    %1791 = vdwg.mxu0
    %1792 = vmatprep.subr.bf16.mxu0 %v1690
    %1793 = vmatpush1.bf16.msra.mxu0 %v1689
    %1794 = vmatprep.subr.bf16.mxu0 %v1694
    %1795 = vmatpush1.bf16.msra.mxu0 %v1693
    %1796 = vmatprep.subr.bf16.mxu0 %v1698
    %1797 = vmatpush1.bf16.msra.mxu0 %v1697
    %1798 = vmatprep.subr.bf16.mxu0 %v1702
    %1799 = vmatpush1.bf16.msra.mxu0 %v1701
    %1800 = vmatprep.subr.bf16.mxu0 %v1706
    %1801 = vmatpush1.bf16.msra.mxu0 %v1705
    %1802 = vmatprep.subr.bf16.mxu0 %v1710
    %1803 = vmatpush1.bf16.msra.mxu0 %v1709
    %1804 = vmatprep.subr.bf16.mxu0 %v1714
    %1805 = vmatpush1.bf16.msra.mxu0 %v1713
    %1806 = vmatprep.subr.bf16.mxu0 %v1718
    %1807 = vmatpush1.bf16.msra.mxu0 %v1717
    %1808 = vmatprep.subr.bf16.mxu0 0
    %1809 = vmatpush1.bf16.msra.mxu0 0
    %1810 = vmatprep.subr.bf16.mxu0 0
    %1811 = vmatpush1.bf16.msra.mxu0 0
    %1812 = vmatprep.subr.bf16.mxu0 0
    %1813 = vmatpush1.bf16.msra.mxu0 0
    %1814 = vmatprep.subr.bf16.mxu0 0
    %1815 = vmatpush1.bf16.msra.mxu0 0
    %1816 = vmatprep.subr.bf16.mxu0 0
    %1817 = vmatpush1.bf16.msra.mxu0 0
    %1818 = vmatprep.subr.bf16.mxu0 0
    %1819 = vmatpush1.bf16.msra.mxu0 0
    %1820 = vmatprep.subr.bf16.mxu0 0
    %1821 = vmatpush1.bf16.msra.mxu0 0
    %1822 = vmatprep.subr.bf16.mxu0 0
    %1823 = vmatpush1.bf16.msra.mxu0 0
    %1824 = vmatprep.mubr.bf16.mxu0 0
    %1825 = vmatmul.mubr.bf16.gmra.mrb[0].mxu0 %v1483
    %v1826 = vpop.f32.mrb[0].mxu0
    %v1827 = vadd.f32 0.0, %v1826
    %v1828 = vpop.f32.mrb[0].mxu0
    %v1829 = vadd.f32 0.0, %v1828
    %v1830 = vpop.f32.mrb[0].mxu0
    %v1831 = vpop.f32.mrb[0].mxu0
    %1832 = vdwg.mxu0
    %v1833 = vadd.f32 %v1555, %v1786
    %v1834 = vadd.f32 %v1556, %v1788
    %v1835 = vadd.f32 %v1557, %v1827
    %v1836 = vadd.f32 %v1558, %v1829
    %v1837 = vxor.u32 %v1833, 2147483648
    %v1838 = vmul.f32 %v1837, 1.442695
    %v1839 = vpow.pop %v1838
    %v1840 = vadd.f32 %v1839, 1.0
    %v1841 = vrcp.pop %v1840
    %v1842 = vmul.f32 1.0, %v1841
    %v1843 = vtanh.pop %v1835
    %v1844 = vxor.u32 %v1836, 2147483648
    %v1845 = vmul.f32 %v1844, 1.442695
    %v1846 = vpow.pop %v1845
    %v1847 = vadd.f32 %v1846, 1.0
    %v1848 = vrcp.pop %v1847
    %v1849 = vmul.f32 1.0, %v1848
    %v1850 = vxor.u32 %v1834, 2147483648
    %v1851 = vmul.f32 %v1850, 1.442695
    %v1852 = vpow.pop %v1851
    %v1853 = vadd.f32 %v1852, 1.0
    %v1854 = vrcp.pop %v1853
    %v1855 = vmul.f32 1.0, %v1854
    %v1856 = vmul.f32 %v1855, %v1480
    %v1857 = vmul.f32 %v1842, %v1843
    %v1858 = vadd.f32 %v1856, %v1857
    %v1859 = vtanh.pop %v1858
    %v1860 = vmul.f32 %v1849, %v1859
    %v1861 = vpack.c.bf16 %v1860, %v1860
    %v1862 = vpack.c.bf16 %v1553, %v1553
    %v1863 = vld [vmem:[#allocation5] sm:$0xf]
    %v1864 = vld [vmem:[#allocation5 + $0x4] sm:$0xf]
    %v1865 = vld [vmem:[#allocation5 + $0x8] sm:$0xf]
    %v1866 = vld [vmem:[#allocation5 + $0xc] sm:$0xf]
    %v1867 = vld [vmem:[#allocation5 + $0x10] sm:$0xf]
    %v1868 = vld [vmem:[#allocation5 + $0x14] sm:$0xf]
    %v1869 = vld [vmem:[#allocation5 + $0x18] sm:$0xf]
    %v1870 = vld [vmem:[#allocation5 + $0x1c] sm:$0xf]
    %v1871 = vld [vmem:[#allocation5 + $0x20] sm:$0xf]
    %v1872 = vld [vmem:[#allocation5 + $0x24] sm:$0xf]
    %v1873 = vld [vmem:[#allocation5 + $0x28] sm:$0xf]
    %v1874 = vld [vmem:[#allocation5 + $0x2c] sm:$0xf]
    %v1875 = vld [vmem:[#allocation5 + $0x30] sm:$0xf]
    %v1876 = vld [vmem:[#allocation5 + $0x34] sm:$0xf]
    %v1877 = vld [vmem:[#allocation5 + $0x38] sm:$0xf]
    %v1878 = vld [vmem:[#allocation5 + $0x3c] sm:$0xf]
    %v1879 = vld [vmem:[#allocation5 + $0x40] sm:$0xf]
    %v1880 = vld [vmem:[#allocation5 + $0x44] sm:$0xf]
    %v1881 = vld [vmem:[#allocation5 + $0x48] sm:$0xf]
    %v1882 = vld [vmem:[#allocation5 + $0x4c] sm:$0xf]
    %v1883 = vld [vmem:[#allocation5 + $0x50] sm:$0xf]
    %v1884 = vld [vmem:[#allocation5 + $0x54] sm:$0xf]
    %v1885 = vld [vmem:[#allocation5 + $0x58] sm:$0xf]
    %v1886 = vld [vmem:[#allocation5 + $0x5c] sm:$0xf]
    %v1887 = vld [vmem:[#allocation5 + $0x60] sm:$0xf]
    %v1888 = vld [vmem:[#allocation5 + $0x64] sm:$0xf]
    %v1889 = vld [vmem:[#allocation5 + $0x68] sm:$0xf]
    %v1890 = vld [vmem:[#allocation5 + $0x6c] sm:$0xf]
    %v1891 = vld [vmem:[#allocation5 + $0x70] sm:$0xf]
    %v1892 = vld [vmem:[#allocation5 + $0x74] sm:$0xf]
    %v1893 = vld [vmem:[#allocation5 + $0x78] sm:$0xf]
    %v1894 = vld [vmem:[#allocation5 + $0x7c] sm:$0xf]
    %v1927 = vunpack.c.l.b16 %v1863
    %v1928 = vunpack.c.l.b16 %v1864
    %v1929 = vunpack.c.l.b16 %v1865
    %v1930 = vunpack.c.l.b16 %v1866
    %v1931 = vunpack.c.l.b16 %v1867
    %v1932 = vunpack.c.l.b16 %v1868
    %v1933 = vunpack.c.l.b16 %v1869
    %v1934 = vunpack.c.l.b16 %v1870
    %v1935 = vunpack.c.l.b16 %v1871
    %v1936 = vunpack.c.l.b16 %v1872
    %v1937 = vunpack.c.l.b16 %v1873
    %v1938 = vunpack.c.l.b16 %v1874
    %v1939 = vunpack.c.l.b16 %v1875
    %v1940 = vunpack.c.l.b16 %v1876
    %v1941 = vunpack.c.l.b16 %v1877
    %v1942 = vunpack.c.l.b16 %v1878
    %v1943 = vunpack.c.l.b16 %v1879
    %v1944 = vunpack.c.l.b16 %v1880
    %v1945 = vunpack.c.l.b16 %v1881
    %v1946 = vunpack.c.l.b16 %v1882
    %v1947 = vunpack.c.l.b16 %v1883
    %v1948 = vunpack.c.l.b16 %v1884
    %v1949 = vunpack.c.l.b16 %v1885
    %v1950 = vunpack.c.l.b16 %v1886
    %v1951 = vunpack.c.l.b16 %v1887
    %v1952 = vunpack.c.l.b16 %v1888
    %v1953 = vunpack.c.l.b16 %v1889
    %v1954 = vunpack.c.l.b16 %v1890
    %v1955 = vunpack.c.l.b16 %v1891
    %v1956 = vunpack.c.l.b16 %v1892
    %v1957 = vunpack.c.l.b16 %v1893
    %v1958 = vunpack.c.l.b16 %v1894
    %v1959 = vpack.c.b16 %v1928, %v1927
    %v1960 = vpack.c.b16 %v1930, %v1929
    %v1961 = vpack.c.b16 %v1932, %v1931
    %v1962 = vpack.c.b16 %v1934, %v1933
    %v1963 = vpack.c.b16 %v1936, %v1935
    %v1964 = vpack.c.b16 %v1938, %v1937
    %v1965 = vpack.c.b16 %v1940, %v1939
    %v1966 = vpack.c.b16 %v1942, %v1941
    %v1967 = vpack.c.b16 %v1944, %v1943
    %v1968 = vpack.c.b16 %v1946, %v1945
    %v1969 = vpack.c.b16 %v1948, %v1947
    %v1970 = vpack.c.b16 %v1950, %v1949
    %v1971 = vpack.c.b16 %v1952, %v1951
    %v1972 = vpack.c.b16 %v1954, %v1953
    %v1973 = vpack.c.b16 %v1956, %v1955
    %v1974 = vpack.c.b16 %v1958, %v1957
    %1991 = vmatprep.subr.bf16.mxu0 0
    %1992 = vmatpush1.bf16.msra.mxu0 %v1959
    %1993 = vmatprep.subr.bf16.mxu0 0
    %1994 = vmatpush1.bf16.msra.mxu0 %v1960
    %1995 = vmatprep.subr.bf16.mxu0 0
    %1996 = vmatpush1.bf16.msra.mxu0 %v1961
    %1997 = vmatprep.subr.bf16.mxu0 0
    %1998 = vmatpush1.bf16.msra.mxu0 %v1962
    %1999 = vmatprep.subr.bf16.mxu0 0
    %2000 = vmatpush1.bf16.msra.mxu0 %v1963
    %2001 = vmatprep.subr.bf16.mxu0 0
    %2002 = vmatpush1.bf16.msra.mxu0 %v1964
    %2003 = vmatprep.subr.bf16.mxu0 0
    %2004 = vmatpush1.bf16.msra.mxu0 %v1965
    %2005 = vmatprep.subr.bf16.mxu0 0
    %2006 = vmatpush1.bf16.msra.mxu0 %v1966
    %2007 = vmatprep.subr.bf16.mxu0 0
    %2008 = vmatpush1.bf16.msra.mxu0 %v1967
    %2009 = vmatprep.subr.bf16.mxu0 0
    %2010 = vmatpush1.bf16.msra.mxu0 %v1968
    %2011 = vmatprep.subr.bf16.mxu0 0
    %2012 = vmatpush1.bf16.msra.mxu0 %v1969
    %2013 = vmatprep.subr.bf16.mxu0 0
    %2014 = vmatpush1.bf16.msra.mxu0 %v1970
    %2015 = vmatprep.subr.bf16.mxu0 0
    %2016 = vmatpush1.bf16.msra.mxu0 %v1971
    %2017 = vmatprep.subr.bf16.mxu0 0
    %2018 = vmatpush1.bf16.msra.mxu0 %v1972
    %2019 = vmatprep.subr.bf16.mxu0 0
    %2020 = vmatpush1.bf16.msra.mxu0 %v1973
    %2021 = vmatprep.subr.bf16.mxu0 0
    %2022 = vmatpush1.bf16.msra.mxu0 %v1974
    %2023 = vmatprep.mubr.bf16.mxu0 %v1862
    %2024 = vmatmul.mubr.bf16.gmra.mrb[0].mxu0 %v1861
    %v2025 = vpop.f32.mrb[0].mxu0
    %v2026 = vadd.f32 %v347, %v2025
    %v2027 = vpop.f32.mrb[0].mxu0
    %v2028 = vpop.f32.mrb[0].mxu0
    %v2029 = vpop.f32.mrb[0].mxu0
    %2030 = vdwg.mxu0
    %v2031 = vxor.u32 %v2026, 2147483648
    %v2032 = vmul.f32 %v2031, 1.442695
    %v2033 = vpow.pop %v2032
    %v2034 = vadd.f32 %v2033, 1.0
    %v2035 = vrcp.pop %v2034
    %v2036 = vmul.f32 1.0, %v2035
    %v2037 = vtanh.pop %v2026
    %2038 = vrot.lane.b32.xlu0 %v2037, 8
    %v2039 = vpop.permute.xlu0 %2038
    %2040 = vrot.lane.b32.xlu0 %v2037, 120
    %v2041 = vpop.permute.xlu0 %2040
    %v2042 = vadd.f32 %v2039, %v2041
    %2043 = vrot.lane.b32.xlu0 %v2036, 12
    %v2044 = vpop.permute.xlu0 %2043
    %2045 = vrot.lane.b32.xlu0 %v2036, 116
    %v2046 = vpop.permute.xlu0 %2045
    %v2047 = vadd.f32 %v2044, %v2046
    %v2048 = vsub.f32 %v2047, 0.5
    %2049 = vrot.lane.b32.xlu0 %v2036, 4
    %v2050 = vpop.permute.xlu0 %2049
    %2051 = vrot.lane.b32.xlu0 %v2036, 124
    %v2052 = vpop.permute.xlu0 %2051
    %v2053 = vadd.f32 %v2050, %v2052
    %v2054 = vsub.f32 %v2053, 0.5
    %v2055 = vmul.f32 %v2054, %v1551
    %v2056 = vmul.f32 %v2036, %v2042
    %v2057 = vadd.f32 %v2055, %v2056
    %v2058 = vtanh.pop %v2057
    %v2059 = vmul.f32 %v2048, %v2058
    %s2060 = scalar_lea.vmem %s6, 8
    %2061 = vst [vmem:[%s2060] sm:$0xff] %v2059
    %v2062 = vld [vmem:[#allocation2 + $0xc0] sm:$0xff]
    %v2063 = vld [vmem:[#allocation2 + $0xc8] sm:$0xff]
    %v2064 = vld [vmem:[#allocation2 + $0xd0] sm:$0xff]
    %v2065 = vld [vmem:[#allocation2 + $0xd8] sm:$0xff]
    %v2066 = vld [vmem:[#allocation3] sm:$0xff]
    %v2067 = vld [vmem:[#allocation3 + $0x8] sm:$0xff]
    %v2068 = vld [vmem:[#allocation3 + $0x10] sm:$0xff]
    %v2069 = vld [vmem:[#allocation3 + $0x18] sm:$0xff]
    %v2070 = vld [vmem:[#allocation3 + $0x20] sm:$0xff]
    %v2071 = vld [vmem:[#allocation3 + $0x28] sm:$0xff]
    %v2072 = vld [vmem:[#allocation3 + $0x30] sm:$0xff]
    %v2073 = vld [vmem:[#allocation3 + $0x38] sm:$0xff]
    %v2074 = vld [vmem:[#allocation3 + $0x40] sm:$0xff]
    %v2075 = vld [vmem:[#allocation3 + $0x48] sm:$0xff]
    %v2076 = vld [vmem:[#allocation3 + $0x50] sm:$0xff]
    %v2077 = vld [vmem:[#allocation3 + $0x58] sm:$0xff]
    %v2078 = vld [vmem:[#allocation3 + $0x60] sm:$0xff]
    %v2079 = vld [vmem:[#allocation3 + $0x68] sm:$0xff]
    %v2080 = vld [vmem:[#allocation3 + $0x70] sm:$0xff]
    %v2081 = vld [vmem:[#allocation3 + $0x78] sm:$0xff]
    %v2082 = vld [vmem:[#allocation3 + $0x80] sm:$0xff]
    %v2083 = vld [vmem:[#allocation3 + $0x88] sm:$0xff]
    %v2084 = vld [vmem:[#allocation3 + $0x90] sm:$0xff]
    %v2085 = vld [vmem:[#allocation3 + $0x98] sm:$0xff]
    %v2086 = vld [vmem:[#allocation3 + $0xa0] sm:$0xff]
    %v2087 = vld [vmem:[#allocation3 + $0xa8] sm:$0xff]
    %v2088 = vld [vmem:[#allocation3 + $0xb0] sm:$0xff]
    %v2089 = vld [vmem:[#allocation3 + $0xb8] sm:$0xff]
    %v2090 = vld [vmem:[#allocation3 + $0xc0] sm:$0xff]
    %v2091 = vld [vmem:[#allocation3 + $0xc8] sm:$0xff]
    %v2092 = vld [vmem:[#allocation3 + $0xd0] sm:$0xff]
    %v2093 = vld [vmem:[#allocation3 + $0xd8] sm:$0xff]
    %v2094 = vld [vmem:[#allocation3 + $0xe0] sm:$0xff]
    %v2095 = vld [vmem:[#allocation3 + $0xe8] sm:$0xff]
    %v2096 = vld [vmem:[#allocation3 + $0xf0] sm:$0xff]
    %v2097 = vld [vmem:[#allocation3 + $0xf8] sm:$0xff]
    %v2130 = vunpack.c.l.b16 %v2066
    %v2131 = vunpack.c.h.b16 %v2066
    %v2132 = vunpack.c.l.b16 %v2067
    %v2133 = vunpack.c.h.b16 %v2067
    %v2134 = vunpack.c.l.b16 %v2068
    %v2135 = vunpack.c.h.b16 %v2068
    %v2136 = vunpack.c.l.b16 %v2069
    %v2137 = vunpack.c.h.b16 %v2069
    %v2138 = vunpack.c.l.b16 %v2070
    %v2139 = vunpack.c.h.b16 %v2070
    %v2140 = vunpack.c.l.b16 %v2071
    %v2141 = vunpack.c.h.b16 %v2071
    %v2142 = vunpack.c.l.b16 %v2072
    %v2143 = vunpack.c.h.b16 %v2072
    %v2144 = vunpack.c.l.b16 %v2073
    %v2145 = vunpack.c.h.b16 %v2073
    %v2146 = vunpack.c.l.b16 %v2074
    %v2147 = vunpack.c.h.b16 %v2074
    %v2148 = vunpack.c.l.b16 %v2075
    %v2149 = vunpack.c.h.b16 %v2075
    %v2150 = vunpack.c.l.b16 %v2076
    %v2151 = vunpack.c.h.b16 %v2076
    %v2152 = vunpack.c.l.b16 %v2077
    %v2153 = vunpack.c.h.b16 %v2077
    %v2154 = vunpack.c.l.b16 %v2078
    %v2155 = vunpack.c.h.b16 %v2078
    %v2156 = vunpack.c.l.b16 %v2079
    %v2157 = vunpack.c.h.b16 %v2079
    %v2158 = vunpack.c.l.b16 %v2080
    %v2159 = vunpack.c.h.b16 %v2080
    %v2160 = vunpack.c.l.b16 %v2081
    %v2161 = vunpack.c.h.b16 %v2081
    %v2162 = vunpack.c.l.b16 %v2082
    %v2163 = vunpack.c.h.b16 %v2082
    %v2164 = vunpack.c.l.b16 %v2083
    %v2165 = vunpack.c.h.b16 %v2083
    %v2166 = vunpack.c.l.b16 %v2084
    %v2167 = vunpack.c.h.b16 %v2084
    %v2168 = vunpack.c.l.b16 %v2085
    %v2169 = vunpack.c.h.b16 %v2085
    %v2170 = vunpack.c.l.b16 %v2086
    %v2171 = vunpack.c.h.b16 %v2086
    %v2172 = vunpack.c.l.b16 %v2087
    %v2173 = vunpack.c.h.b16 %v2087
    %v2174 = vunpack.c.l.b16 %v2088
    %v2175 = vunpack.c.h.b16 %v2088
    %v2176 = vunpack.c.l.b16 %v2089
    %v2177 = vunpack.c.h.b16 %v2089
    %v2178 = vunpack.c.l.b16 %v2090
    %v2179 = vunpack.c.h.b16 %v2090
    %v2180 = vunpack.c.l.b16 %v2091
    %v2181 = vunpack.c.h.b16 %v2091
    %v2182 = vunpack.c.l.b16 %v2092
    %v2183 = vunpack.c.h.b16 %v2092
    %v2184 = vunpack.c.l.b16 %v2093
    %v2185 = vunpack.c.h.b16 %v2093
    %v2186 = vunpack.c.l.b16 %v2094
    %v2187 = vunpack.c.h.b16 %v2094
    %v2188 = vunpack.c.l.b16 %v2095
    %v2189 = vunpack.c.h.b16 %v2095
    %v2190 = vunpack.c.l.b16 %v2096
    %v2191 = vunpack.c.h.b16 %v2096
    %v2192 = vunpack.c.l.b16 %v2097
    %v2193 = vunpack.c.h.b16 %v2097
    %v2194 = vpack.c.b16 %v2134, %v2130
    %v2195 = vpack.c.b16 %v2135, %v2131
    %v2196 = vpack.c.b16 %v2136, %v2132
    %v2197 = vpack.c.b16 %v2137, %v2133
    %v2198 = vpack.c.b16 %v2142, %v2138
    %v2199 = vpack.c.b16 %v2143, %v2139
    %v2200 = vpack.c.b16 %v2144, %v2140
    %v2201 = vpack.c.b16 %v2145, %v2141
    %v2202 = vpack.c.b16 %v2150, %v2146
    %v2203 = vpack.c.b16 %v2151, %v2147
    %v2204 = vpack.c.b16 %v2152, %v2148
    %v2205 = vpack.c.b16 %v2153, %v2149
    %v2206 = vpack.c.b16 %v2158, %v2154
    %v2207 = vpack.c.b16 %v2159, %v2155
    %v2208 = vpack.c.b16 %v2160, %v2156
    %v2209 = vpack.c.b16 %v2161, %v2157
    %v2210 = vpack.c.b16 %v2166, %v2162
    %v2211 = vpack.c.b16 %v2167, %v2163
    %v2212 = vpack.c.b16 %v2168, %v2164
    %v2213 = vpack.c.b16 %v2169, %v2165
    %v2214 = vpack.c.b16 %v2174, %v2170
    %v2215 = vpack.c.b16 %v2175, %v2171
    %v2216 = vpack.c.b16 %v2176, %v2172
    %v2217 = vpack.c.b16 %v2177, %v2173
    %v2218 = vpack.c.b16 %v2182, %v2178
    %v2219 = vpack.c.b16 %v2183, %v2179
    %v2220 = vpack.c.b16 %v2184, %v2180
    %v2221 = vpack.c.b16 %v2185, %v2181
    %v2222 = vpack.c.b16 %v2190, %v2186
    %v2223 = vpack.c.b16 %v2191, %v2187
    %v2224 = vpack.c.b16 %v2192, %v2188
    %v2225 = vpack.c.b16 %v2193, %v2189
    %2258 = vmatprep.subr.bf16.mxu0 %v2195
    %2259 = vmatpush1.bf16.msra.mxu0 %v2194
    %2260 = vmatprep.subr.bf16.mxu0 %v2199
    %2261 = vmatpush1.bf16.msra.mxu0 %v2198
    %2262 = vmatprep.subr.bf16.mxu0 %v2203
    %2263 = vmatpush1.bf16.msra.mxu0 %v2202
    %2264 = vmatprep.subr.bf16.mxu0 %v2207
    %2265 = vmatpush1.bf16.msra.mxu0 %v2206
    %2266 = vmatprep.subr.bf16.mxu0 %v2211
    %2267 = vmatpush1.bf16.msra.mxu0 %v2210
    %2268 = vmatprep.subr.bf16.mxu0 %v2215
    %2269 = vmatpush1.bf16.msra.mxu0 %v2214
    %2270 = vmatprep.subr.bf16.mxu0 %v2219
    %2271 = vmatpush1.bf16.msra.mxu0 %v2218
    %2272 = vmatprep.subr.bf16.mxu0 %v2223
    %2273 = vmatpush1.bf16.msra.mxu0 %v2222
    %2274 = vmatprep.subr.bf16.mxu0 0
    %2275 = vmatpush1.bf16.msra.mxu0 0
    %2276 = vmatprep.subr.bf16.mxu0 0
    %2277 = vmatpush1.bf16.msra.mxu0 0
    %2278 = vmatprep.subr.bf16.mxu0 0
    %2279 = vmatpush1.bf16.msra.mxu0 0
    %2280 = vmatprep.subr.bf16.mxu0 0
    %2281 = vmatpush1.bf16.msra.mxu0 0
    %2282 = vmatprep.subr.bf16.mxu0 0
    %2283 = vmatpush1.bf16.msra.mxu0 0
    %2284 = vmatprep.subr.bf16.mxu0 0
    %2285 = vmatpush1.bf16.msra.mxu0 0
    %2286 = vmatprep.subr.bf16.mxu0 0
    %2287 = vmatpush1.bf16.msra.mxu0 0
    %2288 = vmatprep.subr.bf16.mxu0 0
    %2289 = vmatpush1.bf16.msra.mxu0 0
    %2290 = vmatprep.mubr.bf16.mxu0 0
    %2291 = vmatmul.mubr.bf16.gmra.mrb[0].mxu0 %v1861
    %v2292 = vpop.f32.mrb[0].mxu0
    %v2293 = vadd.f32 0.0, %v2292
    %v2294 = vpop.f32.mrb[0].mxu0
    %v2295 = vadd.f32 0.0, %v2294
    %v2296 = vpop.f32.mrb[0].mxu0
    %v2297 = vpop.f32.mrb[0].mxu0
    %2298 = vdwg.mxu0
    %2299 = vmatprep.subr.bf16.mxu0 %v2197
    %2300 = vmatpush1.bf16.msra.mxu0 %v2196
    %2301 = vmatprep.subr.bf16.mxu0 %v2201
    %2302 = vmatpush1.bf16.msra.mxu0 %v2200
    %2303 = vmatprep.subr.bf16.mxu0 %v2205
    %2304 = vmatpush1.bf16.msra.mxu0 %v2204
    %2305 = vmatprep.subr.bf16.mxu0 %v2209
    %2306 = vmatpush1.bf16.msra.mxu0 %v2208
    %2307 = vmatprep.subr.bf16.mxu0 %v2213
    %2308 = vmatpush1.bf16.msra.mxu0 %v2212
    %2309 = vmatprep.subr.bf16.mxu0 %v2217
    %2310 = vmatpush1.bf16.msra.mxu0 %v2216
    %2311 = vmatprep.subr.bf16.mxu0 %v2221
    %2312 = vmatpush1.bf16.msra.mxu0 %v2220
    %2313 = vmatprep.subr.bf16.mxu0 %v2225
    %2314 = vmatpush1.bf16.msra.mxu0 %v2224
    %2315 = vmatprep.subr.bf16.mxu0 0
    %2316 = vmatpush1.bf16.msra.mxu0 0
    %2317 = vmatprep.subr.bf16.mxu0 0
    %2318 = vmatpush1.bf16.msra.mxu0 0
    %2319 = vmatprep.subr.bf16.mxu0 0
    %2320 = vmatpush1.bf16.msra.mxu0 0
    %2321 = vmatprep.subr.bf16.mxu0 0
    %2322 = vmatpush1.bf16.msra.mxu0 0
    %2323 = vmatprep.subr.bf16.mxu0 0
    %2324 = vmatpush1.bf16.msra.mxu0 0
    %2325 = vmatprep.subr.bf16.mxu0 0
    %2326 = vmatpush1.bf16.msra.mxu0 0
    %2327 = vmatprep.subr.bf16.mxu0 0
    %2328 = vmatpush1.bf16.msra.mxu0 0
    %2329 = vmatprep.subr.bf16.mxu0 0
    %2330 = vmatpush1.bf16.msra.mxu0 0
    %2331 = vmatprep.mubr.bf16.mxu0 0
    %2332 = vmatmul.mubr.bf16.gmra.mrb[0].mxu0 %v1861
    %v2333 = vpop.f32.mrb[0].mxu0
    %v2334 = vadd.f32 0.0, %v2333
    %v2335 = vpop.f32.mrb[0].mxu0
    %v2336 = vadd.f32 0.0, %v2335
    %v2337 = vpop.f32.mrb[0].mxu0
    %v2338 = vpop.f32.mrb[0].mxu0
    %2339 = vdwg.mxu0
    %v2340 = vadd.f32 %v2062, %v2293
    %v2341 = vadd.f32 %v2063, %v2295
    %v2342 = vadd.f32 %v2064, %v2334
    %v2343 = vadd.f32 %v2065, %v2336
    %v2344 = vxor.u32 %v2340, 2147483648
    %v2345 = vmul.f32 %v2344, 1.442695
    %v2346 = vpow.pop %v2345
    %v2347 = vadd.f32 %v2346, 1.0
    %v2348 = vrcp.pop %v2347
    %v2349 = vmul.f32 1.0, %v2348
    %v2350 = vtanh.pop %v2342
    %v2351 = vxor.u32 %v2343, 2147483648
    %v2352 = vmul.f32 %v2351, 1.442695
    %v2353 = vpow.pop %v2352
    %v2354 = vadd.f32 %v2353, 1.0
    %v2355 = vrcp.pop %v2354
    %v2356 = vmul.f32 1.0, %v2355
    %v2357 = vxor.u32 %v2341, 2147483648
    %v2358 = vmul.f32 %v2357, 1.442695
    %v2359 = vpow.pop %v2358
    %v2360 = vadd.f32 %v2359, 1.0
    %v2361 = vrcp.pop %v2360
    %v2362 = vmul.f32 1.0, %v2361
    %v2363 = vmul.f32 %v2362, %v1858
    %v2364 = vmul.f32 %v2349, %v2350
    %v2365 = vadd.f32 %v2363, %v2364
    %v2366 = vtanh.pop %v2365
    %v2367 = vmul.f32 %v2356, %v2366
    %v2368 = vpack.c.bf16 %v2367, %v2367
    %v2369 = vpack.c.bf16 %v2059, %v2059
    %v2370 = vld [vmem:[#allocation5] sm:$0xf]
    %v2371 = vld [vmem:[#allocation5 + $0x4] sm:$0xf]
    %v2372 = vld [vmem:[#allocation5 + $0x8] sm:$0xf]
    %v2373 = vld [vmem:[#allocation5 + $0xc] sm:$0xf]
    %v2374 = vld [vmem:[#allocation5 + $0x10] sm:$0xf]
    %v2375 = vld [vmem:[#allocation5 + $0x14] sm:$0xf]
    %v2376 = vld [vmem:[#allocation5 + $0x18] sm:$0xf]
    %v2377 = vld [vmem:[#allocation5 + $0x1c] sm:$0xf]
    %v2378 = vld [vmem:[#allocation5 + $0x20] sm:$0xf]
    %v2379 = vld [vmem:[#allocation5 + $0x24] sm:$0xf]
    %v2380 = vld [vmem:[#allocation5 + $0x28] sm:$0xf]
    %v2381 = vld [vmem:[#allocation5 + $0x2c] sm:$0xf]
    %v2382 = vld [vmem:[#allocation5 + $0x30] sm:$0xf]
    %v2383 = vld [vmem:[#allocation5 + $0x34] sm:$0xf]
    %v2384 = vld [vmem:[#allocation5 + $0x38] sm:$0xf]
    %v2385 = vld [vmem:[#allocation5 + $0x3c] sm:$0xf]
    %v2386 = vld [vmem:[#allocation5 + $0x40] sm:$0xf]
    %v2387 = vld [vmem:[#allocation5 + $0x44] sm:$0xf]
    %v2388 = vld [vmem:[#allocation5 + $0x48] sm:$0xf]
    %v2389 = vld [vmem:[#allocation5 + $0x4c] sm:$0xf]
    %v2390 = vld [vmem:[#allocation5 + $0x50] sm:$0xf]
    %v2391 = vld [vmem:[#allocation5 + $0x54] sm:$0xf]
    %v2392 = vld [vmem:[#allocation5 + $0x58] sm:$0xf]
    %v2393 = vld [vmem:[#allocation5 + $0x5c] sm:$0xf]
    %v2394 = vld [vmem:[#allocation5 + $0x60] sm:$0xf]
    %v2395 = vld [vmem:[#allocation5 + $0x64] sm:$0xf]
    %v2396 = vld [vmem:[#allocation5 + $0x68] sm:$0xf]
    %v2397 = vld [vmem:[#allocation5 + $0x6c] sm:$0xf]
    %v2398 = vld [vmem:[#allocation5 + $0x70] sm:$0xf]
    %v2399 = vld [vmem:[#allocation5 + $0x74] sm:$0xf]
    %v2400 = vld [vmem:[#allocation5 + $0x78] sm:$0xf]
    %v2401 = vld [vmem:[#allocation5 + $0x7c] sm:$0xf]
    %v2434 = vunpack.c.l.b16 %v2370
    %v2435 = vunpack.c.l.b16 %v2371
    %v2436 = vunpack.c.l.b16 %v2372
    %v2437 = vunpack.c.l.b16 %v2373
    %v2438 = vunpack.c.l.b16 %v2374
    %v2439 = vunpack.c.l.b16 %v2375
    %v2440 = vunpack.c.l.b16 %v2376
    %v2441 = vunpack.c.l.b16 %v2377
    %v2442 = vunpack.c.l.b16 %v2378
    %v2443 = vunpack.c.l.b16 %v2379
    %v2444 = vunpack.c.l.b16 %v2380
    %v2445 = vunpack.c.l.b16 %v2381
    %v2446 = vunpack.c.l.b16 %v2382
    %v2447 = vunpack.c.l.b16 %v2383
    %v2448 = vunpack.c.l.b16 %v2384
    %v2449 = vunpack.c.l.b16 %v2385
    %v2450 = vunpack.c.l.b16 %v2386
    %v2451 = vunpack.c.l.b16 %v2387
    %v2452 = vunpack.c.l.b16 %v2388
    %v2453 = vunpack.c.l.b16 %v2389
    %v2454 = vunpack.c.l.b16 %v2390
    %v2455 = vunpack.c.l.b16 %v2391
    %v2456 = vunpack.c.l.b16 %v2392
    %v2457 = vunpack.c.l.b16 %v2393
    %v2458 = vunpack.c.l.b16 %v2394
    %v2459 = vunpack.c.l.b16 %v2395
    %v2460 = vunpack.c.l.b16 %v2396
    %v2461 = vunpack.c.l.b16 %v2397
    %v2462 = vunpack.c.l.b16 %v2398
    %v2463 = vunpack.c.l.b16 %v2399
    %v2464 = vunpack.c.l.b16 %v2400
    %v2465 = vunpack.c.l.b16 %v2401
    %v2466 = vpack.c.b16 %v2435, %v2434
    %v2467 = vpack.c.b16 %v2437, %v2436
    %v2468 = vpack.c.b16 %v2439, %v2438
    %v2469 = vpack.c.b16 %v2441, %v2440
    %v2470 = vpack.c.b16 %v2443, %v2442
    %v2471 = vpack.c.b16 %v2445, %v2444
    %v2472 = vpack.c.b16 %v2447, %v2446
    %v2473 = vpack.c.b16 %v2449, %v2448
    %v2474 = vpack.c.b16 %v2451, %v2450
    %v2475 = vpack.c.b16 %v2453, %v2452
    %v2476 = vpack.c.b16 %v2455, %v2454
    %v2477 = vpack.c.b16 %v2457, %v2456
    %v2478 = vpack.c.b16 %v2459, %v2458
    %v2479 = vpack.c.b16 %v2461, %v2460
    %v2480 = vpack.c.b16 %v2463, %v2462
    %v2481 = vpack.c.b16 %v2465, %v2464
    %2498 = vmatprep.subr.bf16.mxu0 0
    %2499 = vmatpush1.bf16.msra.mxu0 %v2466
    %2500 = vmatprep.subr.bf16.mxu0 0
    %2501 = vmatpush1.bf16.msra.mxu0 %v2467
    %2502 = vmatprep.subr.bf16.mxu0 0
    %2503 = vmatpush1.bf16.msra.mxu0 %v2468
    %2504 = vmatprep.subr.bf16.mxu0 0
    %2505 = vmatpush1.bf16.msra.mxu0 %v2469
    %2506 = vmatprep.subr.bf16.mxu0 0
    %2507 = vmatpush1.bf16.msra.mxu0 %v2470
    %2508 = vmatprep.subr.bf16.mxu0 0
    %2509 = vmatpush1.bf16.msra.mxu0 %v2471
    %2510 = vmatprep.subr.bf16.mxu0 0
    %2511 = vmatpush1.bf16.msra.mxu0 %v2472
    %2512 = vmatprep.subr.bf16.mxu0 0
    %2513 = vmatpush1.bf16.msra.mxu0 %v2473
    %2514 = vmatprep.subr.bf16.mxu0 0
    %2515 = vmatpush1.bf16.msra.mxu0 %v2474
    %2516 = vmatprep.subr.bf16.mxu0 0
    %2517 = vmatpush1.bf16.msra.mxu0 %v2475
    %2518 = vmatprep.subr.bf16.mxu0 0
    %2519 = vmatpush1.bf16.msra.mxu0 %v2476
    %2520 = vmatprep.subr.bf16.mxu0 0
    %2521 = vmatpush1.bf16.msra.mxu0 %v2477
    %2522 = vmatprep.subr.bf16.mxu0 0
    %2523 = vmatpush1.bf16.msra.mxu0 %v2478
    %2524 = vmatprep.subr.bf16.mxu0 0
    %2525 = vmatpush1.bf16.msra.mxu0 %v2479
    %2526 = vmatprep.subr.bf16.mxu0 0
    %2527 = vmatpush1.bf16.msra.mxu0 %v2480
    %2528 = vmatprep.subr.bf16.mxu0 0
    %2529 = vmatpush1.bf16.msra.mxu0 %v2481
    %2530 = vmatprep.mubr.bf16.mxu0 %v2369
    %2531 = vmatmul.mubr.bf16.gmra.mrb[0].mxu0 %v2368
    %v2532 = vpop.f32.mrb[0].mxu0
    %v2533 = vadd.f32 %v347, %v2532
    %v2534 = vpop.f32.mrb[0].mxu0
    %v2535 = vpop.f32.mrb[0].mxu0
    %v2536 = vpop.f32.mrb[0].mxu0
    %2537 = vdwg.mxu0
    %v2538 = vxor.u32 %v2533, 2147483648
    %v2539 = vmul.f32 %v2538, 1.442695
    %v2540 = vpow.pop %v2539
    %v2541 = vadd.f32 %v2540, 1.0
    %v2542 = vrcp.pop %v2541
    %v2543 = vmul.f32 1.0, %v2542
    %v2544 = vtanh.pop %v2533
    %2545 = vrot.lane.b32.xlu0 %v2544, 8
    %v2546 = vpop.permute.xlu0 %2545
    %2547 = vrot.lane.b32.xlu0 %v2544, 120
    %v2548 = vpop.permute.xlu0 %2547
    %v2549 = vadd.f32 %v2546, %v2548
    %2550 = vrot.lane.b32.xlu0 %v2543, 12
    %v2551 = vpop.permute.xlu0 %2550
    %2552 = vrot.lane.b32.xlu0 %v2543, 116
    %v2553 = vpop.permute.xlu0 %2552
    %v2554 = vadd.f32 %v2551, %v2553
    %v2555 = vsub.f32 %v2554, 0.5
    %2556 = vrot.lane.b32.xlu0 %v2543, 4
    %v2557 = vpop.permute.xlu0 %2556
    %2558 = vrot.lane.b32.xlu0 %v2543, 124
    %v2559 = vpop.permute.xlu0 %2558
    %v2560 = vadd.f32 %v2557, %v2559
    %v2561 = vsub.f32 %v2560, 0.5
    %v2562 = vmul.f32 %v2561, %v2057
    %v2563 = vmul.f32 %v2543, %v2549
    %v2564 = vadd.f32 %v2562, %v2563
    %v2565 = vtanh.pop %v2564
    %v2566 = vmul.f32 %v2555, %v2565
    %s2567 = scalar_lea.vmem %s6, 16
    %2568 = vst [vmem:[%s2567] sm:$0xff] %v2566
    %v2569 = vld [vmem:[#allocation2 + $0xe0] sm:$0xff]
    %v2570 = vld [vmem:[#allocation2 + $0xe8] sm:$0xff]
    %v2571 = vld [vmem:[#allocation2 + $0xf0] sm:$0xff]
    %v2572 = vld [vmem:[#allocation2 + $0xf8] sm:$0xff]
    %v2573 = vld [vmem:[#allocation3] sm:$0xff]
    %v2574 = vld [vmem:[#allocation3 + $0x8] sm:$0xff]
    %v2575 = vld [vmem:[#allocation3 + $0x10] sm:$0xff]
    %v2576 = vld [vmem:[#allocation3 + $0x18] sm:$0xff]
    %v2577 = vld [vmem:[#allocation3 + $0x20] sm:$0xff]
    %v2578 = vld [vmem:[#allocation3 + $0x28] sm:$0xff]
    %v2579 = vld [vmem:[#allocation3 + $0x30] sm:$0xff]
    %v2580 = vld [vmem:[#allocation3 + $0x38] sm:$0xff]
    %v2581 = vld [vmem:[#allocation3 + $0x40] sm:$0xff]
    %v2582 = vld [vmem:[#allocation3 + $0x48] sm:$0xff]
    %v2583 = vld [vmem:[#allocation3 + $0x50] sm:$0xff]
    %v2584 = vld [vmem:[#allocation3 + $0x58] sm:$0xff]
    %v2585 = vld [vmem:[#allocation3 + $0x60] sm:$0xff]
    %v2586 = vld [vmem:[#allocation3 + $0x68] sm:$0xff]
    %v2587 = vld [vmem:[#allocation3 + $0x70] sm:$0xff]
    %v2588 = vld [vmem:[#allocation3 + $0x78] sm:$0xff]
    %v2589 = vld [vmem:[#allocation3 + $0x80] sm:$0xff]
    %v2590 = vld [vmem:[#allocation3 + $0x88] sm:$0xff]
    %v2591 = vld [vmem:[#allocation3 + $0x90] sm:$0xff]
    %v2592 = vld [vmem:[#allocation3 + $0x98] sm:$0xff]
    %v2593 = vld [vmem:[#allocation3 + $0xa0] sm:$0xff]
    %v2594 = vld [vmem:[#allocation3 + $0xa8] sm:$0xff]
    %v2595 = vld [vmem:[#allocation3 + $0xb0] sm:$0xff]
    %v2596 = vld [vmem:[#allocation3 + $0xb8] sm:$0xff]
    %v2597 = vld [vmem:[#allocation3 + $0xc0] sm:$0xff]
    %v2598 = vld [vmem:[#allocation3 + $0xc8] sm:$0xff]
    %v2599 = vld [vmem:[#allocation3 + $0xd0] sm:$0xff]
    %v2600 = vld [vmem:[#allocation3 + $0xd8] sm:$0xff]
    %v2601 = vld [vmem:[#allocation3 + $0xe0] sm:$0xff]
    %v2602 = vld [vmem:[#allocation3 + $0xe8] sm:$0xff]
    %v2603 = vld [vmem:[#allocation3 + $0xf0] sm:$0xff]
    %v2604 = vld [vmem:[#allocation3 + $0xf8] sm:$0xff]
    %v2637 = vunpack.c.l.b16 %v2573
    %v2638 = vunpack.c.h.b16 %v2573
    %v2639 = vunpack.c.l.b16 %v2574
    %v2640 = vunpack.c.h.b16 %v2574
    %v2641 = vunpack.c.l.b16 %v2575
    %v2642 = vunpack.c.h.b16 %v2575
    %v2643 = vunpack.c.l.b16 %v2576
    %v2644 = vunpack.c.h.b16 %v2576
    %v2645 = vunpack.c.l.b16 %v2577
    %v2646 = vunpack.c.h.b16 %v2577
    %v2647 = vunpack.c.l.b16 %v2578
    %v2648 = vunpack.c.h.b16 %v2578
    %v2649 = vunpack.c.l.b16 %v2579
    %v2650 = vunpack.c.h.b16 %v2579
    %v2651 = vunpack.c.l.b16 %v2580
    %v2652 = vunpack.c.h.b16 %v2580
    %v2653 = vunpack.c.l.b16 %v2581
    %v2654 = vunpack.c.h.b16 %v2581
    %v2655 = vunpack.c.l.b16 %v2582
    %v2656 = vunpack.c.h.b16 %v2582
    %v2657 = vunpack.c.l.b16 %v2583
    %v2658 = vunpack.c.h.b16 %v2583
    %v2659 = vunpack.c.l.b16 %v2584
    %v2660 = vunpack.c.h.b16 %v2584
    %v2661 = vunpack.c.l.b16 %v2585
    %v2662 = vunpack.c.h.b16 %v2585
    %v2663 = vunpack.c.l.b16 %v2586
    %v2664 = vunpack.c.h.b16 %v2586
    %v2665 = vunpack.c.l.b16 %v2587
    %v2666 = vunpack.c.h.b16 %v2587
    %v2667 = vunpack.c.l.b16 %v2588
    %v2668 = vunpack.c.h.b16 %v2588
    %v2669 = vunpack.c.l.b16 %v2589
    %v2670 = vunpack.c.h.b16 %v2589
    %v2671 = vunpack.c.l.b16 %v2590
    %v2672 = vunpack.c.h.b16 %v2590
    %v2673 = vunpack.c.l.b16 %v2591
    %v2674 = vunpack.c.h.b16 %v2591
    %v2675 = vunpack.c.l.b16 %v2592
    %v2676 = vunpack.c.h.b16 %v2592
    %v2677 = vunpack.c.l.b16 %v2593
    %v2678 = vunpack.c.h.b16 %v2593
    %v2679 = vunpack.c.l.b16 %v2594
    %v2680 = vunpack.c.h.b16 %v2594
    %v2681 = vunpack.c.l.b16 %v2595
    %v2682 = vunpack.c.h.b16 %v2595
    %v2683 = vunpack.c.l.b16 %v2596
    %v2684 = vunpack.c.h.b16 %v2596
    %v2685 = vunpack.c.l.b16 %v2597
    %v2686 = vunpack.c.h.b16 %v2597
    %v2687 = vunpack.c.l.b16 %v2598
    %v2688 = vunpack.c.h.b16 %v2598
    %v2689 = vunpack.c.l.b16 %v2599
    %v2690 = vunpack.c.h.b16 %v2599
    %v2691 = vunpack.c.l.b16 %v2600
    %v2692 = vunpack.c.h.b16 %v2600
    %v2693 = vunpack.c.l.b16 %v2601
    %v2694 = vunpack.c.h.b16 %v2601
    %v2695 = vunpack.c.l.b16 %v2602
    %v2696 = vunpack.c.h.b16 %v2602
    %v2697 = vunpack.c.l.b16 %v2603
    %v2698 = vunpack.c.h.b16 %v2603
    %v2699 = vunpack.c.l.b16 %v2604
    %v2700 = vunpack.c.h.b16 %v2604
    %v2701 = vpack.c.b16 %v2641, %v2637
    %v2702 = vpack.c.b16 %v2642, %v2638
    %v2703 = vpack.c.b16 %v2643, %v2639
    %v2704 = vpack.c.b16 %v2644, %v2640
    %v2705 = vpack.c.b16 %v2649, %v2645
    %v2706 = vpack.c.b16 %v2650, %v2646
    %v2707 = vpack.c.b16 %v2651, %v2647
    %v2708 = vpack.c.b16 %v2652, %v2648
    %v2709 = vpack.c.b16 %v2657, %v2653
    %v2710 = vpack.c.b16 %v2658, %v2654
    %v2711 = vpack.c.b16 %v2659, %v2655
    %v2712 = vpack.c.b16 %v2660, %v2656
    %v2713 = vpack.c.b16 %v2665, %v2661
    %v2714 = vpack.c.b16 %v2666, %v2662
    %v2715 = vpack.c.b16 %v2667, %v2663
    %v2716 = vpack.c.b16 %v2668, %v2664
    %v2717 = vpack.c.b16 %v2673, %v2669
    %v2718 = vpack.c.b16 %v2674, %v2670
    %v2719 = vpack.c.b16 %v2675, %v2671
    %v2720 = vpack.c.b16 %v2676, %v2672
    %v2721 = vpack.c.b16 %v2681, %v2677
    %v2722 = vpack.c.b16 %v2682, %v2678
    %v2723 = vpack.c.b16 %v2683, %v2679
    %v2724 = vpack.c.b16 %v2684, %v2680
    %v2725 = vpack.c.b16 %v2689, %v2685
    %v2726 = vpack.c.b16 %v2690, %v2686
    %v2727 = vpack.c.b16 %v2691, %v2687
    %v2728 = vpack.c.b16 %v2692, %v2688
    %v2729 = vpack.c.b16 %v2697, %v2693
    %v2730 = vpack.c.b16 %v2698, %v2694
    %v2731 = vpack.c.b16 %v2699, %v2695
    %v2732 = vpack.c.b16 %v2700, %v2696
    %2765 = vmatprep.subr.bf16.mxu0 %v2702
    %2766 = vmatpush1.bf16.msra.mxu0 %v2701
    %2767 = vmatprep.subr.bf16.mxu0 %v2706
    %2768 = vmatpush1.bf16.msra.mxu0 %v2705
    %2769 = vmatprep.subr.bf16.mxu0 %v2710
    %2770 = vmatpush1.bf16.msra.mxu0 %v2709
    %2771 = vmatprep.subr.bf16.mxu0 %v2714
    %2772 = vmatpush1.bf16.msra.mxu0 %v2713
    %2773 = vmatprep.subr.bf16.mxu0 %v2718
    %2774 = vmatpush1.bf16.msra.mxu0 %v2717
    %2775 = vmatprep.subr.bf16.mxu0 %v2722
    %2776 = vmatpush1.bf16.msra.mxu0 %v2721
    %2777 = vmatprep.subr.bf16.mxu0 %v2726
    %2778 = vmatpush1.bf16.msra.mxu0 %v2725
    %2779 = vmatprep.subr.bf16.mxu0 %v2730
    %2780 = vmatpush1.bf16.msra.mxu0 %v2729
    %2781 = vmatprep.subr.bf16.mxu0 0
    %2782 = vmatpush1.bf16.msra.mxu0 0
    %2783 = vmatprep.subr.bf16.mxu0 0
    %2784 = vmatpush1.bf16.msra.mxu0 0
    %2785 = vmatprep.subr.bf16.mxu0 0
    %2786 = vmatpush1.bf16.msra.mxu0 0
    %2787 = vmatprep.subr.bf16.mxu0 0
    %2788 = vmatpush1.bf16.msra.mxu0 0
    %2789 = vmatprep.subr.bf16.mxu0 0
    %2790 = vmatpush1.bf16.msra.mxu0 0
    %2791 = vmatprep.subr.bf16.mxu0 0
    %2792 = vmatpush1.bf16.msra.mxu0 0
    %2793 = vmatprep.subr.bf16.mxu0 0
    %2794 = vmatpush1.bf16.msra.mxu0 0
    %2795 = vmatprep.subr.bf16.mxu0 0
    %2796 = vmatpush1.bf16.msra.mxu0 0
    %2797 = vmatprep.mubr.bf16.mxu0 0
    %2798 = vmatmul.mubr.bf16.gmra.mrb[0].mxu0 %v2368
    %v2799 = vpop.f32.mrb[0].mxu0
    %v2800 = vadd.f32 0.0, %v2799
    %v2801 = vpop.f32.mrb[0].mxu0
    %v2802 = vadd.f32 0.0, %v2801
    %v2803 = vpop.f32.mrb[0].mxu0
    %v2804 = vpop.f32.mrb[0].mxu0
    %2805 = vdwg.mxu0
    %2806 = vmatprep.subr.bf16.mxu0 %v2704
    %2807 = vmatpush1.bf16.msra.mxu0 %v2703
    %2808 = vmatprep.subr.bf16.mxu0 %v2708
    %2809 = vmatpush1.bf16.msra.mxu0 %v2707
    %2810 = vmatprep.subr.bf16.mxu0 %v2712
    %2811 = vmatpush1.bf16.msra.mxu0 %v2711
    %2812 = vmatprep.subr.bf16.mxu0 %v2716
    %2813 = vmatpush1.bf16.msra.mxu0 %v2715
    %2814 = vmatprep.subr.bf16.mxu0 %v2720
    %2815 = vmatpush1.bf16.msra.mxu0 %v2719
    %2816 = vmatprep.subr.bf16.mxu0 %v2724
    %2817 = vmatpush1.bf16.msra.mxu0 %v2723
    %2818 = vmatprep.subr.bf16.mxu0 %v2728
    %2819 = vmatpush1.bf16.msra.mxu0 %v2727
    %2820 = vmatprep.subr.bf16.mxu0 %v2732
    %2821 = vmatpush1.bf16.msra.mxu0 %v2731
    %2822 = vmatprep.subr.bf16.mxu0 0
    %2823 = vmatpush1.bf16.msra.mxu0 0
    %2824 = vmatprep.subr.bf16.mxu0 0
    %2825 = vmatpush1.bf16.msra.mxu0 0
    %2826 = vmatprep.subr.bf16.mxu0 0
    %2827 = vmatpush1.bf16.msra.mxu0 0
    %2828 = vmatprep.subr.bf16.mxu0 0
    %2829 = vmatpush1.bf16.msra.mxu0 0
    %2830 = vmatprep.subr.bf16.mxu0 0
    %2831 = vmatpush1.bf16.msra.mxu0 0
    %2832 = vmatprep.subr.bf16.mxu0 0
    %2833 = vmatpush1.bf16.msra.mxu0 0
    %2834 = vmatprep.subr.bf16.mxu0 0
    %2835 = vmatpush1.bf16.msra.mxu0 0
    %2836 = vmatprep.subr.bf16.mxu0 0
    %2837 = vmatpush1.bf16.msra.mxu0 0
    %2838 = vmatprep.mubr.bf16.mxu0 0
    %2839 = vmatmul.mubr.bf16.gmra.mrb[0].mxu0 %v2368
    %v2840 = vpop.f32.mrb[0].mxu0
    %v2841 = vadd.f32 0.0, %v2840
    %v2842 = vpop.f32.mrb[0].mxu0
    %v2843 = vadd.f32 0.0, %v2842
    %v2844 = vpop.f32.mrb[0].mxu0
    %v2845 = vpop.f32.mrb[0].mxu0
    %2846 = vdwg.mxu0
    %v2847 = vadd.f32 %v2569, %v2800
    %v2848 = vadd.f32 %v2570, %v2802
    %v2849 = vadd.f32 %v2571, %v2841
    %v2850 = vadd.f32 %v2572, %v2843
    %v2851 = vxor.u32 %v2847, 2147483648
    %v2852 = vmul.f32 %v2851, 1.442695
    %v2853 = vpow.pop %v2852
    %v2854 = vadd.f32 %v2853, 1.0
    %v2855 = vrcp.pop %v2854
    %v2856 = vmul.f32 1.0, %v2855
    %v2857 = vtanh.pop %v2849
    %v2858 = vxor.u32 %v2850, 2147483648
    %v2859 = vmul.f32 %v2858, 1.442695
    %v2860 = vpow.pop %v2859
    %v2861 = vadd.f32 %v2860, 1.0
    %v2862 = vrcp.pop %v2861
    %v2863 = vmul.f32 1.0, %v2862
    %v2864 = vxor.u32 %v2848, 2147483648
    %v2865 = vmul.f32 %v2864, 1.442695
    %v2866 = vpow.pop %v2865
    %v2867 = vadd.f32 %v2866, 1.0
    %v2868 = vrcp.pop %v2867
    %v2869 = vmul.f32 1.0, %v2868
    %v2870 = vmul.f32 %v2869, %v2365
    %v2871 = vmul.f32 %v2856, %v2857
    %v2872 = vadd.f32 %v2870, %v2871
    %v2873 = vtanh.pop %v2872
    %v2874 = vmul.f32 %v2863, %v2873
    %v2875 = vpack.c.bf16 %v2874, %v2874
    %v2876 = vpack.c.bf16 %v2566, %v2566
    %v2877 = vld [vmem:[#allocation5] sm:$0xf]
    %v2878 = vld [vmem:[#allocation5 + $0x4] sm:$0xf]
    %v2879 = vld [vmem:[#allocation5 + $0x8] sm:$0xf]
    %v2880 = vld [vmem:[#allocation5 + $0xc] sm:$0xf]
    %v2881 = vld [vmem:[#allocation5 + $0x10] sm:$0xf]
    %v2882 = vld [vmem:[#allocation5 + $0x14] sm:$0xf]
    %v2883 = vld [vmem:[#allocation5 + $0x18] sm:$0xf]
    %v2884 = vld [vmem:[#allocation5 + $0x1c] sm:$0xf]
    %v2885 = vld [vmem:[#allocation5 + $0x20] sm:$0xf]
    %v2886 = vld [vmem:[#allocation5 + $0x24] sm:$0xf]
    %v2887 = vld [vmem:[#allocation5 + $0x28] sm:$0xf]
    %v2888 = vld [vmem:[#allocation5 + $0x2c] sm:$0xf]
    %v2889 = vld [vmem:[#allocation5 + $0x30] sm:$0xf]
    %v2890 = vld [vmem:[#allocation5 + $0x34] sm:$0xf]
    %v2891 = vld [vmem:[#allocation5 + $0x38] sm:$0xf]
    %v2892 = vld [vmem:[#allocation5 + $0x3c] sm:$0xf]
    %v2893 = vld [vmem:[#allocation5 + $0x40] sm:$0xf]
    %v2894 = vld [vmem:[#allocation5 + $0x44] sm:$0xf]
    %v2895 = vld [vmem:[#allocation5 + $0x48] sm:$0xf]
    %v2896 = vld [vmem:[#allocation5 + $0x4c] sm:$0xf]
    %v2897 = vld [vmem:[#allocation5 + $0x50] sm:$0xf]
    %v2898 = vld [vmem:[#allocation5 + $0x54] sm:$0xf]
    %v2899 = vld [vmem:[#allocation5 + $0x58] sm:$0xf]
    %v2900 = vld [vmem:[#allocation5 + $0x5c] sm:$0xf]
    %v2901 = vld [vmem:[#allocation5 + $0x60] sm:$0xf]
    %v2902 = vld [vmem:[#allocation5 + $0x64] sm:$0xf]
    %v2903 = vld [vmem:[#allocation5 + $0x68] sm:$0xf]
    %v2904 = vld [vmem:[#allocation5 + $0x6c] sm:$0xf]
    %v2905 = vld [vmem:[#allocation5 + $0x70] sm:$0xf]
    %v2906 = vld [vmem:[#allocation5 + $0x74] sm:$0xf]
    %v2907 = vld [vmem:[#allocation5 + $0x78] sm:$0xf]
    %v2908 = vld [vmem:[#allocation5 + $0x7c] sm:$0xf]
    %v2941 = vunpack.c.l.b16 %v2877
    %v2942 = vunpack.c.l.b16 %v2878
    %v2943 = vunpack.c.l.b16 %v2879
    %v2944 = vunpack.c.l.b16 %v2880
    %v2945 = vunpack.c.l.b16 %v2881
    %v2946 = vunpack.c.l.b16 %v2882
    %v2947 = vunpack.c.l.b16 %v2883
    %v2948 = vunpack.c.l.b16 %v2884
    %v2949 = vunpack.c.l.b16 %v2885
    %v2950 = vunpack.c.l.b16 %v2886
    %v2951 = vunpack.c.l.b16 %v2887
    %v2952 = vunpack.c.l.b16 %v2888
    %v2953 = vunpack.c.l.b16 %v2889
    %v2954 = vunpack.c.l.b16 %v2890
    %v2955 = vunpack.c.l.b16 %v2891
    %v2956 = vunpack.c.l.b16 %v2892
    %v2957 = vunpack.c.l.b16 %v2893
    %v2958 = vunpack.c.l.b16 %v2894
    %v2959 = vunpack.c.l.b16 %v2895
    %v2960 = vunpack.c.l.b16 %v2896
    %v2961 = vunpack.c.l.b16 %v2897
    %v2962 = vunpack.c.l.b16 %v2898
    %v2963 = vunpack.c.l.b16 %v2899
    %v2964 = vunpack.c.l.b16 %v2900
    %v2965 = vunpack.c.l.b16 %v2901
    %v2966 = vunpack.c.l.b16 %v2902
    %v2967 = vunpack.c.l.b16 %v2903
    %v2968 = vunpack.c.l.b16 %v2904
    %v2969 = vunpack.c.l.b16 %v2905
    %v2970 = vunpack.c.l.b16 %v2906
    %v2971 = vunpack.c.l.b16 %v2907
    %v2972 = vunpack.c.l.b16 %v2908
    %v2973 = vpack.c.b16 %v2942, %v2941
    %v2974 = vpack.c.b16 %v2944, %v2943
    %v2975 = vpack.c.b16 %v2946, %v2945
    %v2976 = vpack.c.b16 %v2948, %v2947
    %v2977 = vpack.c.b16 %v2950, %v2949
    %v2978 = vpack.c.b16 %v2952, %v2951
    %v2979 = vpack.c.b16 %v2954, %v2953
    %v2980 = vpack.c.b16 %v2956, %v2955
    %v2981 = vpack.c.b16 %v2958, %v2957
    %v2982 = vpack.c.b16 %v2960, %v2959
    %v2983 = vpack.c.b16 %v2962, %v2961
    %v2984 = vpack.c.b16 %v2964, %v2963
    %v2985 = vpack.c.b16 %v2966, %v2965
    %v2986 = vpack.c.b16 %v2968, %v2967
    %v2987 = vpack.c.b16 %v2970, %v2969
    %v2988 = vpack.c.b16 %v2972, %v2971
    %3005 = vmatprep.subr.bf16.mxu0 0
    %3006 = vmatpush1.bf16.msra.mxu0 %v2973
    %3007 = vmatprep.subr.bf16.mxu0 0
    %3008 = vmatpush1.bf16.msra.mxu0 %v2974
    %3009 = vmatprep.subr.bf16.mxu0 0
    %3010 = vmatpush1.bf16.msra.mxu0 %v2975
    %3011 = vmatprep.subr.bf16.mxu0 0
    %3012 = vmatpush1.bf16.msra.mxu0 %v2976
    %3013 = vmatprep.subr.bf16.mxu0 0
    %3014 = vmatpush1.bf16.msra.mxu0 %v2977
    %3015 = vmatprep.subr.bf16.mxu0 0
    %3016 = vmatpush1.bf16.msra.mxu0 %v2978
    %3017 = vmatprep.subr.bf16.mxu0 0
    %3018 = vmatpush1.bf16.msra.mxu0 %v2979
    %3019 = vmatprep.subr.bf16.mxu0 0
    %3020 = vmatpush1.bf16.msra.mxu0 %v2980
    %3021 = vmatprep.subr.bf16.mxu0 0
    %3022 = vmatpush1.bf16.msra.mxu0 %v2981
    %3023 = vmatprep.subr.bf16.mxu0 0
    %3024 = vmatpush1.bf16.msra.mxu0 %v2982
    %3025 = vmatprep.subr.bf16.mxu0 0
    %3026 = vmatpush1.bf16.msra.mxu0 %v2983
    %3027 = vmatprep.subr.bf16.mxu0 0
    %3028 = vmatpush1.bf16.msra.mxu0 %v2984
    %3029 = vmatprep.subr.bf16.mxu0 0
    %3030 = vmatpush1.bf16.msra.mxu0 %v2985
    %3031 = vmatprep.subr.bf16.mxu0 0
    %3032 = vmatpush1.bf16.msra.mxu0 %v2986
    %3033 = vmatprep.subr.bf16.mxu0 0
    %3034 = vmatpush1.bf16.msra.mxu0 %v2987
    %3035 = vmatprep.subr.bf16.mxu0 0
    %3036 = vmatpush1.bf16.msra.mxu0 %v2988
    %3037 = vmatprep.mubr.bf16.mxu0 %v2876
    %3038 = vmatmul.mubr.bf16.gmra.mrb[0].mxu0 %v2875
    %v3039 = vpop.f32.mrb[0].mxu0
    %v3040 = vadd.f32 %v347, %v3039
    %v3041 = vpop.f32.mrb[0].mxu0
    %v3042 = vpop.f32.mrb[0].mxu0
    %v3043 = vpop.f32.mrb[0].mxu0
    %3044 = vdwg.mxu0
    %v3045 = vxor.u32 %v3040, 2147483648
    %v3046 = vmul.f32 %v3045, 1.442695
    %v3047 = vpow.pop %v3046
    %v3048 = vadd.f32 %v3047, 1.0
    %v3049 = vrcp.pop %v3048
    %v3050 = vmul.f32 1.0, %v3049
    %v3051 = vtanh.pop %v3040
    %3052 = vrot.lane.b32.xlu0 %v3051, 8
    %v3053 = vpop.permute.xlu0 %3052
    %3054 = vrot.lane.b32.xlu0 %v3051, 120
    %v3055 = vpop.permute.xlu0 %3054
    %v3056 = vadd.f32 %v3053, %v3055
    %3057 = vrot.lane.b32.xlu0 %v3050, 12
    %v3058 = vpop.permute.xlu0 %3057
    %3059 = vrot.lane.b32.xlu0 %v3050, 116
    %v3060 = vpop.permute.xlu0 %3059
    %v3061 = vadd.f32 %v3058, %v3060
    %v3062 = vsub.f32 %v3061, 0.5
    %3063 = vrot.lane.b32.xlu0 %v3050, 4
    %v3064 = vpop.permute.xlu0 %3063
    %3065 = vrot.lane.b32.xlu0 %v3050, 124
    %v3066 = vpop.permute.xlu0 %3065
    %v3067 = vadd.f32 %v3064, %v3066
    %v3068 = vsub.f32 %v3067, 0.5
    %v3069 = vmul.f32 %v3068, %v2564
    %v3070 = vmul.f32 %v3050, %v3056
    %v3071 = vadd.f32 %v3069, %v3070
    %v3072 = vtanh.pop %v3071
    %v3073 = vmul.f32 %v3062, %v3072
    %s3074 = scalar_lea.vmem %s6, 24
    %3075 = vst [vmem:[%s3074] sm:$0xff] %v3073
    // Predicated region
    $region34: #{mann_forward.1} parent=1 // pred_check
      _
    $region35: #{mann_forward.1} parent=1 // pred_check_branch
      %3077 = sbr.rel (0) target = $region37
    $region36: #{mann_forward.1} parent=1 // pred_region
      _
    $region37: #{mann_forward.1} parent=1 // pred_fallthru
      _
    // Predicated region
    $region38: #{mann_forward.1} parent=1 // pred_check
      _
    $region39: #{mann_forward.1} parent=1 // pred_check_branch
      %3079 = sbr.rel (0) target = $region41
    $region40: #{mann_forward.1} parent=1 // pred_region
      _
    $region41: #{mann_forward.1} parent=1 // pred_fallthru
      _
    %3080 = vsyncpa [#allocation4], 1
    %3081 = vsyncpa [#allocation6], 1

</llo_original>
